<compile_context>
chip_gen: v7x
topology: tpu7x:2x2x1
jax: 0.10.0
libtpu: 0.0.40
codegen_flags: <defaults>
</compile_context>

<pallas_src>
import math
from functools import partial

import jax
import jax.numpy as jnp
from jax.experimental import pallas as pl
from jax.experimental.pallas import tpu as pltpu


# ----------------------------- in-kernel helpers -----------------------------

def _bf16(x):
    return x.astype(jnp.bfloat16)


def _layer_norm(x, g, b, eps=1e-5):
    mu = jnp.mean(x, axis=-1, keepdims=True)
    xc = x - mu
    var = jnp.mean(xc * xc, axis=-1, keepdims=True)
    return xc * jax.lax.rsqrt(var + eps) * g + b


def _softmax(s):
    s = s - jnp.max(s, axis=-1, keepdims=True)
    e = jnp.exp(s)
    return e * pl.reciprocal(jnp.sum(e, axis=-1, keepdims=True), approx=True)


def _attn_core(q, k, v, out_w, out_b):
    # Single head (nhead=1): head_dim == d_model, d_model stays on the lane axis.
    # 1/sqrt(d) is pre-folded into the Q projection weights at init.
    s = jnp.einsum("qd,kd->qk", _bf16(q), _bf16(k), preferred_element_type=jnp.float32)
    p = _softmax(s)
    a = jnp.dot(_bf16(p), _bf16(v), preferred_element_type=jnp.float32)
    return jnp.dot(_bf16(a), out_w, preferred_element_type=jnp.float32) + out_b


def _self_attn(x, in_w, in_b, out_w, out_b):
    d = x.shape[-1]
    # fused QKV projection: one (L, 3L) matmul
    qkv = jnp.dot(_bf16(x), in_w, preferred_element_type=jnp.float32) + in_b
    return _attn_core(qkv[:, :d], qkv[:, d:2 * d], qkv[:, 2 * d:], out_w, out_b)


def _cross_attn(x, mem, q_w, q_b, kv_w, kv_b, out_w, out_b):
    d = x.shape[-1]
    q = jnp.dot(_bf16(x), q_w, preferred_element_type=jnp.float32) + q_b
    # fused K/V projection: one (L, 2L) matmul
    kv = jnp.dot(_bf16(mem), kv_w, preferred_element_type=jnp.float32) + kv_b
    return _attn_core(q, kv[:, :d], kv[:, d:], out_w, out_b)


def _ffn(x, w1, b1, w2, b2):
    h = jnp.maximum(jnp.dot(_bf16(x), w1, preferred_element_type=jnp.float32) + b1, 0.0)
    return jnp.dot(_bf16(h), w2, preferred_element_type=jnp.float32) + b2


# ------------------------------- fused Pallas kernel -------------------------------

def _fused_kernel(treedef, x_ref, pe_ref, stem_w_ref, stem_b_ref,
                  head_w_ref, head_b_ref, *rest):
    """Whole TestModel_3s forward; grid axis = stage index (serial, 'arbitrary')."""
    *stage_leaves, o_ref, y_ref = rest          # in-refs(stages) ..., out_ref, VMEM scratch
    p = jax.tree_util.tree_unflatten(treedef, stage_leaves)
    s = pl.program_id(0)

    # ---- stem (step 0 only): slice x[:, :34] in-kernel, w1 (+folded BN) -> ReLU ----
    @pl.when(s == 0)
    def _():
        xc = _bf16(x_ref[...][:, :stem_w_ref.shape[0]])
        y0 = jnp.dot(xc, stem_w_ref[...], preferred_element_type=jnp.float32) + stem_b_ref[...]
        y_ref[...] = jnp.maximum(y0, 0.0)

    x = y_ref[...]
    pe = pe_ref[...]

    # block linear (bn1 pre-folded into weights) -> ReLU   (dropout = identity)
    yb = jnp.dot(_bf16(x), p["blk_w1"][...], preferred_element_type=jnp.float32) + p["blk_b1"][...]
    yb = jnp.maximum(yb, 0.0)

    # TransformerModel(src=x, tgt=yb): add positional encoding (batch dim of 1 implicit).
    src = x + pe
    tgt = yb + pe

    # --- encoder layer (post-norm, ReLU FFN) ---
    e = p["enc"]
    sa = _self_attn(src, e["in_w"][...], e["in_b"][...], e["out_w"][...], e["out_b"][...])
    h = _layer_norm(src + sa, e["n1_g"][...], e["n1_b"][...])
    ff = _ffn(h, e["ff1_w"][...], e["ff1_b"][...], e["ff2_w"][...], e["ff2_b"][...])
    h = _layer_norm(h + ff, e["n2_g"][...], e["n2_b"][...])
    mem = _layer_norm(h, p["enc_norm_g"][...], p["enc_norm_b"][...])     # encoder final norm

    # --- decoder layer (self-attn, cross-attn, FFN; post-norm) ---
    dec = p["dec"]
    sa = _self_attn(tgt, dec["sa_in_w"][...], dec["sa_in_b"][...],
                    dec["sa_out_w"][...], dec["sa_out_b"][...])
    t = _layer_norm(tgt + sa, dec["n1_g"][...], dec["n1_b"][...])
    ca = _cross_attn(t, mem, dec["ca_q_w"][...], dec["ca_q_b"][...],
                     dec["ca_kv_w"][...], dec["ca_kv_b"][...],
                     dec["ca_out_w"][...], dec["ca_out_b"][...])
    t = _layer_norm(t + ca, dec["n2_g"][...], dec["n2_b"][...])
    ff = _ffn(t, dec["ff1_w"][...], dec["ff1_b"][...], dec["ff2_w"][...], dec["ff2_b"][...])
    t = _layer_norm(t + ff, dec["n3_g"][...], dec["n3_b"][...])
    # decoder final norm with eval-mode bn2 pre-folded into its gamma/beta
    tr = _layer_norm(t, p["dec_norm_g"][...], p["dec_norm_b"][...])

    # ReLU -> residual add   (dropout = identity)
    y_new = x + jnp.maximum(tr, 0.0)
    y_ref[...] = y_new

    # ---- head (last step only): w2, lane-padded output ----
    @pl.when(s == pl.num_programs(0) - 1)
    def _():
        o_ref[...] = jnp.dot(_bf16(y_new), head_w_ref[...],
                             preferred_element_type=jnp.float32) + head_b_ref[...]


# ------------------------------ pallas_call wrapper ------------------------------

def _forward_impl(params, x, output_size):
    leaves, treedef = jax.tree_util.tree_flatten(params["stages"])
    num_stage = leaves[0].shape[0]

    fixed = (x, params["pe"], params["stem_w"], params["stem_b"],
             params["head_w"], params["head_b"])
    B = x.shape[0]
    L = params["pe"].shape[1]
    out_pad = params["head_w"].shape[1]

    # Small fixed arrays: full-extent blocks, same block every grid step (stay resident).
    fixed_specs = [pl.BlockSpec(a.shape, lambda s, nd=a.ndim: (0,) * nd) for a in fixed]
    # Per-stage weights: stacked on the leading axis; prefetched one stage ahead.
    stage_specs = [pl.BlockSpec((None,) + a.shape[1:],
                                lambda s, nd=a.ndim - 1: (s,) + (0,) * nd)
                   for a in leaves]

    out = pl.pallas_call(
        partial(_fused_kernel, treedef),
        grid=(num_stage,),
        in_specs=fixed_specs + stage_specs,
        out_specs=pl.BlockSpec((B, out_pad), lambda s: (0, 0)),
        out_shape=jax.ShapeDtypeStruct((B, out_pad), jnp.float32),
        scratch_shapes=[pltpu.VMEM((B, L), jnp.float32)],     # y stays VMEM-resident
        compiler_params=pltpu.CompilerParams(dimension_semantics=("arbitrary",)),
    )(*fixed, *leaves)
    return out[:, :output_size]


forward = jax.jit(_forward_impl, static_argnames=("output_size",))


# ------------------------------- parameter setup -------------------------------
# Weights pre-transposed to (in, out); BN running stats pre-folded; QKV / KV fused;
# 1/sqrt(d) folded into Q projections; matmul weights cast to bf16; LN params / biases f32.

def _rand(key, shape, scale=0.05):
    return jax.random.normal(key, shape, jnp.float32) * scale


def _ones_row(d):
    return jnp.ones((1, d), jnp.float32)


def _zeros_row(d):
    return jnp.zeros((1, d), jnp.float32)


def _fold_bn(gamma, beta, running_mean, running_var, eps=1e-5):
    scale = gamma / jnp.sqrt(running_var + eps)
    shift = beta - running_mean * scale
    return scale.reshape(1, -1), shift.reshape(1, -1)


def _bn_default(d):
    # fresh BatchNorm1d (eval): gamma=1, beta=0, running_mean=0, running_var=1
    return _fold_bn(jnp.ones((d,), jnp.float32), jnp.zeros((d,), jnp.float32),
                    jnp.zeros((d,), jnp.float32), jnp.ones((d,), jnp.float32))


def _fold_linear_bn(w, b, scale, shift):
    # (x @ w + b) * scale + shift  ==  x @ (w*scale) + (b*scale + shift)
    return w * scale, b * scale + shift


def _init_enc_layer(key, d, h):
    k = jax.random.split(key, 4)
    inv = 1.0 / math.sqrt(d)
    in_w = _rand(k[0], (d, 3 * d)).at[:, :d].multiply(inv)       # fold 1/sqrt(d) into Q
    in_b = _zeros_row(3 * d).at[:, :d].multiply(inv)
    return dict(
        in_w=in_w.astype(jnp.bfloat16), in_b=in_b,
        out_w=_rand(k[1], (d, d)).astype(jnp.bfloat16), out_b=_zeros_row(d),
        ff1_w=_rand(k[2], (d, h)).astype(jnp.bfloat16), ff1_b=_zeros_row(h),
        ff2_w=_rand(k[3], (h, d)).astype(jnp.bfloat16), ff2_b=_zeros_row(d),
        n1_g=_ones_row(d), n1_b=_zeros_row(d),
        n2_g=_ones_row(d), n2_b=_zeros_row(d),
    )


def _init_dec_layer(key, d, h):
    k = jax.random.split(key, 7)
    inv = 1.0 / math.sqrt(d)
    sa_in_w = _rand(k[0], (d, 3 * d)).at[:, :d].multiply(inv)    # fold 1/sqrt(d) into Q
    sa_in_b = _zeros_row(3 * d).at[:, :d].multiply(inv)
    ca_q_w = _rand(k[2], (d, d)) * inv
    ca_q_b = _zeros_row(d) * inv
    return dict(
        sa_in_w=sa_in_w.astype(jnp.bfloat16), sa_in_b=sa_in_b,
        sa_out_w=_rand(k[1], (d, d)).astype(jnp.bfloat16), sa_out_b=_zeros_row(d),
        ca_q_w=ca_q_w.astype(jnp.bfloat16), ca_q_b=ca_q_b,
        ca_kv_w=_rand(k[3], (d, 2 * d)).astype(jnp.bfloat16), ca_kv_b=_zeros_row(2 * d),
        ca_out_w=_rand(k[4], (d, d)).astype(jnp.bfloat16), ca_out_b=_zeros_row(d),
        ff1_w=_rand(k[5], (d, h)).astype(jnp.bfloat16), ff1_b=_zeros_row(h),
        ff2_w=_rand(k[6], (h, d)).astype(jnp.bfloat16), ff2_b=_zeros_row(d),
        n1_g=_ones_row(d), n1_b=_zeros_row(d),
        n2_g=_ones_row(d), n2_b=_zeros_row(d),
        n3_g=_ones_row(d), n3_b=_zeros_row(d),
    )


def _init_stage(key, d):
    kb, ke, kd = jax.random.split(key, 3)
    bn1_s, bn1_t = _bn_default(d)
    bn2_s, bn2_t = _bn_default(d)
    blk_w1, blk_b1 = _fold_linear_bn(_rand(kb, (d, d)), _zeros_row(d), bn1_s, bn1_t)
    # fold eval-mode bn2 into the decoder final LayerNorm affine
    dec_norm_g = _ones_row(d) * bn2_s
    dec_norm_b = _zeros_row(d) * bn2_s + bn2_t
    return dict(
        blk_w1=blk_w1.astype(jnp.bfloat16), blk_b1=blk_b1,
        enc=_init_enc_layer(ke, d, d),                 # dim_feedforward = linear_size = d
        enc_norm_g=_ones_row(d), enc_norm_b=_zeros_row(d),
        dec=_init_dec_layer(kd, d, d),
        dec_norm_g=dec_norm_g, dec_norm_b=dec_norm_b,
    )


def _pe_table(seq_len, d):
    # PositionalEncoding buffer: pe[:,0::2]=sin(pos*div), pe[:,1::2]=cos(pos*div)
    pos = jnp.arange(seq_len, dtype=jnp.float32)[:, None]
    div = jnp.exp(jnp.arange(0, d, 2, dtype=jnp.float32) * (-math.log(10000.0) / d))
    ang = pos * div[None, :]
    return jnp.stack([jnp.sin(ang), jnp.cos(ang)], axis=-1).reshape(seq_len, d)


def init_params(key, input_size, linear_size, output_size, num_stage, seq_len):
    keys = jax.random.split(key, num_stage + 2)

    stem_s, stem_t = _bn_default(linear_size)
    stem_w, stem_b = _fold_linear_bn(_rand(keys[0], (input_size, linear_size)),
                                     _zeros_row(linear_size), stem_s, stem_t)

    out_pad = max(128, ((output_size + 127) // 128) * 128)       # lane-dense head output
    head_w = jnp.zeros((linear_size, out_pad), jnp.float32)
    head_w = head_w.at[:, :output_size].set(_rand(keys[-1], (linear_size, output_size)))

    stages = [_init_stage(keys[1 + i], linear_size) for i in range(num_stage)]
    stages_stacked = jax.tree_util.tree_map(lambda *a: jnp.stack(a, axis=0), *stages)

    return dict(
        stem_w=stem_w.astype(jnp.bfloat16), stem_b=stem_b,
        head_w=head_w.astype(jnp.bfloat16), head_b=_zeros_row(out_pad),
        stages=stages_stacked,
        pe=_pe_table(seq_len, linear_size),
    )


# ------------------------------------ main ------------------------------------

if __name__ == "__main__":
    B = 8              # pose batch -> transformer sequence length (transformer batch = 1)
    IN_FEATURES = 40   # raw input features; the model uses x[:, :34]
    INPUT_SIZE = 34
    LINEAR_SIZE = 128  # linear_size = d_model = dim_feedforward (lane-aligned)
    OUTPUT_SIZE = 2
    NUM_STAGE = 3

    key = jax.random.PRNGKey(0)
    kx, kp = jax.random.split(key)
    x = jax.random.normal(kx, (B, IN_FEATURES), jnp.float32)
    params = init_params(kp, INPUT_SIZE, LINEAR_SIZE, OUTPUT_SIZE, NUM_STAGE, seq_len=B)

    out = jax.block_until_ready(forward(params, x, output_size=OUTPUT_SIZE))
    assert out.shape == (B, OUTPUT_SIZE), out.shape
    assert bool(jnp.all(jnp.isfinite(out)))
    print("KERNEL_OK")
</pallas_src>

<mosaic_0001>
module attributes {stable_mosaic.version = 11 : i64} {
  func.func @_fused_kernel(%arg0: i32, %arg1: memref<8x40xf32, #tpu.memory_space<vmem>>, %arg2: memref<8x128xf32, #tpu.memory_space<vmem>>, %arg3: memref<34x128xbf16, #tpu.memory_space<vmem>>, %arg4: memref<1x128xf32, #tpu.memory_space<vmem>>, %arg5: memref<128x128xbf16, #tpu.memory_space<vmem>>, %arg6: memref<1x128xf32, #tpu.memory_space<vmem>>, %arg7: memref<1x1x128xf32, #tpu.memory_space<vmem>>, %arg8: memref<1x128x128xbf16, #tpu.memory_space<vmem>>, %arg9: memref<1x1x256xf32, #tpu.memory_space<vmem>>, %arg10: memref<1x128x256xbf16, #tpu.memory_space<vmem>>, %arg11: memref<1x1x128xf32, #tpu.memory_space<vmem>>, %arg12: memref<1x128x128xbf16, #tpu.memory_space<vmem>>, %arg13: memref<1x1x128xf32, #tpu.memory_space<vmem>>, %arg14: memref<1x128x128xbf16, #tpu.memory_space<vmem>>, %arg15: memref<1x1x128xf32, #tpu.memory_space<vmem>>, %arg16: memref<1x128x128xbf16, #tpu.memory_space<vmem>>, %arg17: memref<1x1x128xf32, #tpu.memory_space<vmem>>, %arg18: memref<1x128x128xbf16, #tpu.memory_space<vmem>>, %arg19: memref<1x1x128xf32, #tpu.memory_space<vmem>>, %arg20: memref<1x1x128xf32, #tpu.memory_space<vmem>>, %arg21: memref<1x1x128xf32, #tpu.memory_space<vmem>>, %arg22: memref<1x1x128xf32, #tpu.memory_space<vmem>>, %arg23: memref<1x1x128xf32, #tpu.memory_space<vmem>>, %arg24: memref<1x1x128xf32, #tpu.memory_space<vmem>>, %arg25: memref<1x1x384xf32, #tpu.memory_space<vmem>>, %arg26: memref<1x128x384xbf16, #tpu.memory_space<vmem>>, %arg27: memref<1x1x128xf32, #tpu.memory_space<vmem>>, %arg28: memref<1x128x128xbf16, #tpu.memory_space<vmem>>, %arg29: memref<1x1x128xf32, #tpu.memory_space<vmem>>, %arg30: memref<1x1x128xf32, #tpu.memory_space<vmem>>, %arg31: memref<1x1x128xf32, #tpu.memory_space<vmem>>, %arg32: memref<1x128x128xbf16, #tpu.memory_space<vmem>>, %arg33: memref<1x1x128xf32, #tpu.memory_space<vmem>>, %arg34: memref<1x128x128xbf16, #tpu.memory_space<vmem>>, %arg35: memref<1x1x384xf32, #tpu.memory_space<vmem>>, %arg36: memref<1x128x384xbf16, #tpu.memory_space<vmem>>, %arg37: memref<1x1x128xf32, #tpu.memory_space<vmem>>, %arg38: memref<1x1x128xf32, #tpu.memory_space<vmem>>, %arg39: memref<1x1x128xf32, #tpu.memory_space<vmem>>, %arg40: memref<1x1x128xf32, #tpu.memory_space<vmem>>, %arg41: memref<1x1x128xf32, #tpu.memory_space<vmem>>, %arg42: memref<1x128x128xbf16, #tpu.memory_space<vmem>>, %arg43: memref<1x1x128xf32, #tpu.memory_space<vmem>>, %arg44: memref<1x1x128xf32, #tpu.memory_space<vmem>>, %arg45: memref<8x128xf32, #tpu.memory_space<vmem>>, %arg46: memref<8x128xf32, #tpu.memory_space<vmem>>) attributes {dimension_semantics = [#tpu.dimension_semantics<arbitrary>], iteration_bounds = array<i64: 3>, scalar_prefetch = 0 : i64, scratch_operands = 1 : i64, tpu.core_type = #tpu.core_type<tc>, window_params = [{pipeline_mode = #tpu.pipeline_mode<synchronous>, transform_indices = @transform_0, window_bounds = array<i64: 8, 40>}, {pipeline_mode = #tpu.pipeline_mode<synchronous>, transform_indices = @transform_1, window_bounds = array<i64: 8, 128>}, {pipeline_mode = #tpu.pipeline_mode<synchronous>, transform_indices = @transform_2, window_bounds = array<i64: 34, 128>}, {pipeline_mode = #tpu.pipeline_mode<synchronous>, transform_indices = @transform_3, window_bounds = array<i64: 1, 128>}, {pipeline_mode = #tpu.pipeline_mode<synchronous>, transform_indices = @transform_4, window_bounds = array<i64: 128, 128>}, {pipeline_mode = #tpu.pipeline_mode<synchronous>, transform_indices = @transform_5, window_bounds = array<i64: 1, 128>}, {transform_indices = @transform_6, window_bounds = array<i64: 1, 1, 128>}, {transform_indices = @transform_7, window_bounds = array<i64: 1, 128, 128>}, {transform_indices = @transform_8, window_bounds = array<i64: 1, 1, 256>}, {transform_indices = @transform_9, window_bounds = array<i64: 1, 128, 256>}, {transform_indices = @transform_10, window_bounds = array<i64: 1, 1, 128>}, {transform_indices = @transform_11, window_bounds = array<i64: 1, 128, 128>}, {transform_indices = @transform_12, window_bounds = array<i64: 1, 1, 128>}, {transform_indices = @transform_13, window_bounds = array<i64: 1, 128, 128>}, {transform_indices = @transform_14, window_bounds = array<i64: 1, 1, 128>}, {transform_indices = @transform_15, window_bounds = array<i64: 1, 128, 128>}, {transform_indices = @transform_16, window_bounds = array<i64: 1, 1, 128>}, {transform_indices = @transform_17, window_bounds = array<i64: 1, 128, 128>}, {transform_indices = @transform_18, window_bounds = array<i64: 1, 1, 128>}, {transform_indices = @transform_19, window_bounds = array<i64: 1, 1, 128>}, {transform_indices = @transform_20, window_bounds = array<i64: 1, 1, 128>}, {transform_indices = @transform_21, window_bounds = array<i64: 1, 1, 128>}, {transform_indices = @transform_22, window_bounds = array<i64: 1, 1, 128>}, {transform_indices = @transform_23, window_bounds = array<i64: 1, 1, 128>}, {transform_indices = @transform_24, window_bounds = array<i64: 1, 1, 384>}, {transform_indices = @transform_25, window_bounds = array<i64: 1, 128, 384>}, {transform_indices = @transform_26, window_bounds = array<i64: 1, 1, 128>}, {transform_indices = @transform_27, window_bounds = array<i64: 1, 128, 128>}, {transform_indices = @transform_28, window_bounds = array<i64: 1, 1, 128>}, {transform_indices = @transform_29, window_bounds = array<i64: 1, 1, 128>}, {transform_indices = @transform_30, window_bounds = array<i64: 1, 1, 128>}, {transform_indices = @transform_31, window_bounds = array<i64: 1, 128, 128>}, {transform_indices = @transform_32, window_bounds = array<i64: 1, 1, 128>}, {transform_indices = @transform_33, window_bounds = array<i64: 1, 128, 128>}, {transform_indices = @transform_34, window_bounds = array<i64: 1, 1, 384>}, {transform_indices = @transform_35, window_bounds = array<i64: 1, 128, 384>}, {transform_indices = @transform_36, window_bounds = array<i64: 1, 1, 128>}, {transform_indices = @transform_37, window_bounds = array<i64: 1, 1, 128>}, {transform_indices = @transform_38, window_bounds = array<i64: 1, 1, 128>}, {transform_indices = @transform_39, window_bounds = array<i64: 1, 1, 128>}, {transform_indices = @transform_40, window_bounds = array<i64: 1, 1, 128>}, {transform_indices = @transform_41, window_bounds = array<i64: 1, 128, 128>}, {transform_indices = @transform_42, window_bounds = array<i64: 1, 1, 128>}, {transform_indices = @transform_43, window_bounds = array<i64: 1, 1, 128>}, {pipeline_mode = #tpu.pipeline_mode<synchronous>, transform_indices = @transform_44, window_bounds = array<i64: 8, 128>}]} {
    %c0_i32 = arith.constant 0 : i32
    %0 = arith.cmpi eq, %arg0, %c0_i32 : i32
    %1 = arith.extui %0 : i1 to i32
    %c0_i32_0 = arith.constant 0 : i32
    %2 = arith.cmpi ne, %1, %c0_i32_0 : i32
    scf.if %2 {
      %c0_183 = arith.constant 0 : index
      %c0_184 = arith.constant 0 : index
      %345 = vector.load %arg1[%c0_183, %c0_184] : memref<8x40xf32, #tpu.memory_space<vmem>>, vector<8x40xf32>
      %346 = vector.extract_strided_slice %345 {offsets = [0, 0], sizes = [8, 34], strides = [1, 1]} : vector<8x40xf32> to vector<8x34xf32>
      %347 = arith.truncf %346 : vector<8x34xf32> to vector<8x34xbf16>
      %c0_185 = arith.constant 0 : index
      %c0_186 = arith.constant 0 : index
      %348 = vector.load %arg3[%c0_185, %c0_186] : memref<34x128xbf16, #tpu.memory_space<vmem>>, vector<34x128xbf16>
      %cst_187 = arith.constant dense<0.000000e+00> : vector<8x128xf32>
      %349 = tpu.matmul %347, %348, %cst_187 {dimension_numbers = #tpu.dot_dimension_numbers<[1], [0], [0], [1], [0, 0, 1, 1], [], []>} : vector<8x34xbf16>, vector<34x128xbf16>, vector<8x128xf32> -> vector<8x128xf32>
      %c0_188 = arith.constant 0 : index
      %c0_189 = arith.constant 0 : index
      %350 = vector.load %arg4[%c0_188, %c0_189] : memref<1x128xf32, #tpu.memory_space<vmem>>, vector<1x128xf32>
      %351 = vector.broadcast %350 : vector<1x128xf32> to vector<8x128xf32>
      %352 = arith.addf %349, %351 : vector<8x128xf32>
      %cst_190 = arith.constant 0.000000e+00 : f32
      %353 = vector.broadcast %cst_190 : f32 to vector<8x128xf32>
      %354 = arith.maximumf %352, %353 : vector<8x128xf32>
      %c0_191 = arith.constant 0 : index
      %c0_192 = arith.constant 0 : index
      %355 = vector.load %arg46[%c0_191, %c0_192] : memref<8x128xf32, #tpu.memory_space<vmem>>, vector<8x128xf32>
      tpu.vector_store %arg46[%c0_191, %c0_192], %354 {strides = array<i32>} : memref<8x128xf32, #tpu.memory_space<vmem>>, vector<8x128xf32>,
    } else {
    }
    %c0 = arith.constant 0 : index
    %c0_1 = arith.constant 0 : index
    %3 = vector.load %arg46[%c0, %c0_1] : memref<8x128xf32, #tpu.memory_space<vmem>>, vector<8x128xf32>
    %c0_2 = arith.constant 0 : index
    %c0_3 = arith.constant 0 : index
    %4 = vector.load %arg2[%c0_2, %c0_3] : memref<8x128xf32, #tpu.memory_space<vmem>>, vector<8x128xf32>
    %5 = arith.truncf %3 : vector<8x128xf32> to vector<8x128xbf16>
    %c0_4 = arith.constant 0 : index
    %c0_5 = arith.constant 0 : index
    %c0_6 = arith.constant 0 : index
    %6 = vector.load %arg8[%c0_4, %c0_5, %c0_6] : memref<1x128x128xbf16, #tpu.memory_space<vmem>>, vector<1x128x128xbf16>
    %7 = vector.shape_cast %6 : vector<1x128x128xbf16> to vector<128x128xbf16>
    %cst = arith.constant dense<0.000000e+00> : vector<8x128xf32>
    %8 = tpu.matmul %5, %7, %cst {dimension_numbers = #tpu.dot_dimension_numbers<[1], [0], [0], [1], [0, 0, 1, 1], [], []>} : vector<8x128xbf16>, vector<128x128xbf16>, vector<8x128xf32> -> vector<8x128xf32>
    %c0_7 = arith.constant 0 : index
    %c0_8 = arith.constant 0 : index
    %c0_9 = arith.constant 0 : index
    %9 = vector.load %arg7[%c0_7, %c0_8, %c0_9] : memref<1x1x128xf32, #tpu.memory_space<vmem>>, vector<1x1x128xf32>
    %10 = vector.shape_cast %9 : vector<1x1x128xf32> to vector<1x128xf32>
    %11 = vector.broadcast %10 : vector<1x128xf32> to vector<8x128xf32>
    %12 = arith.addf %8, %11 : vector<8x128xf32>
    %cst_10 = arith.constant 0.000000e+00 : f32
    %13 = vector.broadcast %cst_10 : f32 to vector<8x128xf32>
    %14 = arith.maximumf %12, %13 : vector<8x128xf32>
    %15 = arith.addf %3, %4 : vector<8x128xf32>
    %16 = arith.addf %14, %4 : vector<8x128xf32>
    %c0_11 = arith.constant 0 : index
    %c0_12 = arith.constant 0 : index
    %c0_13 = arith.constant 0 : index
    %17 = vector.load %arg36[%c0_11, %c0_12, %c0_13] : memref<1x128x384xbf16, #tpu.memory_space<vmem>>, vector<1x128x384xbf16>
    %18 = vector.shape_cast %17 : vector<1x128x384xbf16> to vector<128x384xbf16>
    %c0_14 = arith.constant 0 : index
    %c0_15 = arith.constant 0 : index
    %c0_16 = arith.constant 0 : index
    %19 = vector.load %arg35[%c0_14, %c0_15, %c0_16] : memref<1x1x384xf32, #tpu.memory_space<vmem>>, vector<1x1x384xf32>
    %20 = vector.shape_cast %19 : vector<1x1x384xf32> to vector<1x384xf32>
    %c0_17 = arith.constant 0 : index
    %c0_18 = arith.constant 0 : index
    %c0_19 = arith.constant 0 : index
    %21 = vector.load %arg42[%c0_17, %c0_18, %c0_19] : memref<1x128x128xbf16, #tpu.memory_space<vmem>>, vector<1x128x128xbf16>
    %22 = vector.shape_cast %21 : vector<1x128x128xbf16> to vector<128x128xbf16>
    %c0_20 = arith.constant 0 : index
    %c0_21 = arith.constant 0 : index
    %c0_22 = arith.constant 0 : index
    %23 = vector.load %arg41[%c0_20, %c0_21, %c0_22] : memref<1x1x128xf32, #tpu.memory_space<vmem>>, vector<1x1x128xf32>
    %24 = vector.shape_cast %23 : vector<1x1x128xf32> to vector<1x128xf32>
    %25 = arith.truncf %15 : vector<8x128xf32> to vector<8x128xbf16>
    %cst_23 = arith.constant dense<0.000000e+00> : vector<8x384xf32>
    %26 = tpu.matmul %25, %18, %cst_23 {dimension_numbers = #tpu.dot_dimension_numbers<[1], [0], [0], [1], [0, 0, 1, 1], [], []>} : vector<8x128xbf16>, vector<128x384xbf16>, vector<8x384xf32> -> vector<8x384xf32>
    %27 = vector.broadcast %20 : vector<1x384xf32> to vector<8x384xf32>
    %28 = arith.addf %26, %27 : vector<8x384xf32>
    %29 = vector.extract_strided_slice %28 {offsets = [0, 0], sizes = [8, 128], strides = [1, 1]} : vector<8x384xf32> to vector<8x128xf32>
    %30 = vector.extract_strided_slice %28 {offsets = [0, 128], sizes = [8, 128], strides = [1, 1]} : vector<8x384xf32> to vector<8x128xf32>
    %31 = vector.extract_strided_slice %28 {offsets = [0, 256], sizes = [8, 128], strides = [1, 1]} : vector<8x384xf32> to vector<8x128xf32>
    %32 = arith.truncf %29 : vector<8x128xf32> to vector<8x128xbf16>
    %33 = arith.truncf %30 : vector<8x128xf32> to vector<8x128xbf16>
    "tpu.trace_start"() <{level = 10 : i32, message = "qd,kd->qk"}> : () -> ()
    %cst_24 = arith.constant dense<0.000000e+00> : vector<8x8xf32>
    %34 = tpu.matmul %32, %33, %cst_24 {dimension_numbers = #tpu.dot_dimension_numbers<[1], [1], [0], [0], [0, 0, 1, 0], [], []>} : vector<8x128xbf16>, vector<8x128xbf16>, vector<8x8xf32> -> vector<8x8xf32>
    "tpu.trace_stop"() : () -> ()
    %cst_25 = arith.constant dense<0xFF800000> : vector<8xf32>
    %35 = vector.multi_reduction <maximumf>, %34, %cst_25 [1] : vector<8x8xf32> to vector<8xf32>
    %36 = vector.shape_cast %35 : vector<8xf32> to vector<8x1xf32>
    %37 = vector.broadcast %36 : vector<8x1xf32> to vector<8x8xf32>
    %38 = arith.subf %34, %37 : vector<8x8xf32>
    %39 = math.exp %38 : vector<8x8xf32>
    %cst_26 = arith.constant dense<0.000000e+00> : vector<8xf32>
    %40 = vector.multi_reduction <add>, %39, %cst_26 [1] : vector<8x8xf32> to vector<8xf32>
    %41 = vector.shape_cast %40 : vector<8xf32> to vector<8x1xf32>
    %42 = tpu.reciprocal %41 {approx = true} : vector<8x1xf32> -> vector<8x1xf32>
    %43 = vector.broadcast %42 : vector<8x1xf32> to vector<8x8xf32>
    %44 = arith.mulf %39, %43 : vector<8x8xf32>
    %45 = arith.truncf %44 : vector<8x8xf32> to vector<8x8xbf16>
    %46 = arith.truncf %31 : vector<8x128xf32> to vector<8x128xbf16>
    %cst_27 = arith.constant dense<0.000000e+00> : vector<8x128xf32>
    %47 = tpu.matmul %45, %46, %cst_27 {dimension_numbers = #tpu.dot_dimension_numbers<[1], [0], [0], [1], [0, 0, 1, 1], [], []>} : vector<8x8xbf16>, vector<8x128xbf16>, vector<8x128xf32> -> vector<8x128xf32>
    %48 = arith.truncf %47 : vector<8x128xf32> to vector<8x128xbf16>
    %cst_28 = arith.constant dense<0.000000e+00> : vector<8x128xf32>
    %49 = tpu.matmul %48, %22, %cst_28 {dimension_numbers = #tpu.dot_dimension_numbers<[1], [0], [0], [1], [0, 0, 1, 1], [], []>} : vector<8x128xbf16>, vector<128x128xbf16>, vector<8x128xf32> -> vector<8x128xf32>
    %50 = vector.broadcast %24 : vector<1x128xf32> to vector<8x128xf32>
    %51 = arith.addf %49, %50 : vector<8x128xf32>
    %52 = arith.addf %15, %51 : vector<8x128xf32>
    %c0_29 = arith.constant 0 : index
    %c0_30 = arith.constant 0 : index
    %c0_31 = arith.constant 0 : index
    %53 = vector.load %arg38[%c0_29, %c0_30, %c0_31] : memref<1x1x128xf32, #tpu.memory_space<vmem>>, vector<1x1x128xf32>
    %54 = vector.shape_cast %53 : vector<1x1x128xf32> to vector<1x128xf32>
    %c0_32 = arith.constant 0 : index
    %c0_33 = arith.constant 0 : index
    %c0_34 = arith.constant 0 : index
    %55 = vector.load %arg37[%c0_32, %c0_33, %c0_34] : memref<1x1x128xf32, #tpu.memory_space<vmem>>, vector<1x1x128xf32>
    %56 = vector.shape_cast %55 : vector<1x1x128xf32> to vector<1x128xf32>
    %cst_35 = arith.constant dense<0.000000e+00> : vector<8xf32>
    %57 = vector.multi_reduction <add>, %52, %cst_35 [1] : vector<8x128xf32> to vector<8xf32>
    %58 = vector.shape_cast %57 : vector<8xf32> to vector<8x1xf32>
    %cst_36 = arith.constant 1.280000e+02 : f32
    %59 = vector.broadcast %cst_36 : f32 to vector<8x1xf32>
    %60 = arith.divf %58, %59 : vector<8x1xf32>
    %61 = vector.broadcast %60 : vector<8x1xf32> to vector<8x128xf32>
    %62 = arith.subf %52, %61 : vector<8x128xf32>
    %63 = arith.mulf %62, %62 : vector<8x128xf32>
    %cst_37 = arith.constant dense<0.000000e+00> : vector<8xf32>
    %64 = vector.multi_reduction <add>, %63, %cst_37 [1] : vector<8x128xf32> to vector<8xf32>
    %65 = vector.shape_cast %64 : vector<8xf32> to vector<8x1xf32>
    %cst_38 = arith.constant 1.280000e+02 : f32
    %66 = vector.broadcast %cst_38 : f32 to vector<8x1xf32>
    %67 = arith.divf %65, %66 : vector<8x1xf32>
    %cst_39 = arith.constant 9.99999974E-6 : f32
    %68 = vector.broadcast %cst_39 : f32 to vector<8x1xf32>
    %69 = arith.addf %67, %68 : vector<8x1xf32>
    %70 = math.rsqrt %69 : vector<8x1xf32>
    %71 = vector.broadcast %70 : vector<8x1xf32> to vector<8x128xf32>
    %72 = arith.mulf %62, %71 : vector<8x128xf32>
    %73 = vector.broadcast %54 : vector<1x128xf32> to vector<8x128xf32>
    %74 = arith.mulf %72, %73 : vector<8x128xf32>
    %75 = vector.broadcast %56 : vector<1x128xf32> to vector<8x128xf32>
    %76 = arith.addf %74, %75 : vector<8x128xf32>
    %c0_40 = arith.constant 0 : index
    %c0_41 = arith.constant 0 : index
    %c0_42 = arith.constant 0 : index
    %77 = vector.load %arg32[%c0_40, %c0_41, %c0_42] : memref<1x128x128xbf16, #tpu.memory_space<vmem>>, vector<1x128x128xbf16>
    %78 = vector.shape_cast %77 : vector<1x128x128xbf16> to vector<128x128xbf16>
    %c0_43 = arith.constant 0 : index
    %c0_44 = arith.constant 0 : index
    %c0_45 = arith.constant 0 : index
    %79 = vector.load %arg31[%c0_43, %c0_44, %c0_45] : memref<1x1x128xf32, #tpu.memory_space<vmem>>, vector<1x1x128xf32>
    %80 = vector.shape_cast %79 : vector<1x1x128xf32> to vector<1x128xf32>
    %c0_46 = arith.constant 0 : index
    %c0_47 = arith.constant 0 : index
    %c0_48 = arith.constant 0 : index
    %81 = vector.load %arg34[%c0_46, %c0_47, %c0_48] : memref<1x128x128xbf16, #tpu.memory_space<vmem>>, vector<1x128x128xbf16>
    %82 = vector.shape_cast %81 : vector<1x128x128xbf16> to vector<128x128xbf16>
    %c0_49 = arith.constant 0 : index
    %c0_50 = arith.constant 0 : index
    %c0_51 = arith.constant 0 : index
    %83 = vector.load %arg33[%c0_49, %c0_50, %c0_51] : memref<1x1x128xf32, #tpu.memory_space<vmem>>, vector<1x1x128xf32>
    %84 = vector.shape_cast %83 : vector<1x1x128xf32> to vector<1x128xf32>
    %85 = arith.truncf %76 : vector<8x128xf32> to vector<8x128xbf16>
    %cst_52 = arith.constant dense<0.000000e+00> : vector<8x128xf32>
    %86 = tpu.matmul %85, %78, %cst_52 {dimension_numbers = #tpu.dot_dimension_numbers<[1], [0], [0], [1], [0, 0, 1, 1], [], []>} : vector<8x128xbf16>, vector<128x128xbf16>, vector<8x128xf32> -> vector<8x128xf32>
    %87 = vector.broadcast %80 : vector<1x128xf32> to vector<8x128xf32>
    %88 = arith.addf %86, %87 : vector<8x128xf32>
    %cst_53 = arith.constant 0.000000e+00 : f32
    %89 = vector.broadcast %cst_53 : f32 to vector<8x128xf32>
    %90 = arith.maximumf %88, %89 : vector<8x128xf32>
    %91 = arith.truncf %90 : vector<8x128xf32> to vector<8x128xbf16>
    %cst_54 = arith.constant dense<0.000000e+00> : vector<8x128xf32>
    %92 = tpu.matmul %91, %82, %cst_54 {dimension_numbers = #tpu.dot_dimension_numbers<[1], [0], [0], [1], [0, 0, 1, 1], [], []>} : vector<8x128xbf16>, vector<128x128xbf16>, vector<8x128xf32> -> vector<8x128xf32>
    %93 = vector.broadcast %84 : vector<1x128xf32> to vector<8x128xf32>
    %94 = arith.addf %92, %93 : vector<8x128xf32>
    %95 = arith.addf %76, %94 : vector<8x128xf32>
    %c0_55 = arith.constant 0 : index
    %c0_56 = arith.constant 0 : index
    %c0_57 = arith.constant 0 : index
    %96 = vector.load %arg40[%c0_55, %c0_56, %c0_57] : memref<1x1x128xf32, #tpu.memory_space<vmem>>, vector<1x1x128xf32>
    %97 = vector.shape_cast %96 : vector<1x1x128xf32> to vector<1x128xf32>
    %c0_58 = arith.constant 0 : index
    %c0_59 = arith.constant 0 : index
    %c0_60 = arith.constant 0 : index
    %98 = vector.load %arg39[%c0_58, %c0_59, %c0_60] : memref<1x1x128xf32, #tpu.memory_space<vmem>>, vector<1x1x128xf32>
    %99 = vector.shape_cast %98 : vector<1x1x128xf32> to vector<1x128xf32>
    %cst_61 = arith.constant dense<0.000000e+00> : vector<8xf32>
    %100 = vector.multi_reduction <add>, %95, %cst_61 [1] : vector<8x128xf32> to vector<8xf32>
    %101 = vector.shape_cast %100 : vector<8xf32> to vector<8x1xf32>
    %cst_62 = arith.constant 1.280000e+02 : f32
    %102 = vector.broadcast %cst_62 : f32 to vector<8x1xf32>
    %103 = arith.divf %101, %102 : vector<8x1xf32>
    %104 = vector.broadcast %103 : vector<8x1xf32> to vector<8x128xf32>
    %105 = arith.subf %95, %104 : vector<8x128xf32>
    %106 = arith.mulf %105, %105 : vector<8x128xf32>
    %cst_63 = arith.constant dense<0.000000e+00> : vector<8xf32>
    %107 = vector.multi_reduction <add>, %106, %cst_63 [1] : vector<8x128xf32> to vector<8xf32>
    %108 = vector.shape_cast %107 : vector<8xf32> to vector<8x1xf32>
    %cst_64 = arith.constant 1.280000e+02 : f32
    %109 = vector.broadcast %cst_64 : f32 to vector<8x1xf32>
    %110 = arith.divf %108, %109 : vector<8x1xf32>
    %cst_65 = arith.constant 9.99999974E-6 : f32
    %111 = vector.broadcast %cst_65 : f32 to vector<8x1xf32>
    %112 = arith.addf %110, %111 : vector<8x1xf32>
    %113 = math.rsqrt %112 : vector<8x1xf32>
    %114 = vector.broadcast %113 : vector<8x1xf32> to vector<8x128xf32>
    %115 = arith.mulf %105, %114 : vector<8x128xf32>
    %116 = vector.broadcast %97 : vector<1x128xf32> to vector<8x128xf32>
    %117 = arith.mulf %115, %116 : vector<8x128xf32>
    %118 = vector.broadcast %99 : vector<1x128xf32> to vector<8x128xf32>
    %119 = arith.addf %117, %118 : vector<8x128xf32>
    %c0_66 = arith.constant 0 : index
    %c0_67 = arith.constant 0 : index
    %c0_68 = arith.constant 0 : index
    %120 = vector.load %arg44[%c0_66, %c0_67, %c0_68] : memref<1x1x128xf32, #tpu.memory_space<vmem>>, vector<1x1x128xf32>
    %121 = vector.shape_cast %120 : vector<1x1x128xf32> to vector<1x128xf32>
    %c0_69 = arith.constant 0 : index
    %c0_70 = arith.constant 0 : index
    %c0_71 = arith.constant 0 : index
    %122 = vector.load %arg43[%c0_69, %c0_70, %c0_71] : memref<1x1x128xf32, #tpu.memory_space<vmem>>, vector<1x1x128xf32>
    %123 = vector.shape_cast %122 : vector<1x1x128xf32> to vector<1x128xf32>
    %cst_72 = arith.constant dense<0.000000e+00> : vector<8xf32>
    %124 = vector.multi_reduction <add>, %119, %cst_72 [1] : vector<8x128xf32> to vector<8xf32>
    %125 = vector.shape_cast %124 : vector<8xf32> to vector<8x1xf32>
    %cst_73 = arith.constant 1.280000e+02 : f32
    %126 = vector.broadcast %cst_73 : f32 to vector<8x1xf32>
    %127 = arith.divf %125, %126 : vector<8x1xf32>
    %128 = vector.broadcast %127 : vector<8x1xf32> to vector<8x128xf32>
    %129 = arith.subf %119, %128 : vector<8x128xf32>
    %130 = arith.mulf %129, %129 : vector<8x128xf32>
    %cst_74 = arith.constant dense<0.000000e+00> : vector<8xf32>
    %131 = vector.multi_reduction <add>, %130, %cst_74 [1] : vector<8x128xf32> to vector<8xf32>
    %132 = vector.shape_cast %131 : vector<8xf32> to vector<8x1xf32>
    %cst_75 = arith.constant 1.280000e+02 : f32
    %133 = vector.broadcast %cst_75 : f32 to vector<8x1xf32>
    %134 = arith.divf %132, %133 : vector<8x1xf32>
    %cst_76 = arith.constant 9.99999974E-6 : f32
    %135 = vector.broadcast %cst_76 : f32 to vector<8x1xf32>
    %136 = arith.addf %134, %135 : vector<8x1xf32>
    %137 = math.rsqrt %136 : vector<8x1xf32>
    %138 = vector.broadcast %137 : vector<8x1xf32> to vector<8x128xf32>
    %139 = arith.mulf %129, %138 : vector<8x128xf32>
    %140 = vector.broadcast %121 : vector<1x128xf32> to vector<8x128xf32>
    %141 = arith.mulf %139, %140 : vector<8x128xf32>
    %142 = vector.broadcast %123 : vector<1x128xf32> to vector<8x128xf32>
    %143 = arith.addf %141, %142 : vector<8x128xf32>
    %c0_77 = arith.constant 0 : index
    %c0_78 = arith.constant 0 : index
    %c0_79 = arith.constant 0 : index
    %144 = vector.load %arg26[%c0_77, %c0_78, %c0_79] : memref<1x128x384xbf16, #tpu.memory_space<vmem>>, vector<1x128x384xbf16>
    %145 = vector.shape_cast %144 : vector<1x128x384xbf16> to vector<128x384xbf16>
    %c0_80 = arith.constant 0 : index
    %c0_81 = arith.constant 0 : index
    %c0_82 = arith.constant 0 : index
    %146 = vector.load %arg25[%c0_80, %c0_81, %c0_82] : memref<1x1x384xf32, #tpu.memory_space<vmem>>, vector<1x1x384xf32>
    %147 = vector.shape_cast %146 : vector<1x1x384xf32> to vector<1x384xf32>
    %c0_83 = arith.constant 0 : index
    %c0_84 = arith.constant 0 : index
    %c0_85 = arith.constant 0 : index
    %148 = vector.load %arg28[%c0_83, %c0_84, %c0_85] : memref<1x128x128xbf16, #tpu.memory_space<vmem>>, vector<1x128x128xbf16>
    %149 = vector.shape_cast %148 : vector<1x128x128xbf16> to vector<128x128xbf16>
    %c0_86 = arith.constant 0 : index
    %c0_87 = arith.constant 0 : index
    %c0_88 = arith.constant 0 : index
    %150 = vector.load %arg27[%c0_86, %c0_87, %c0_88] : memref<1x1x128xf32, #tpu.memory_space<vmem>>, vector<1x1x128xf32>
    %151 = vector.shape_cast %150 : vector<1x1x128xf32> to vector<1x128xf32>
    %152 = arith.truncf %16 : vector<8x128xf32> to vector<8x128xbf16>
    %cst_89 = arith.constant dense<0.000000e+00> : vector<8x384xf32>
    %153 = tpu.matmul %152, %145, %cst_89 {dimension_numbers = #tpu.dot_dimension_numbers<[1], [0], [0], [1], [0, 0, 1, 1], [], []>} : vector<8x128xbf16>, vector<128x384xbf16>, vector<8x384xf32> -> vector<8x384xf32>
    %154 = vector.broadcast %147 : vector<1x384xf32> to vector<8x384xf32>
    %155 = arith.addf %153, %154 : vector<8x384xf32>
    %156 = vector.extract_strided_slice %155 {offsets = [0, 0], sizes = [8, 128], strides = [1, 1]} : vector<8x384xf32> to vector<8x128xf32>
    %157 = vector.extract_strided_slice %155 {offsets = [0, 128], sizes = [8, 128], strides = [1, 1]} : vector<8x384xf32> to vector<8x128xf32>
    %158 = vector.extract_strided_slice %155 {offsets = [0, 256], sizes = [8, 128], strides = [1, 1]} : vector<8x384xf32> to vector<8x128xf32>
    %159 = arith.truncf %156 : vector<8x128xf32> to vector<8x128xbf16>
    %160 = arith.truncf %157 : vector<8x128xf32> to vector<8x128xbf16>
    "tpu.trace_start"() <{level = 10 : i32, message = "qd,kd->qk"}> : () -> ()
    %cst_90 = arith.constant dense<0.000000e+00> : vector<8x8xf32>
    %161 = tpu.matmul %159, %160, %cst_90 {dimension_numbers = #tpu.dot_dimension_numbers<[1], [1], [0], [0], [0, 0, 1, 0], [], []>} : vector<8x128xbf16>, vector<8x128xbf16>, vector<8x8xf32> -> vector<8x8xf32>
    "tpu.trace_stop"() : () -> ()
    %cst_91 = arith.constant dense<0xFF800000> : vector<8xf32>
    %162 = vector.multi_reduction <maximumf>, %161, %cst_91 [1] : vector<8x8xf32> to vector<8xf32>
    %163 = vector.shape_cast %162 : vector<8xf32> to vector<8x1xf32>
    %164 = vector.broadcast %163 : vector<8x1xf32> to vector<8x8xf32>
    %165 = arith.subf %161, %164 : vector<8x8xf32>
    %166 = math.exp %165 : vector<8x8xf32>
    %cst_92 = arith.constant dense<0.000000e+00> : vector<8xf32>
    %167 = vector.multi_reduction <add>, %166, %cst_92 [1] : vector<8x8xf32> to vector<8xf32>
    %168 = vector.shape_cast %167 : vector<8xf32> to vector<8x1xf32>
    %169 = tpu.reciprocal %168 {approx = true} : vector<8x1xf32> -> vector<8x1xf32>
    %170 = vector.broadcast %169 : vector<8x1xf32> to vector<8x8xf32>
    %171 = arith.mulf %166, %170 : vector<8x8xf32>
    %172 = arith.truncf %171 : vector<8x8xf32> to vector<8x8xbf16>
    %173 = arith.truncf %158 : vector<8x128xf32> to vector<8x128xbf16>
    %cst_93 = arith.constant dense<0.000000e+00> : vector<8x128xf32>
    %174 = tpu.matmul %172, %173, %cst_93 {dimension_numbers = #tpu.dot_dimension_numbers<[1], [0], [0], [1], [0, 0, 1, 1], [], []>} : vector<8x8xbf16>, vector<8x128xbf16>, vector<8x128xf32> -> vector<8x128xf32>
    %175 = arith.truncf %174 : vector<8x128xf32> to vector<8x128xbf16>
    %cst_94 = arith.constant dense<0.000000e+00> : vector<8x128xf32>
    %176 = tpu.matmul %175, %149, %cst_94 {dimension_numbers = #tpu.dot_dimension_numbers<[1], [0], [0], [1], [0, 0, 1, 1], [], []>} : vector<8x128xbf16>, vector<128x128xbf16>, vector<8x128xf32> -> vector<8x128xf32>
    %177 = vector.broadcast %151 : vector<1x128xf32> to vector<8x128xf32>
    %178 = arith.addf %176, %177 : vector<8x128xf32>
    %179 = arith.addf %16, %178 : vector<8x128xf32>
    %c0_95 = arith.constant 0 : index
    %c0_96 = arith.constant 0 : index
    %c0_97 = arith.constant 0 : index
    %180 = vector.load %arg20[%c0_95, %c0_96, %c0_97] : memref<1x1x128xf32, #tpu.memory_space<vmem>>, vector<1x1x128xf32>
    %181 = vector.shape_cast %180 : vector<1x1x128xf32> to vector<1x128xf32>
    %c0_98 = arith.constant 0 : index
    %c0_99 = arith.constant 0 : index
    %c0_100 = arith.constant 0 : index
    %182 = vector.load %arg19[%c0_98, %c0_99, %c0_100] : memref<1x1x128xf32, #tpu.memory_space<vmem>>, vector<1x1x128xf32>
    %183 = vector.shape_cast %182 : vector<1x1x128xf32> to vector<1x128xf32>
    %cst_101 = arith.constant dense<0.000000e+00> : vector<8xf32>
    %184 = vector.multi_reduction <add>, %179, %cst_101 [1] : vector<8x128xf32> to vector<8xf32>
    %185 = vector.shape_cast %184 : vector<8xf32> to vector<8x1xf32>
    %cst_102 = arith.constant 1.280000e+02 : f32
    %186 = vector.broadcast %cst_102 : f32 to vector<8x1xf32>
    %187 = arith.divf %185, %186 : vector<8x1xf32>
    %188 = vector.broadcast %187 : vector<8x1xf32> to vector<8x128xf32>
    %189 = arith.subf %179, %188 : vector<8x128xf32>
    %190 = arith.mulf %189, %189 : vector<8x128xf32>
    %cst_103 = arith.constant dense<0.000000e+00> : vector<8xf32>
    %191 = vector.multi_reduction <add>, %190, %cst_103 [1] : vector<8x128xf32> to vector<8xf32>
    %192 = vector.shape_cast %191 : vector<8xf32> to vector<8x1xf32>
    %cst_104 = arith.constant 1.280000e+02 : f32
    %193 = vector.broadcast %cst_104 : f32 to vector<8x1xf32>
    %194 = arith.divf %192, %193 : vector<8x1xf32>
    %cst_105 = arith.constant 9.99999974E-6 : f32
    %195 = vector.broadcast %cst_105 : f32 to vector<8x1xf32>
    %196 = arith.addf %194, %195 : vector<8x1xf32>
    %197 = math.rsqrt %196 : vector<8x1xf32>
    %198 = vector.broadcast %197 : vector<8x1xf32> to vector<8x128xf32>
    %199 = arith.mulf %189, %198 : vector<8x128xf32>
    %200 = vector.broadcast %181 : vector<1x128xf32> to vector<8x128xf32>
    %201 = arith.mulf %199, %200 : vector<8x128xf32>
    %202 = vector.broadcast %183 : vector<1x128xf32> to vector<8x128xf32>
    %203 = arith.addf %201, %202 : vector<8x128xf32>
    %c0_106 = arith.constant 0 : index
    %c0_107 = arith.constant 0 : index
    %c0_108 = arith.constant 0 : index
    %204 = vector.load %arg14[%c0_106, %c0_107, %c0_108] : memref<1x128x128xbf16, #tpu.memory_space<vmem>>, vector<1x128x128xbf16>
    %205 = vector.shape_cast %204 : vector<1x128x128xbf16> to vector<128x128xbf16>
    %c0_109 = arith.constant 0 : index
    %c0_110 = arith.constant 0 : index
    %c0_111 = arith.constant 0 : index
    %206 = vector.load %arg13[%c0_109, %c0_110, %c0_111] : memref<1x1x128xf32, #tpu.memory_space<vmem>>, vector<1x1x128xf32>
    %207 = vector.shape_cast %206 : vector<1x1x128xf32> to vector<1x128xf32>
    %c0_112 = arith.constant 0 : index
    %c0_113 = arith.constant 0 : index
    %c0_114 = arith.constant 0 : index
    %208 = vector.load %arg10[%c0_112, %c0_113, %c0_114] : memref<1x128x256xbf16, #tpu.memory_space<vmem>>, vector<1x128x256xbf16>
    %209 = vector.shape_cast %208 : vector<1x128x256xbf16> to vector<128x256xbf16>
    %c0_115 = arith.constant 0 : index
    %c0_116 = arith.constant 0 : index
    %c0_117 = arith.constant 0 : index
    %210 = vector.load %arg9[%c0_115, %c0_116, %c0_117] : memref<1x1x256xf32, #tpu.memory_space<vmem>>, vector<1x1x256xf32>
    %211 = vector.shape_cast %210 : vector<1x1x256xf32> to vector<1x256xf32>
    %c0_118 = arith.constant 0 : index
    %c0_119 = arith.constant 0 : index
    %c0_120 = arith.constant 0 : index
    %212 = vector.load %arg12[%c0_118, %c0_119, %c0_120] : memref<1x128x128xbf16, #tpu.memory_space<vmem>>, vector<1x128x128xbf16>
    %213 = vector.shape_cast %212 : vector<1x128x128xbf16> to vector<128x128xbf16>
    %c0_121 = arith.constant 0 : index
    %c0_122 = arith.constant 0 : index
    %c0_123 = arith.constant 0 : index
    %214 = vector.load %arg11[%c0_121, %c0_122, %c0_123] : memref<1x1x128xf32, #tpu.memory_space<vmem>>, vector<1x1x128xf32>
    %215 = vector.shape_cast %214 : vector<1x1x128xf32> to vector<1x128xf32>
    %216 = arith.truncf %203 : vector<8x128xf32> to vector<8x128xbf16>
    %cst_124 = arith.constant dense<0.000000e+00> : vector<8x128xf32>
    %217 = tpu.matmul %216, %205, %cst_124 {dimension_numbers = #tpu.dot_dimension_numbers<[1], [0], [0], [1], [0, 0, 1, 1], [], []>} : vector<8x128xbf16>, vector<128x128xbf16>, vector<8x128xf32> -> vector<8x128xf32>
    %218 = vector.broadcast %207 : vector<1x128xf32> to vector<8x128xf32>
    %219 = arith.addf %217, %218 : vector<8x128xf32>
    %220 = arith.truncf %143 : vector<8x128xf32> to vector<8x128xbf16>
    %cst_125 = arith.constant dense<0.000000e+00> : vector<8x256xf32>
    %221 = tpu.matmul %220, %209, %cst_125 {dimension_numbers = #tpu.dot_dimension_numbers<[1], [0], [0], [1], [0, 0, 1, 1], [], []>} : vector<8x128xbf16>, vector<128x256xbf16>, vector<8x256xf32> -> vector<8x256xf32>
    %222 = vector.broadcast %211 : vector<1x256xf32> to vector<8x256xf32>
    %223 = arith.addf %221, %222 : vector<8x256xf32>
    %224 = vector.extract_strided_slice %223 {offsets = [0, 0], sizes = [8, 128], strides = [1, 1]} : vector<8x256xf32> to vector<8x128xf32>
    %225 = vector.extract_strided_slice %223 {offsets = [0, 128], sizes = [8, 128], strides = [1, 1]} : vector<8x256xf32> to vector<8x128xf32>
    %226 = arith.truncf %219 : vector<8x128xf32> to vector<8x128xbf16>
    %227 = arith.truncf %224 : vector<8x128xf32> to vector<8x128xbf16>
    "tpu.trace_start"() <{level = 10 : i32, message = "qd,kd->qk"}> : () -> ()
    %cst_126 = arith.constant dense<0.000000e+00> : vector<8x8xf32>
    %228 = tpu.matmul %226, %227, %cst_126 {dimension_numbers = #tpu.dot_dimension_numbers<[1], [1], [0], [0], [0, 0, 1, 0], [], []>} : vector<8x128xbf16>, vector<8x128xbf16>, vector<8x8xf32> -> vector<8x8xf32>
    "tpu.trace_stop"() : () -> ()
    %cst_127 = arith.constant dense<0xFF800000> : vector<8xf32>
    %229 = vector.multi_reduction <maximumf>, %228, %cst_127 [1] : vector<8x8xf32> to vector<8xf32>
    %230 = vector.shape_cast %229 : vector<8xf32> to vector<8x1xf32>
    %231 = vector.broadcast %230 : vector<8x1xf32> to vector<8x8xf32>
    %232 = arith.subf %228, %231 : vector<8x8xf32>
    %233 = math.exp %232 : vector<8x8xf32>
    %cst_128 = arith.constant dense<0.000000e+00> : vector<8xf32>
    %234 = vector.multi_reduction <add>, %233, %cst_128 [1] : vector<8x8xf32> to vector<8xf32>
    %235 = vector.shape_cast %234 : vector<8xf32> to vector<8x1xf32>
    %236 = tpu.reciprocal %235 {approx = true} : vector<8x1xf32> -> vector<8x1xf32>
    %237 = vector.broadcast %236 : vector<8x1xf32> to vector<8x8xf32>
    %238 = arith.mulf %233, %237 : vector<8x8xf32>
    %239 = arith.truncf %238 : vector<8x8xf32> to vector<8x8xbf16>
    %240 = arith.truncf %225 : vector<8x128xf32> to vector<8x128xbf16>
    %cst_129 = arith.constant dense<0.000000e+00> : vector<8x128xf32>
    %241 = tpu.matmul %239, %240, %cst_129 {dimension_numbers = #tpu.dot_dimension_numbers<[1], [0], [0], [1], [0, 0, 1, 1], [], []>} : vector<8x8xbf16>, vector<8x128xbf16>, vector<8x128xf32> -> vector<8x128xf32>
    %242 = arith.truncf %241 : vector<8x128xf32> to vector<8x128xbf16>
    %cst_130 = arith.constant dense<0.000000e+00> : vector<8x128xf32>
    %243 = tpu.matmul %242, %213, %cst_130 {dimension_numbers = #tpu.dot_dimension_numbers<[1], [0], [0], [1], [0, 0, 1, 1], [], []>} : vector<8x128xbf16>, vector<128x128xbf16>, vector<8x128xf32> -> vector<8x128xf32>
    %244 = vector.broadcast %215 : vector<1x128xf32> to vector<8x128xf32>
    %245 = arith.addf %243, %244 : vector<8x128xf32>
    %246 = arith.addf %203, %245 : vector<8x128xf32>
    %c0_131 = arith.constant 0 : index
    %c0_132 = arith.constant 0 : index
    %c0_133 = arith.constant 0 : index
    %247 = vector.load %arg22[%c0_131, %c0_132, %c0_133] : memref<1x1x128xf32, #tpu.memory_space<vmem>>, vector<1x1x128xf32>
    %248 = vector.shape_cast %247 : vector<1x1x128xf32> to vector<1x128xf32>
    %c0_134 = arith.constant 0 : index
    %c0_135 = arith.constant 0 : index
    %c0_136 = arith.constant 0 : index
    %249 = vector.load %arg21[%c0_134, %c0_135, %c0_136] : memref<1x1x128xf32, #tpu.memory_space<vmem>>, vector<1x1x128xf32>
    %250 = vector.shape_cast %249 : vector<1x1x128xf32> to vector<1x128xf32>
    %cst_137 = arith.constant dense<0.000000e+00> : vector<8xf32>
    %251 = vector.multi_reduction <add>, %246, %cst_137 [1] : vector<8x128xf32> to vector<8xf32>
    %252 = vector.shape_cast %251 : vector<8xf32> to vector<8x1xf32>
    %cst_138 = arith.constant 1.280000e+02 : f32
    %253 = vector.broadcast %cst_138 : f32 to vector<8x1xf32>
    %254 = arith.divf %252, %253 : vector<8x1xf32>
    %255 = vector.broadcast %254 : vector<8x1xf32> to vector<8x128xf32>
    %256 = arith.subf %246, %255 : vector<8x128xf32>
    %257 = arith.mulf %256, %256 : vector<8x128xf32>
    %cst_139 = arith.constant dense<0.000000e+00> : vector<8xf32>
    %258 = vector.multi_reduction <add>, %257, %cst_139 [1] : vector<8x128xf32> to vector<8xf32>
    %259 = vector.shape_cast %258 : vector<8xf32> to vector<8x1xf32>
    %cst_140 = arith.constant 1.280000e+02 : f32
    %260 = vector.broadcast %cst_140 : f32 to vector<8x1xf32>
    %261 = arith.divf %259, %260 : vector<8x1xf32>
    %cst_141 = arith.constant 9.99999974E-6 : f32
    %262 = vector.broadcast %cst_141 : f32 to vector<8x1xf32>
    %263 = arith.addf %261, %262 : vector<8x1xf32>
    %264 = math.rsqrt %263 : vector<8x1xf32>
    %265 = vector.broadcast %264 : vector<8x1xf32> to vector<8x128xf32>
    %266 = arith.mulf %256, %265 : vector<8x128xf32>
    %267 = vector.broadcast %248 : vector<1x128xf32> to vector<8x128xf32>
    %268 = arith.mulf %266, %267 : vector<8x128xf32>
    %269 = vector.broadcast %250 : vector<1x128xf32> to vector<8x128xf32>
    %270 = arith.addf %268, %269 : vector<8x128xf32>
    %c0_142 = arith.constant 0 : index
    %c0_143 = arith.constant 0 : index
    %c0_144 = arith.constant 0 : index
    %271 = vector.load %arg16[%c0_142, %c0_143, %c0_144] : memref<1x128x128xbf16, #tpu.memory_space<vmem>>, vector<1x128x128xbf16>
    %272 = vector.shape_cast %271 : vector<1x128x128xbf16> to vector<128x128xbf16>
    %c0_145 = arith.constant 0 : index
    %c0_146 = arith.constant 0 : index
    %c0_147 = arith.constant 0 : index
    %273 = vector.load %arg15[%c0_145, %c0_146, %c0_147] : memref<1x1x128xf32, #tpu.memory_space<vmem>>, vector<1x1x128xf32>
    %274 = vector.shape_cast %273 : vector<1x1x128xf32> to vector<1x128xf32>
    %c0_148 = arith.constant 0 : index
    %c0_149 = arith.constant 0 : index
    %c0_150 = arith.constant 0 : index
    %275 = vector.load %arg18[%c0_148, %c0_149, %c0_150] : memref<1x128x128xbf16, #tpu.memory_space<vmem>>, vector<1x128x128xbf16>
    %276 = vector.shape_cast %275 : vector<1x128x128xbf16> to vector<128x128xbf16>
    %c0_151 = arith.constant 0 : index
    %c0_152 = arith.constant 0 : index
    %c0_153 = arith.constant 0 : index
    %277 = vector.load %arg17[%c0_151, %c0_152, %c0_153] : memref<1x1x128xf32, #tpu.memory_space<vmem>>, vector<1x1x128xf32>
    %278 = vector.shape_cast %277 : vector<1x1x128xf32> to vector<1x128xf32>
    %279 = arith.truncf %270 : vector<8x128xf32> to vector<8x128xbf16>
    %cst_154 = arith.constant dense<0.000000e+00> : vector<8x128xf32>
    %280 = tpu.matmul %279, %272, %cst_154 {dimension_numbers = #tpu.dot_dimension_numbers<[1], [0], [0], [1], [0, 0, 1, 1], [], []>} : vector<8x128xbf16>, vector<128x128xbf16>, vector<8x128xf32> -> vector<8x128xf32>
    %281 = vector.broadcast %274 : vector<1x128xf32> to vector<8x128xf32>
    %282 = arith.addf %280, %281 : vector<8x128xf32>
    %cst_155 = arith.constant 0.000000e+00 : f32
    %283 = vector.broadcast %cst_155 : f32 to vector<8x128xf32>
    %284 = arith.maximumf %282, %283 : vector<8x128xf32>
    %285 = arith.truncf %284 : vector<8x128xf32> to vector<8x128xbf16>
    %cst_156 = arith.constant dense<0.000000e+00> : vector<8x128xf32>
    %286 = tpu.matmul %285, %276, %cst_156 {dimension_numbers = #tpu.dot_dimension_numbers<[1], [0], [0], [1], [0, 0, 1, 1], [], []>} : vector<8x128xbf16>, vector<128x128xbf16>, vector<8x128xf32> -> vector<8x128xf32>
    %287 = vector.broadcast %278 : vector<1x128xf32> to vector<8x128xf32>
    %288 = arith.addf %286, %287 : vector<8x128xf32>
    %289 = arith.addf %270, %288 : vector<8x128xf32>
    %c0_157 = arith.constant 0 : index
    %c0_158 = arith.constant 0 : index
    %c0_159 = arith.constant 0 : index
    %290 = vector.load %arg24[%c0_157, %c0_158, %c0_159] : memref<1x1x128xf32, #tpu.memory_space<vmem>>, vector<1x1x128xf32>
    %291 = vector.shape_cast %290 : vector<1x1x128xf32> to vector<1x128xf32>
    %c0_160 = arith.constant 0 : index
    %c0_161 = arith.constant 0 : index
    %c0_162 = arith.constant 0 : index
    %292 = vector.load %arg23[%c0_160, %c0_161, %c0_162] : memref<1x1x128xf32, #tpu.memory_space<vmem>>, vector<1x1x128xf32>
    %293 = vector.shape_cast %292 : vector<1x1x128xf32> to vector<1x128xf32>
    %cst_163 = arith.constant dense<0.000000e+00> : vector<8xf32>
    %294 = vector.multi_reduction <add>, %289, %cst_163 [1] : vector<8x128xf32> to vector<8xf32>
    %295 = vector.shape_cast %294 : vector<8xf32> to vector<8x1xf32>
    %cst_164 = arith.constant 1.280000e+02 : f32
    %296 = vector.broadcast %cst_164 : f32 to vector<8x1xf32>
    %297 = arith.divf %295, %296 : vector<8x1xf32>
    %298 = vector.broadcast %297 : vector<8x1xf32> to vector<8x128xf32>
    %299 = arith.subf %289, %298 : vector<8x128xf32>
    %300 = arith.mulf %299, %299 : vector<8x128xf32>
    %cst_165 = arith.constant dense<0.000000e+00> : vector<8xf32>
    %301 = vector.multi_reduction <add>, %300, %cst_165 [1] : vector<8x128xf32> to vector<8xf32>
    %302 = vector.shape_cast %301 : vector<8xf32> to vector<8x1xf32>
    %cst_166 = arith.constant 1.280000e+02 : f32
    %303 = vector.broadcast %cst_166 : f32 to vector<8x1xf32>
    %304 = arith.divf %302, %303 : vector<8x1xf32>
    %cst_167 = arith.constant 9.99999974E-6 : f32
    %305 = vector.broadcast %cst_167 : f32 to vector<8x1xf32>
    %306 = arith.addf %304, %305 : vector<8x1xf32>
    %307 = math.rsqrt %306 : vector<8x1xf32>
    %308 = vector.broadcast %307 : vector<8x1xf32> to vector<8x128xf32>
    %309 = arith.mulf %299, %308 : vector<8x128xf32>
    %310 = vector.broadcast %291 : vector<1x128xf32> to vector<8x128xf32>
    %311 = arith.mulf %309, %310 : vector<8x128xf32>
    %312 = vector.broadcast %293 : vector<1x128xf32> to vector<8x128xf32>
    %313 = arith.addf %311, %312 : vector<8x128xf32>
    %c0_168 = arith.constant 0 : index
    %c0_169 = arith.constant 0 : index
    %c0_170 = arith.constant 0 : index
    %314 = vector.load %arg30[%c0_168, %c0_169, %c0_170] : memref<1x1x128xf32, #tpu.memory_space<vmem>>, vector<1x1x128xf32>
    %315 = vector.shape_cast %314 : vector<1x1x128xf32> to vector<1x128xf32>
    %c0_171 = arith.constant 0 : index
    %c0_172 = arith.constant 0 : index
    %c0_173 = arith.constant 0 : index
    %316 = vector.load %arg29[%c0_171, %c0_172, %c0_173] : memref<1x1x128xf32, #tpu.memory_space<vmem>>, vector<1x1x128xf32>
    %317 = vector.shape_cast %316 : vector<1x1x128xf32> to vector<1x128xf32>
    %cst_174 = arith.constant dense<0.000000e+00> : vector<8xf32>
    %318 = vector.multi_reduction <add>, %313, %cst_174 [1] : vector<8x128xf32> to vector<8xf32>
    %319 = vector.shape_cast %318 : vector<8xf32> to vector<8x1xf32>
    %cst_175 = arith.constant 1.280000e+02 : f32
    %320 = vector.broadcast %cst_175 : f32 to vector<8x1xf32>
    %321 = arith.divf %319, %320 : vector<8x1xf32>
    %322 = vector.broadcast %321 : vector<8x1xf32> to vector<8x128xf32>
    %323 = arith.subf %313, %322 : vector<8x128xf32>
    %324 = arith.mulf %323, %323 : vector<8x128xf32>
    %cst_176 = arith.constant dense<0.000000e+00> : vector<8xf32>
    %325 = vector.multi_reduction <add>, %324, %cst_176 [1] : vector<8x128xf32> to vector<8xf32>
    %326 = vector.shape_cast %325 : vector<8xf32> to vector<8x1xf32>
    %cst_177 = arith.constant 1.280000e+02 : f32
    %327 = vector.broadcast %cst_177 : f32 to vector<8x1xf32>
    %328 = arith.divf %326, %327 : vector<8x1xf32>
    %cst_178 = arith.constant 9.99999974E-6 : f32
    %329 = vector.broadcast %cst_178 : f32 to vector<8x1xf32>
    %330 = arith.addf %328, %329 : vector<8x1xf32>
    %331 = math.rsqrt %330 : vector<8x1xf32>
    %332 = vector.broadcast %331 : vector<8x1xf32> to vector<8x128xf32>
    %333 = arith.mulf %323, %332 : vector<8x128xf32>
    %334 = vector.broadcast %315 : vector<1x128xf32> to vector<8x128xf32>
    %335 = arith.mulf %333, %334 : vector<8x128xf32>
    %336 = vector.broadcast %317 : vector<1x128xf32> to vector<8x128xf32>
    %337 = arith.addf %335, %336 : vector<8x128xf32>
    %cst_179 = arith.constant 0.000000e+00 : f32
    %338 = vector.broadcast %cst_179 : f32 to vector<8x128xf32>
    %339 = arith.maximumf %337, %338 : vector<8x128xf32>
    %340 = arith.addf %3, %339 : vector<8x128xf32>
    %c0_180 = arith.constant 0 : index
    %c0_181 = arith.constant 0 : index
    %341 = vector.load %arg46[%c0_180, %c0_181] : memref<8x128xf32, #tpu.memory_space<vmem>>, vector<8x128xf32>
    tpu.vector_store %arg46[%c0_180, %c0_181], %340 {strides = array<i32>} : memref<8x128xf32, #tpu.memory_space<vmem>>, vector<8x128xf32>,
    %c2_i32 = arith.constant 2 : i32
    %342 = arith.cmpi eq, %arg0, %c2_i32 : i32
    %343 = arith.extui %342 : i1 to i32
    %c0_i32_182 = arith.constant 0 : i32
    %344 = arith.cmpi ne, %343, %c0_i32_182 : i32
    scf.if %344 {
      %345 = arith.truncf %340 : vector<8x128xf32> to vector<8x128xbf16>
      %c0_183 = arith.constant 0 : index
      %c0_184 = arith.constant 0 : index
      %346 = vector.load %arg5[%c0_183, %c0_184] : memref<128x128xbf16, #tpu.memory_space<vmem>>, vector<128x128xbf16>
      %cst_185 = arith.constant dense<0.000000e+00> : vector<8x128xf32>
      %347 = tpu.matmul %345, %346, %cst_185 {dimension_numbers = #tpu.dot_dimension_numbers<[1], [0], [0], [1], [0, 0, 1, 1], [], []>} : vector<8x128xbf16>, vector<128x128xbf16>, vector<8x128xf32> -> vector<8x128xf32>
      %c0_186 = arith.constant 0 : index
      %c0_187 = arith.constant 0 : index
      %348 = vector.load %arg6[%c0_186, %c0_187] : memref<1x128xf32, #tpu.memory_space<vmem>>, vector<1x128xf32>
      %349 = vector.broadcast %348 : vector<1x128xf32> to vector<8x128xf32>
      %350 = arith.addf %347, %349 : vector<8x128xf32>
      %c0_188 = arith.constant 0 : index
      %c0_189 = arith.constant 0 : index
      %351 = vector.load %arg45[%c0_188, %c0_189] : memref<8x128xf32, #tpu.memory_space<vmem>>, vector<8x128xf32>
      tpu.vector_store %arg45[%c0_188, %c0_189], %350 {strides = array<i32>} : memref<8x128xf32, #tpu.memory_space<vmem>>, vector<8x128xf32>,
    } else {
    }
    return
  }
  func.func @transform_0(%arg0: i32) -> (i32, i32) {
    %c0_i32 = arith.constant 0 : i32
    %c0_i32_0 = arith.constant 0 : i32
    %c0_i32_1 = arith.constant 0 : i32
    return %c0_i32, %c0_i32_0 : i32, i32
  }
  func.func @transform_1(%arg0: i32) -> (i32, i32) {
    %c0_i32 = arith.constant 0 : i32
    %c0_i32_0 = arith.constant 0 : i32
    %c0_i32_1 = arith.constant 0 : i32
    return %c0_i32, %c0_i32_0 : i32, i32
  }
  func.func @transform_2(%arg0: i32) -> (i32, i32) {
    %c0_i32 = arith.constant 0 : i32
    %c0_i32_0 = arith.constant 0 : i32
    %c0_i32_1 = arith.constant 0 : i32
    return %c0_i32, %c0_i32_0 : i32, i32
  }
  func.func @transform_3(%arg0: i32) -> (i32, i32) {
    %c0_i32 = arith.constant 0 : i32
    %c0_i32_0 = arith.constant 0 : i32
    %c0_i32_1 = arith.constant 0 : i32
    return %c0_i32, %c0_i32_0 : i32, i32
  }
  func.func @transform_4(%arg0: i32) -> (i32, i32) {
    %c0_i32 = arith.constant 0 : i32
    %c0_i32_0 = arith.constant 0 : i32
    %c0_i32_1 = arith.constant 0 : i32
    return %c0_i32, %c0_i32_0 : i32, i32
  }
  func.func @transform_5(%arg0: i32) -> (i32, i32) {
    %c0_i32 = arith.constant 0 : i32
    %c0_i32_0 = arith.constant 0 : i32
    %c0_i32_1 = arith.constant 0 : i32
    return %c0_i32, %c0_i32_0 : i32, i32
  }
  func.func @transform_6(%arg0: i32) -> (i32, i32, i32) {
    %c0_i32 = arith.constant 0 : i32
    %c0_i32_0 = arith.constant 0 : i32
    %c0_i32_1 = arith.constant 0 : i32
    return %arg0, %c0_i32, %c0_i32_0 : i32, i32, i32
  }
  func.func @transform_7(%arg0: i32) -> (i32, i32, i32) {
    %c0_i32 = arith.constant 0 : i32
    %c0_i32_0 = arith.constant 0 : i32
    %c0_i32_1 = arith.constant 0 : i32
    return %arg0, %c0_i32, %c0_i32_0 : i32, i32, i32
  }
  func.func @transform_8(%arg0: i32) -> (i32, i32, i32) {
    %c0_i32 = arith.constant 0 : i32
    %c0_i32_0 = arith.constant 0 : i32
    %c0_i32_1 = arith.constant 0 : i32
    return %arg0, %c0_i32, %c0_i32_0 : i32, i32, i32
  }
  func.func @transform_9(%arg0: i32) -> (i32, i32, i32) {
    %c0_i32 = arith.constant 0 : i32
    %c0_i32_0 = arith.constant 0 : i32
    %c0_i32_1 = arith.constant 0 : i32
    return %arg0, %c0_i32, %c0_i32_0 : i32, i32, i32
  }
  func.func @transform_10(%arg0: i32) -> (i32, i32, i32) {
    %c0_i32 = arith.constant 0 : i32
    %c0_i32_0 = arith.constant 0 : i32
    %c0_i32_1 = arith.constant 0 : i32
    return %arg0, %c0_i32, %c0_i32_0 : i32, i32, i32
  }
  func.func @transform_11(%arg0: i32) -> (i32, i32, i32) {
    %c0_i32 = arith.constant 0 : i32
    %c0_i32_0 = arith.constant 0 : i32
    %c0_i32_1 = arith.constant 0 : i32
    return %arg0, %c0_i32, %c0_i32_0 : i32, i32, i32
  }
  func.func @transform_12(%arg0: i32) -> (i32, i32, i32) {
    %c0_i32 = arith.constant 0 : i32
    %c0_i32_0 = arith.constant 0 : i32
    %c0_i32_1 = arith.constant 0 : i32
    return %arg0, %c0_i32, %c0_i32_0 : i32, i32, i32
  }
  func.func @transform_13(%arg0: i32) -> (i32, i32, i32) {
    %c0_i32 = arith.constant 0 : i32
    %c0_i32_0 = arith.constant 0 : i32
    %c0_i32_1 = arith.constant 0 : i32
    return %arg0, %c0_i32, %c0_i32_0 : i32, i32, i32
  }
  func.func @transform_14(%arg0: i32) -> (i32, i32, i32) {
    %c0_i32 = arith.constant 0 : i32
    %c0_i32_0 = arith.constant 0 : i32
    %c0_i32_1 = arith.constant 0 : i32
    return %arg0, %c0_i32, %c0_i32_0 : i32, i32, i32
  }
  func.func @transform_15(%arg0: i32) -> (i32, i32, i32) {
    %c0_i32 = arith.constant 0 : i32
    %c0_i32_0 = arith.constant 0 : i32
    %c0_i32_1 = arith.constant 0 : i32
    return %arg0, %c0_i32, %c0_i32_0 : i32, i32, i32
  }
  func.func @transform_16(%arg0: i32) -> (i32, i32, i32) {
    %c0_i32 = arith.constant 0 : i32
    %c0_i32_0 = arith.constant 0 : i32
    %c0_i32_1 = arith.constant 0 : i32
    return %arg0, %c0_i32, %c0_i32_0 : i32, i32, i32
  }
  func.func @transform_17(%arg0: i32) -> (i32, i32, i32) {
    %c0_i32 = arith.constant 0 : i32
    %c0_i32_0 = arith.constant 0 : i32
    %c0_i32_1 = arith.constant 0 : i32
    return %arg0, %c0_i32, %c0_i32_0 : i32, i32, i32
  }
  func.func @transform_18(%arg0: i32) -> (i32, i32, i32) {
    %c0_i32 = arith.constant 0 : i32
    %c0_i32_0 = arith.constant 0 : i32
    %c0_i32_1 = arith.constant 0 : i32
    return %arg0, %c0_i32, %c0_i32_0 : i32, i32, i32
  }
  func.func @transform_19(%arg0: i32) -> (i32, i32, i32) {
    %c0_i32 = arith.constant 0 : i32
    %c0_i32_0 = arith.constant 0 : i32
    %c0_i32_1 = arith.constant 0 : i32
    return %arg0, %c0_i32, %c0_i32_0 : i32, i32, i32
  }
  func.func @transform_20(%arg0: i32) -> (i32, i32, i32) {
    %c0_i32 = arith.constant 0 : i32
    %c0_i32_0 = arith.constant 0 : i32
    %c0_i32_1 = arith.constant 0 : i32
    return %arg0, %c0_i32, %c0_i32_0 : i32, i32, i32
  }
  func.func @transform_21(%arg0: i32) -> (i32, i32, i32) {
    %c0_i32 = arith.constant 0 : i32
    %c0_i32_0 = arith.constant 0 : i32
    %c0_i32_1 = arith.constant 0 : i32
    return %arg0, %c0_i32, %c0_i32_0 : i32, i32, i32
  }
  func.func @transform_22(%arg0: i32) -> (i32, i32, i32) {
    %c0_i32 = arith.constant 0 : i32
    %c0_i32_0 = arith.constant 0 : i32
    %c0_i32_1 = arith.constant 0 : i32
    return %arg0, %c0_i32, %c0_i32_0 : i32, i32, i32
  }
  func.func @transform_23(%arg0: i32) -> (i32, i32, i32) {
    %c0_i32 = arith.constant 0 : i32
    %c0_i32_0 = arith.constant 0 : i32
    %c0_i32_1 = arith.constant 0 : i32
    return %arg0, %c0_i32, %c0_i32_0 : i32, i32, i32
  }
  func.func @transform_24(%arg0: i32) -> (i32, i32, i32) {
    %c0_i32 = arith.constant 0 : i32
    %c0_i32_0 = arith.constant 0 : i32
    %c0_i32_1 = arith.constant 0 : i32
    return %arg0, %c0_i32, %c0_i32_0 : i32, i32, i32
  }
  func.func @transform_25(%arg0: i32) -> (i32, i32, i32) {
    %c0_i32 = arith.constant 0 : i32
    %c0_i32_0 = arith.constant 0 : i32
    %c0_i32_1 = arith.constant 0 : i32
    return %arg0, %c0_i32, %c0_i32_0 : i32, i32, i32
  }
  func.func @transform_26(%arg0: i32) -> (i32, i32, i32) {
    %c0_i32 = arith.constant 0 : i32
    %c0_i32_0 = arith.constant 0 : i32
    %c0_i32_1 = arith.constant 0 : i32
    return %arg0, %c0_i32, %c0_i32_0 : i32, i32, i32
  }
  func.func @transform_27(%arg0: i32) -> (i32, i32, i32) {
    %c0_i32 = arith.constant 0 : i32
    %c0_i32_0 = arith.constant 0 : i32
    %c0_i32_1 = arith.constant 0 : i32
    return %arg0, %c0_i32, %c0_i32_0 : i32, i32, i32
  }
  func.func @transform_28(%arg0: i32) -> (i32, i32, i32) {
    %c0_i32 = arith.constant 0 : i32
    %c0_i32_0 = arith.constant 0 : i32
    %c0_i32_1 = arith.constant 0 : i32
    return %arg0, %c0_i32, %c0_i32_0 : i32, i32, i32
  }
  func.func @transform_29(%arg0: i32) -> (i32, i32, i32) {
    %c0_i32 = arith.constant 0 : i32
    %c0_i32_0 = arith.constant 0 : i32
    %c0_i32_1 = arith.constant 0 : i32
    return %arg0, %c0_i32, %c0_i32_0 : i32, i32, i32
  }
  func.func @transform_30(%arg0: i32) -> (i32, i32, i32) {
    %c0_i32 = arith.constant 0 : i32
    %c0_i32_0 = arith.constant 0 : i32
    %c0_i32_1 = arith.constant 0 : i32
    return %arg0, %c0_i32, %c0_i32_0 : i32, i32, i32
  }
  func.func @transform_31(%arg0: i32) -> (i32, i32, i32) {
    %c0_i32 = arith.constant 0 : i32
    %c0_i32_0 = arith.constant 0 : i32
    %c0_i32_1 = arith.constant 0 : i32
    return %arg0, %c0_i32, %c0_i32_0 : i32, i32, i32
  }
  func.func @transform_32(%arg0: i32) -> (i32, i32, i32) {
    %c0_i32 = arith.constant 0 : i32
    %c0_i32_0 = arith.constant 0 : i32
    %c0_i32_1 = arith.constant 0 : i32
    return %arg0, %c0_i32, %c0_i32_0 : i32, i32, i32
  }
  func.func @transform_33(%arg0: i32) -> (i32, i32, i32) {
    %c0_i32 = arith.constant 0 : i32
    %c0_i32_0 = arith.constant 0 : i32
    %c0_i32_1 = arith.constant 0 : i32
    return %arg0, %c0_i32, %c0_i32_0 : i32, i32, i32
  }
  func.func @transform_34(%arg0: i32) -> (i32, i32, i32) {
    %c0_i32 = arith.constant 0 : i32
    %c0_i32_0 = arith.constant 0 : i32
    %c0_i32_1 = arith.constant 0 : i32
    return %arg0, %c0_i32, %c0_i32_0 : i32, i32, i32
  }
  func.func @transform_35(%arg0: i32) -> (i32, i32, i32) {
    %c0_i32 = arith.constant 0 : i32
    %c0_i32_0 = arith.constant 0 : i32
    %c0_i32_1 = arith.constant 0 : i32
    return %arg0, %c0_i32, %c0_i32_0 : i32, i32, i32
  }
  func.func @transform_36(%arg0: i32) -> (i32, i32, i32) {
    %c0_i32 = arith.constant 0 : i32
    %c0_i32_0 = arith.constant 0 : i32
    %c0_i32_1 = arith.constant 0 : i32
    return %arg0, %c0_i32, %c0_i32_0 : i32, i32, i32
  }
  func.func @transform_37(%arg0: i32) -> (i32, i32, i32) {
    %c0_i32 = arith.constant 0 : i32
    %c0_i32_0 = arith.constant 0 : i32
    %c0_i32_1 = arith.constant 0 : i32
    return %arg0, %c0_i32, %c0_i32_0 : i32, i32, i32
  }
  func.func @transform_38(%arg0: i32) -> (i32, i32, i32) {
    %c0_i32 = arith.constant 0 : i32
    %c0_i32_0 = arith.constant 0 : i32
    %c0_i32_1 = arith.constant 0 : i32
    return %arg0, %c0_i32, %c0_i32_0 : i32, i32, i32
  }
  func.func @transform_39(%arg0: i32) -> (i32, i32, i32) {
    %c0_i32 = arith.constant 0 : i32
    %c0_i32_0 = arith.constant 0 : i32
    %c0_i32_1 = arith.constant 0 : i32
    return %arg0, %c0_i32, %c0_i32_0 : i32, i32, i32
  }
  func.func @transform_40(%arg0: i32) -> (i32, i32, i32) {
    %c0_i32 = arith.constant 0 : i32
    %c0_i32_0 = arith.constant 0 : i32
    %c0_i32_1 = arith.constant 0 : i32
    return %arg0, %c0_i32, %c0_i32_0 : i32, i32, i32
  }
  func.func @transform_41(%arg0: i32) -> (i32, i32, i32) {
    %c0_i32 = arith.constant 0 : i32
    %c0_i32_0 = arith.constant 0 : i32
    %c0_i32_1 = arith.constant 0 : i32
    return %arg0, %c0_i32, %c0_i32_0 : i32, i32, i32
  }
  func.func @transform_42(%arg0: i32) -> (i32, i32, i32) {
    %c0_i32 = arith.constant 0 : i32
    %c0_i32_0 = arith.constant 0 : i32
    %c0_i32_1 = arith.constant 0 : i32
    return %arg0, %c0_i32, %c0_i32_0 : i32, i32, i32
  }
  func.func @transform_43(%arg0: i32) -> (i32, i32, i32) {
    %c0_i32 = arith.constant 0 : i32
    %c0_i32_0 = arith.constant 0 : i32
    %c0_i32_1 = arith.constant 0 : i32
    return %arg0, %c0_i32, %c0_i32_0 : i32, i32, i32
  }
  func.func @transform_44(%arg0: i32) -> (i32, i32) {
    %c0_i32 = arith.constant 0 : i32
    %c0_i32_0 = arith.constant 0 : i32
    %c0_i32_1 = arith.constant 0 : i32
    return %c0_i32, %c0_i32_0 : i32, i32
  }
}

</mosaic_0001>

<llo_original>
// kernel: _forward_impl.1
$region0: #{_forward_impl.1}
  #allocation0 [shape = 'u32[]', space=smem, size = 0x4, offset = 0x4, fixed_abs, tag = 'smem constant byte address 0x4 - core index']
  #allocation1 [shape = 'u32[144,128]{1,0:T(1,128)}', space=vmem, size = 0x12000, scoped, tag = 'internal scratch']
  #allocation2 [shape = 'f32[8,128]{1,0:T(8,128)}', space=vmem, size = 0x1000, scoped, tag = 'scratch operand']
  %s0 = inlined_call_operand.smem [shape: u32[45], index: -1, kind: input, shape index: {}]
  %s1 = sld [smem:[%s0]]
  %s2 = scalar_lea.smem %s0, 1
  %s3 = sld [smem:[%s2]]
  %s4 = scalar_lea.smem %s0, 2
  %s5 = sld [smem:[%s4]]
  %s6 = scalar_lea.smem %s0, 3
  %s7 = sld [smem:[%s6]]
  %s8 = scalar_lea.smem %s0, 4
  %s9 = sld [smem:[%s8]]
  %s10 = scalar_lea.smem %s0, 5
  %s11 = sld [smem:[%s10]]
  %s12 = scalar_lea.smem %s0, 6
  %s13 = sld [smem:[%s12]]
  %s14 = scalar_lea.smem %s0, 7
  %s15 = sld [smem:[%s14]]
  %s16 = scalar_lea.smem %s0, 8
  %s17 = sld [smem:[%s16]]
  %s18 = scalar_lea.smem %s0, 9
  %s19 = sld [smem:[%s18]]
  %s20 = scalar_lea.smem %s0, 10
  %s21 = sld [smem:[%s20]]
  %s22 = scalar_lea.smem %s0, 11
  %s23 = sld [smem:[%s22]]
  %s24 = scalar_lea.smem %s0, 12
  %s25 = sld [smem:[%s24]]
  %s26 = scalar_lea.smem %s0, 13
  %s27 = sld [smem:[%s26]]
  %s28 = scalar_lea.smem %s0, 14
  %s29 = sld [smem:[%s28]]
  %s30 = scalar_lea.smem %s0, 15
  %s31 = sld [smem:[%s30]]
  %s32 = scalar_lea.smem %s0, 16
  %s33 = sld [smem:[%s32]]
  %s34 = scalar_lea.smem %s0, 17
  %s35 = sld [smem:[%s34]]
  %s36 = scalar_lea.smem %s0, 18
  %s37 = sld [smem:[%s36]]
  %s38 = scalar_lea.smem %s0, 19
  %s39 = sld [smem:[%s38]]
  %s40 = scalar_lea.smem %s0, 20
  %s41 = sld [smem:[%s40]]
  %s42 = scalar_lea.smem %s0, 21
  %s43 = sld [smem:[%s42]]
  %s44 = scalar_lea.smem %s0, 22
  %s45 = sld [smem:[%s44]]
  %s46 = scalar_lea.smem %s0, 23
  %s47 = sld [smem:[%s46]]
  %s48 = scalar_lea.smem %s0, 24
  %s49 = sld [smem:[%s48]]
  %s50 = scalar_lea.smem %s0, 25
  %s51 = sld [smem:[%s50]]
  %s52 = scalar_lea.smem %s0, 26
  %s53 = sld [smem:[%s52]]
  %s54 = scalar_lea.smem %s0, 27
  %s55 = sld [smem:[%s54]]
  %s56 = scalar_lea.smem %s0, 28
  %s57 = sld [smem:[%s56]]
  %s58 = scalar_lea.smem %s0, 29
  %s59 = sld [smem:[%s58]]
  %s60 = scalar_lea.smem %s0, 30
  %s61 = sld [smem:[%s60]]
  %s62 = scalar_lea.smem %s0, 31
  %s63 = sld [smem:[%s62]]
  %s64 = scalar_lea.smem %s0, 32
  %s65 = sld [smem:[%s64]]
  %s66 = scalar_lea.smem %s0, 33
  %s67 = sld [smem:[%s66]]
  %s68 = scalar_lea.smem %s0, 34
  %s69 = sld [smem:[%s68]]
  %s70 = scalar_lea.smem %s0, 35
  %s71 = sld [smem:[%s70]]
  %s72 = scalar_lea.smem %s0, 36
  %s73 = sld [smem:[%s72]]
  %s74 = scalar_lea.smem %s0, 37
  %s75 = sld [smem:[%s74]]
  %s76 = scalar_lea.smem %s0, 38
  %s77 = sld [smem:[%s76]]
  %s78 = scalar_lea.smem %s0, 39
  %s79 = sld [smem:[%s78]]
  %s80 = scalar_lea.smem %s0, 40
  %s81 = sld [smem:[%s80]]
  %s82 = scalar_lea.smem %s0, 41
  %s83 = sld [smem:[%s82]]
  %s84 = scalar_lea.smem %s0, 42
  %s85 = sld [smem:[%s84]]
  %s86 = scalar_lea.smem %s0, 43
  %s87 = sld [smem:[%s86]]
  %s88 = scalar_lea.smem %s0, 44
  %s89 = sld [smem:[%s88]]
  %s90 = sld [smem:[#allocation0]]
  $region297: #{_forward_impl.1} parent=0
    _
  %s92 = ssub.s32 1, %s90
  %s93 = scalar_select 0, %s92, %s90
  $region1: #{_forward_impl.1} parent=0
    #allocation3 [shape = 'u8[4096]{0}', space=vmem, size = 0x1000, scoped, tag = 'input window, operand 1, single buffered']
    #allocation4 [shape = 's32[2]{0}', space=sflag, size = 0x8, scoped, tag = 'scoped memory for _forward_impl.1']
    #allocation5 [shape = 'u8[32768]{0}', space=vmem, size = 0x8000, scoped, tag = 'input window, operand 4, single buffered']
    #allocation6 [shape = 's32[1]{0}', space=sflag, size = 0x4, scoped, tag = 'scoped memory for _forward_impl.1']
    #allocation7 [shape = 'u8[512]{0}', space=vmem, size = 0x400, scoped, tag = 'input window, operand 5, single buffered']
    #allocation8 [shape = 'u8[1024]{0}', space=vmem, size = 0x400, scoped, tag = 'input window, operand 6']
    #allocation9 [shape = 's32[2]{0}', space=sflag, size = 0x8, scoped, tag = 'scoped memory for _forward_impl.1']
    #allocation10 [shape = 'u8[65536]{0}', space=vmem, size = 0x10000, scoped, tag = 'input window, operand 7']
    #allocation11 [shape = 'u8[2048]{0}', space=vmem, size = 0x800, scoped, tag = 'input window, operand 8']
    #allocation12 [shape = 's32[2]{0}', space=sflag, size = 0x8, scoped, tag = 'scoped memory for _forward_impl.1']
    #allocation13 [shape = 'u8[131072]{0}', space=vmem, size = 0x20000, scoped, tag = 'input window, operand 9']
    #allocation14 [shape = 'u8[65536]{0}', space=vmem, size = 0x10000, scoped, tag = 'input window, operand 11']
    #allocation15 [shape = 's32[2]{0}', space=sflag, size = 0x8, scoped, tag = 'scoped memory for _forward_impl.1']
    #allocation16 [shape = 'u8[1024]{0}', space=vmem, size = 0x400, scoped, tag = 'input window, operand 12']
    #allocation17 [shape = 'u8[65536]{0}', space=vmem, size = 0x10000, scoped, tag = 'input window, operand 13']
    #allocation18 [shape = 's32[2]{0}', space=sflag, size = 0x8, scoped, tag = 'scoped memory for _forward_impl.1']
    #allocation19 [shape = 'u8[1024]{0}', space=vmem, size = 0x400, scoped, tag = 'input window, operand 14']
    #allocation20 [shape = 'u8[65536]{0}', space=vmem, size = 0x10000, scoped, tag = 'input window, operand 15']
    #allocation21 [shape = 's32[2]{0}', space=sflag, size = 0x8, scoped, tag = 'scoped memory for _forward_impl.1']
    #allocation22 [shape = 'u8[1024]{0}', space=vmem, size = 0x400, scoped, tag = 'input window, operand 16']
    #allocation23 [shape = 'u8[65536]{0}', space=vmem, size = 0x10000, scoped, tag = 'input window, operand 17']
    #allocation24 [shape = 's32[2]{0}', space=sflag, size = 0x8, scoped, tag = 'scoped memory for _forward_impl.1']
    #allocation25 [shape = 'u8[196608]{0}', space=vmem, size = 0x30000, scoped, tag = 'input window, operand 25']
    #allocation26 [shape = 'u8[65536]{0}', space=vmem, size = 0x10000, scoped, tag = 'input window, operand 27']
    #allocation27 [shape = 's32[2]{0}', space=sflag, size = 0x8, scoped, tag = 'scoped memory for _forward_impl.1']
    #allocation28 [shape = 'u8[65536]{0}', space=vmem, size = 0x10000, scoped, tag = 'input window, operand 31']
    #allocation29 [shape = 'u8[65536]{0}', space=vmem, size = 0x10000, scoped, tag = 'input window, operand 33']
    #allocation30 [shape = 's32[2]{0}', space=sflag, size = 0x8, scoped, tag = 'scoped memory for _forward_impl.1']
    #allocation31 [shape = 'u8[196608]{0}', space=vmem, size = 0x30000, scoped, tag = 'input window, operand 35']
    #allocation32 [shape = 'u8[65536]{0}', space=vmem, size = 0x10000, scoped, tag = 'input window, operand 41']
    #allocation33 [shape = 's32[2]{0}', space=sflag, size = 0x8, scoped, tag = 'scoped memory for _forward_impl.1']
    %94 = vsyncpa [#allocation4], 0
    %95 = vsyncpa [#allocation6], 0
    %96 = vsyncpa [#allocation9], 0
    %s97 = scalar_lea.sflag [#allocation9], 1
    %98 = vsyncpa %s97, 0
    %99 = vsyncpa [#allocation12], 0
    %s100 = scalar_lea.sflag [#allocation12], 1
    %101 = vsyncpa %s100, 0
    %102 = vsyncpa [#allocation15], 0
    %s103 = scalar_lea.sflag [#allocation15], 1
    %104 = vsyncpa %s103, 0
    %105 = vsyncpa [#allocation18], 0
    %s106 = scalar_lea.sflag [#allocation18], 1
    %107 = vsyncpa %s106, 0
    %108 = vsyncpa [#allocation21], 0
    %s109 = scalar_lea.sflag [#allocation21], 1
    %110 = vsyncpa %s109, 0
    %111 = vsyncpa [#allocation24], 0
    %s112 = scalar_lea.sflag [#allocation24], 1
    %113 = vsyncpa %s112, 0
    %114 = vsyncpa [#allocation27], 0
    %s115 = scalar_lea.sflag [#allocation27], 1
    %116 = vsyncpa %s115, 0
    %117 = vsyncpa [#allocation30], 0
    %s118 = scalar_lea.sflag [#allocation30], 1
    %119 = vsyncpa %s118, 0
    %120 = vsyncpa [#allocation33], 0
    %s121 = scalar_lea.sflag [#allocation33], 1
    %122 = vsyncpa %s121, 0
    loop: start=0, step=1, limit=5
    $region2: #{_forward_impl.1} parent=1 // loop_pre_header
      _
    $region3: #{_forward_impl.1} parent=1 // loop_header
      %s124 = sphi 0, %s128
      %p125 = scmp.ge.s32.totalorder %s124, 5
      %s132 = sphi 0, %s132
      %s134 = sphi 0, %s132
      %s135 = sphi 0, %s134
      %s149 = sphi 0, %s135
      %s153 = sphi 0, %s153
      %s155 = sphi 0, %s153
      %s156 = sphi 0, %s155
      %s170 = sphi 0, %s156
      %s174 = sphi 0, %s174
      %s176 = sphi 0, %s174
      %s177 = sphi 0, %s176
      %s191 = sphi 0, %s177
      %s195 = sphi 0, %s195
      %s197 = sphi 0, %s195
      %s198 = sphi 0, %s197
      %s212 = sphi 0, %s198
      %s216 = sphi 0, %s216
      %s218 = sphi 0, %s216
      %s219 = sphi 0, %s218
      %s233 = sphi 0, %s219
      %s237 = sphi 0, %s237
      %s239 = sphi 0, %s237
      %s240 = sphi 0, %s239
      %s254 = sphi 0, %s240
      %s260 = sphi 0, %s262
      %s263 = sphi 0, %s260
      %s264 = sphi 0, %s263
      %s280 = sphi 0, %s264
      %s286 = sphi 0, %s288
      %s289 = sphi 0, %s286
      %s290 = sphi 0, %s289
      %s306 = sphi 0, %s290
      %s312 = sphi 0, %s314
      %s315 = sphi 0, %s312
      %s316 = sphi 0, %s315
      %s332 = sphi 0, %s316
      %s338 = sphi 0, %s340
      %s341 = sphi 0, %s338
      %s342 = sphi 0, %s341
      %s358 = sphi 0, %s342
      %s364 = sphi 0, %s366
      %s367 = sphi 0, %s364
      %s368 = sphi 0, %s367
      %s384 = sphi 0, %s368
      %s390 = sphi 0, %s392
      %s393 = sphi 0, %s390
      %s394 = sphi 0, %s393
      %s410 = sphi 0, %s394
      %s416 = sphi 0, %s418
      %s419 = sphi 0, %s416
      %s420 = sphi 0, %s419
      %s436 = sphi 0, %s420
      %s442 = sphi 0, %s444
      %s445 = sphi 0, %s442
      %s446 = sphi 0, %s445
      %s462 = sphi 0, %s446
      %s468 = sphi 0, %s470
      %s471 = sphi 0, %s468
      %s472 = sphi 0, %s471
      %s488 = sphi 0, %s472
      %s494 = sphi 0, %s496
      %s497 = sphi 0, %s494
      %s498 = sphi 0, %s497
      %s514 = sphi 0, %s498
      %s520 = sphi 0, %s522
      %s523 = sphi 0, %s520
      %s524 = sphi 0, %s523
      %s540 = sphi 0, %s524
      %s546 = sphi 0, %s548
      %s549 = sphi 0, %s546
      %s550 = sphi 0, %s549
      %s566 = sphi 0, %s550
      %s572 = sphi 0, %s574
      %s575 = sphi 0, %s572
      %s576 = sphi 0, %s575
      %s592 = sphi 0, %s576
      %s598 = sphi 0, %s600
      %s601 = sphi 0, %s598
      %s602 = sphi 0, %s601
      %s618 = sphi 0, %s602
      %s624 = sphi 0, %s626
      %s627 = sphi 0, %s624
      %s628 = sphi 0, %s627
      %s644 = sphi 0, %s628
      %s650 = sphi 0, %s652
      %s653 = sphi 0, %s650
      %s654 = sphi 0, %s653
      %s670 = sphi 0, %s654
      %s676 = sphi 0, %s678
      %s679 = sphi 0, %s676
      %s680 = sphi 0, %s679
      %s696 = sphi 0, %s680
      %s702 = sphi 0, %s704
      %s705 = sphi 0, %s702
      %s706 = sphi 0, %s705
      %s722 = sphi 0, %s706
      %s728 = sphi 0, %s730
      %s731 = sphi 0, %s728
      %s732 = sphi 0, %s731
      %s748 = sphi 0, %s732
      %s754 = sphi 0, %s756
      %s757 = sphi 0, %s754
      %s758 = sphi 0, %s757
      %s774 = sphi 0, %s758
      %s780 = sphi 0, %s782
      %s783 = sphi 0, %s780
      %s784 = sphi 0, %s783
      %s800 = sphi 0, %s784
      %s806 = sphi 0, %s808
      %s809 = sphi 0, %s806
      %s810 = sphi 0, %s809
      %s826 = sphi 0, %s810
      %s832 = sphi 0, %s834
      %s835 = sphi 0, %s832
      %s836 = sphi 0, %s835
      %s852 = sphi 0, %s836
      %s858 = sphi 0, %s860
      %s861 = sphi 0, %s858
      %s862 = sphi 0, %s861
      %s878 = sphi 0, %s862
      %s884 = sphi 0, %s886
      %s887 = sphi 0, %s884
      %s888 = sphi 0, %s887
      %s904 = sphi 0, %s888
      %s910 = sphi 0, %s912
      %s913 = sphi 0, %s910
      %s914 = sphi 0, %s913
      %s930 = sphi 0, %s914
      %s936 = sphi 0, %s938
      %s939 = sphi 0, %s936
      %s940 = sphi 0, %s939
      %s956 = sphi 0, %s940
      %s962 = sphi 0, %s964
      %s965 = sphi 0, %s962
      %s966 = sphi 0, %s965
      %s982 = sphi 0, %s966
      %s988 = sphi 0, %s990
      %s991 = sphi 0, %s988
      %s992 = sphi 0, %s991
      %s1008 = sphi 0, %s992
      %s1014 = sphi 0, %s1016
      %s1017 = sphi 0, %s1014
      %s1018 = sphi 0, %s1017
      %s1034 = sphi 0, %s1018
      %s1040 = sphi 0, %s1042
      %s1043 = sphi 0, %s1040
      %s1044 = sphi 0, %s1043
      %s1060 = sphi 0, %s1044
      %s1066 = sphi 0, %s1068
      %s1069 = sphi 0, %s1066
      %s1070 = sphi 0, %s1069
      %s1086 = sphi 0, %s1070
      %s1092 = sphi 0, %s1094
      %s1095 = sphi 0, %s1092
      %s1096 = sphi 0, %s1095
      %s1112 = sphi 0, %s1096
      %s1118 = sphi 0, %s1120
      %s1121 = sphi 0, %s1118
      %s1122 = sphi 0, %s1121
      %s1138 = sphi 0, %s1122
      %s1144 = sphi 0, %s1146
      %s1147 = sphi 0, %s1144
      %s1148 = sphi 0, %s1147
      %s1164 = sphi 0, %s1148
      %s1170 = sphi 0, %s1172
      %s1173 = sphi 0, %s1170
      %s1174 = sphi 0, %s1173
      %s1190 = sphi 0, %s1174
      %s1196 = sphi 0, %s1198
      %s1199 = sphi 0, %s1196
      %s1200 = sphi 0, %s1199
      %s1216 = sphi 0, %s1200
      %s1222 = sphi 0, %s1224
      %s1225 = sphi 0, %s1222
      %s1226 = sphi 0, %s1225
      %s1242 = sphi 0, %s1226
      %s1246 = sphi 0, %s1246
      %s1248 = sphi 0, %s1246
      %s1249 = sphi 0, %s1248
      %s1263 = sphi 0, %s1249
    $region4: #{_forward_impl.1} parent=1 // loop_header_branch
      %127 = sbr.rel (%p125) target = $region8
    $region5: #{_forward_impl.1} parent=1 // loop_body
      %s129 = ssub.s32 %s124, 1
      %s130 = ssub.s32 %s124, 2
      %s131 = sadd.s32 %s124, 1
      %s133 = sadd.s32 %s132, 1
      %p136 = scmp.eq.s32.totalorder %s124, 2
      %p137 = scmp.ne.s32.totalorder %s132, %s134
      %p138 = scmp.eq.s32.totalorder %s124, 0
      %p139 = por %p137, %p138
      %p140 = scmp.ne.s32.totalorder %s132, %s134
      %p141 = scmp.eq.s32.totalorder %s129, 2
      %p142 = por %p140, %p141
      %p143 = scmp.ne.s32.totalorder %s134, %s135
      %p144 = scmp.eq.s32.totalorder %s129, 0
      %p145 = por %p143, %p144
      %p146 = scmp.ne.s32.totalorder %s134, %s135
      %p147 = scmp.eq.s32.totalorder %s130, 2
      %p148 = por %p146, %p147
      %p150 = scmp.ne.s32.totalorder %s135, %s149
      %p151 = scmp.eq.s32.totalorder %s130, 0
      %p152 = por %p150, %p151
      %s154 = sadd.s32 %s153, 1
      %p157 = scmp.eq.s32.totalorder %s124, 2
      %p158 = scmp.ne.s32.totalorder %s153, %s155
      %p159 = scmp.eq.s32.totalorder %s124, 0
      %p160 = por %p158, %p159
      %p161 = scmp.ne.s32.totalorder %s153, %s155
      %p162 = scmp.eq.s32.totalorder %s129, 2
      %p163 = por %p161, %p162
      %p164 = scmp.ne.s32.totalorder %s155, %s156
      %p165 = scmp.eq.s32.totalorder %s129, 0
      %p166 = por %p164, %p165
      %p167 = scmp.ne.s32.totalorder %s155, %s156
      %p168 = scmp.eq.s32.totalorder %s130, 2
      %p169 = por %p167, %p168
      %p171 = scmp.ne.s32.totalorder %s156, %s170
      %p172 = scmp.eq.s32.totalorder %s130, 0
      %p173 = por %p171, %p172
      %s175 = sadd.s32 %s174, 1
      %p178 = scmp.eq.s32.totalorder %s124, 2
      %p179 = scmp.ne.s32.totalorder %s174, %s176
      %p180 = scmp.eq.s32.totalorder %s124, 0
      %p181 = por %p179, %p180
      %p182 = scmp.ne.s32.totalorder %s174, %s176
      %p183 = scmp.eq.s32.totalorder %s129, 2
      %p184 = por %p182, %p183
      %p185 = scmp.ne.s32.totalorder %s176, %s177
      %p186 = scmp.eq.s32.totalorder %s129, 0
      %p187 = por %p185, %p186
      %p188 = scmp.ne.s32.totalorder %s176, %s177
      %p189 = scmp.eq.s32.totalorder %s130, 2
      %p190 = por %p188, %p189
      %p192 = scmp.ne.s32.totalorder %s177, %s191
      %p193 = scmp.eq.s32.totalorder %s130, 0
      %p194 = por %p192, %p193
      %s196 = sadd.s32 %s195, 1
      %p199 = scmp.eq.s32.totalorder %s124, 2
      %p200 = scmp.ne.s32.totalorder %s195, %s197
      %p201 = scmp.eq.s32.totalorder %s124, 0
      %p202 = por %p200, %p201
      %p203 = scmp.ne.s32.totalorder %s195, %s197
      %p204 = scmp.eq.s32.totalorder %s129, 2
      %p205 = por %p203, %p204
      %p206 = scmp.ne.s32.totalorder %s197, %s198
      %p207 = scmp.eq.s32.totalorder %s129, 0
      %p208 = por %p206, %p207
      %p209 = scmp.ne.s32.totalorder %s197, %s198
      %p210 = scmp.eq.s32.totalorder %s130, 2
      %p211 = por %p209, %p210
      %p213 = scmp.ne.s32.totalorder %s198, %s212
      %p214 = scmp.eq.s32.totalorder %s130, 0
      %p215 = por %p213, %p214
      %s217 = sadd.s32 %s216, 1
      %p220 = scmp.eq.s32.totalorder %s124, 2
      %p221 = scmp.ne.s32.totalorder %s216, %s218
      %p222 = scmp.eq.s32.totalorder %s124, 0
      %p223 = por %p221, %p222
      %p224 = scmp.ne.s32.totalorder %s216, %s218
      %p225 = scmp.eq.s32.totalorder %s129, 2
      %p226 = por %p224, %p225
      %p227 = scmp.ne.s32.totalorder %s218, %s219
      %p228 = scmp.eq.s32.totalorder %s129, 0
      %p229 = por %p227, %p228
      %p230 = scmp.ne.s32.totalorder %s218, %s219
      %p231 = scmp.eq.s32.totalorder %s130, 2
      %p232 = por %p230, %p231
      %p234 = scmp.ne.s32.totalorder %s219, %s233
      %p235 = scmp.eq.s32.totalorder %s130, 0
      %p236 = por %p234, %p235
      %s238 = sadd.s32 %s237, 1
      %p241 = scmp.eq.s32.totalorder %s124, 2
      %p242 = scmp.ne.s32.totalorder %s237, %s239
      %p243 = scmp.eq.s32.totalorder %s124, 0
      %p244 = por %p242, %p243
      %p245 = scmp.ne.s32.totalorder %s237, %s239
      %p246 = scmp.eq.s32.totalorder %s129, 2
      %p247 = por %p245, %p246
      %p248 = scmp.ne.s32.totalorder %s239, %s240
      %p249 = scmp.eq.s32.totalorder %s129, 0
      %p250 = por %p248, %p249
      %p251 = scmp.ne.s32.totalorder %s239, %s240
      %p252 = scmp.eq.s32.totalorder %s130, 2
      %p253 = por %p251, %p252
      %p255 = scmp.ne.s32.totalorder %s240, %s254
      %p256 = scmp.eq.s32.totalorder %s130, 0
      %p257 = por %p255, %p256
      %s258 = ssub.s32 %s124, %s131
      %p259 = scmp.eq.s32.totalorder %s258, 0
      %s261 = sadd.s32 %s260, 1
      %s262 = scalar_select %p259, %s260, %s261
      %p265 = pneg %p259
      %p266 = scmp.eq.s32.totalorder %s124, 2
      %p267 = por %p265, %p266
      %p268 = scmp.ne.s32.totalorder %s260, %s263
      %p269 = scmp.eq.s32.totalorder %s124, 0
      %p270 = por %p268, %p269
      %p271 = scmp.ne.s32.totalorder %s260, %s263
      %p272 = scmp.eq.s32.totalorder %s129, 2
      %p273 = por %p271, %p272
      %p274 = scmp.ne.s32.totalorder %s263, %s264
      %p275 = scmp.eq.s32.totalorder %s129, 0
      %p276 = por %p274, %p275
      %p277 = scmp.ne.s32.totalorder %s263, %s264
      %p278 = scmp.eq.s32.totalorder %s130, 2
      %p279 = por %p277, %p278
      %p281 = scmp.ne.s32.totalorder %s264, %s280
      %p282 = scmp.eq.s32.totalorder %s130, 0
      %p283 = por %p281, %p282
      %s284 = ssub.s32 %s124, %s131
      %p285 = scmp.eq.s32.totalorder %s284, 0
      %s287 = sadd.s32 %s286, 1
      %s288 = scalar_select %p285, %s286, %s287
      %p291 = pneg %p285
      %p292 = scmp.eq.s32.totalorder %s124, 2
      %p293 = por %p291, %p292
      %p294 = scmp.ne.s32.totalorder %s286, %s289
      %p295 = scmp.eq.s32.totalorder %s124, 0
      %p296 = por %p294, %p295
      %p297 = scmp.ne.s32.totalorder %s286, %s289
      %p298 = scmp.eq.s32.totalorder %s129, 2
      %p299 = por %p297, %p298
      %p300 = scmp.ne.s32.totalorder %s289, %s290
      %p301 = scmp.eq.s32.totalorder %s129, 0
      %p302 = por %p300, %p301
      %p303 = scmp.ne.s32.totalorder %s289, %s290
      %p304 = scmp.eq.s32.totalorder %s130, 2
      %p305 = por %p303, %p304
      %p307 = scmp.ne.s32.totalorder %s290, %s306
      %p308 = scmp.eq.s32.totalorder %s130, 0
      %p309 = por %p307, %p308
      %s310 = ssub.s32 %s124, %s131
      %p311 = scmp.eq.s32.totalorder %s310, 0
      %s313 = sadd.s32 %s312, 1
      %s314 = scalar_select %p311, %s312, %s313
      %p317 = pneg %p311
      %p318 = scmp.eq.s32.totalorder %s124, 2
      %p319 = por %p317, %p318
      %p320 = scmp.ne.s32.totalorder %s312, %s315
      %p321 = scmp.eq.s32.totalorder %s124, 0
      %p322 = por %p320, %p321
      %p323 = scmp.ne.s32.totalorder %s312, %s315
      %p324 = scmp.eq.s32.totalorder %s129, 2
      %p325 = por %p323, %p324
      %p326 = scmp.ne.s32.totalorder %s315, %s316
      %p327 = scmp.eq.s32.totalorder %s129, 0
      %p328 = por %p326, %p327
      %p329 = scmp.ne.s32.totalorder %s315, %s316
      %p330 = scmp.eq.s32.totalorder %s130, 2
      %p331 = por %p329, %p330
      %p333 = scmp.ne.s32.totalorder %s316, %s332
      %p334 = scmp.eq.s32.totalorder %s130, 0
      %p335 = por %p333, %p334
      %s336 = ssub.s32 %s124, %s131
      %p337 = scmp.eq.s32.totalorder %s336, 0
      %s339 = sadd.s32 %s338, 1
      %s340 = scalar_select %p337, %s338, %s339
      %p343 = pneg %p337
      %p344 = scmp.eq.s32.totalorder %s124, 2
      %p345 = por %p343, %p344
      %p346 = scmp.ne.s32.totalorder %s338, %s341
      %p347 = scmp.eq.s32.totalorder %s124, 0
      %p348 = por %p346, %p347
      %p349 = scmp.ne.s32.totalorder %s338, %s341
      %p350 = scmp.eq.s32.totalorder %s129, 2
      %p351 = por %p349, %p350
      %p352 = scmp.ne.s32.totalorder %s341, %s342
      %p353 = scmp.eq.s32.totalorder %s129, 0
      %p354 = por %p352, %p353
      %p355 = scmp.ne.s32.totalorder %s341, %s342
      %p356 = scmp.eq.s32.totalorder %s130, 2
      %p357 = por %p355, %p356
      %p359 = scmp.ne.s32.totalorder %s342, %s358
      %p360 = scmp.eq.s32.totalorder %s130, 0
      %p361 = por %p359, %p360
      %s362 = ssub.s32 %s124, %s131
      %p363 = scmp.eq.s32.totalorder %s362, 0
      %s365 = sadd.s32 %s364, 1
      %s366 = scalar_select %p363, %s364, %s365
      %p369 = pneg %p363
      %p370 = scmp.eq.s32.totalorder %s124, 2
      %p371 = por %p369, %p370
      %p372 = scmp.ne.s32.totalorder %s364, %s367
      %p373 = scmp.eq.s32.totalorder %s124, 0
      %p374 = por %p372, %p373
      %p375 = scmp.ne.s32.totalorder %s364, %s367
      %p376 = scmp.eq.s32.totalorder %s129, 2
      %p377 = por %p375, %p376
      %p378 = scmp.ne.s32.totalorder %s367, %s368
      %p379 = scmp.eq.s32.totalorder %s129, 0
      %p380 = por %p378, %p379
      %p381 = scmp.ne.s32.totalorder %s367, %s368
      %p382 = scmp.eq.s32.totalorder %s130, 2
      %p383 = por %p381, %p382
      %p385 = scmp.ne.s32.totalorder %s368, %s384
      %p386 = scmp.eq.s32.totalorder %s130, 0
      %p387 = por %p385, %p386
      %s388 = ssub.s32 %s124, %s131
      %p389 = scmp.eq.s32.totalorder %s388, 0
      %s391 = sadd.s32 %s390, 1
      %s392 = scalar_select %p389, %s390, %s391
      %p395 = pneg %p389
      %p396 = scmp.eq.s32.totalorder %s124, 2
      %p397 = por %p395, %p396
      %p398 = scmp.ne.s32.totalorder %s390, %s393
      %p399 = scmp.eq.s32.totalorder %s124, 0
      %p400 = por %p398, %p399
      %p401 = scmp.ne.s32.totalorder %s390, %s393
      %p402 = scmp.eq.s32.totalorder %s129, 2
      %p403 = por %p401, %p402
      %p404 = scmp.ne.s32.totalorder %s393, %s394
      %p405 = scmp.eq.s32.totalorder %s129, 0
      %p406 = por %p404, %p405
      %p407 = scmp.ne.s32.totalorder %s393, %s394
      %p408 = scmp.eq.s32.totalorder %s130, 2
      %p409 = por %p407, %p408
      %p411 = scmp.ne.s32.totalorder %s394, %s410
      %p412 = scmp.eq.s32.totalorder %s130, 0
      %p413 = por %p411, %p412
      %s414 = ssub.s32 %s124, %s131
      %p415 = scmp.eq.s32.totalorder %s414, 0
      %s417 = sadd.s32 %s416, 1
      %s418 = scalar_select %p415, %s416, %s417
      %p421 = pneg %p415
      %p422 = scmp.eq.s32.totalorder %s124, 2
      %p423 = por %p421, %p422
      %p424 = scmp.ne.s32.totalorder %s416, %s419
      %p425 = scmp.eq.s32.totalorder %s124, 0
      %p426 = por %p424, %p425
      %p427 = scmp.ne.s32.totalorder %s416, %s419
      %p428 = scmp.eq.s32.totalorder %s129, 2
      %p429 = por %p427, %p428
      %p430 = scmp.ne.s32.totalorder %s419, %s420
      %p431 = scmp.eq.s32.totalorder %s129, 0
      %p432 = por %p430, %p431
      %p433 = scmp.ne.s32.totalorder %s419, %s420
      %p434 = scmp.eq.s32.totalorder %s130, 2
      %p435 = por %p433, %p434
      %p437 = scmp.ne.s32.totalorder %s420, %s436
      %p438 = scmp.eq.s32.totalorder %s130, 0
      %p439 = por %p437, %p438
      %s440 = ssub.s32 %s124, %s131
      %p441 = scmp.eq.s32.totalorder %s440, 0
      %s443 = sadd.s32 %s442, 1
      %s444 = scalar_select %p441, %s442, %s443
      %p447 = pneg %p441
      %p448 = scmp.eq.s32.totalorder %s124, 2
      %p449 = por %p447, %p448
      %p450 = scmp.ne.s32.totalorder %s442, %s445
      %p451 = scmp.eq.s32.totalorder %s124, 0
      %p452 = por %p450, %p451
      %p453 = scmp.ne.s32.totalorder %s442, %s445
      %p454 = scmp.eq.s32.totalorder %s129, 2
      %p455 = por %p453, %p454
      %p456 = scmp.ne.s32.totalorder %s445, %s446
      %p457 = scmp.eq.s32.totalorder %s129, 0
      %p458 = por %p456, %p457
      %p459 = scmp.ne.s32.totalorder %s445, %s446
      %p460 = scmp.eq.s32.totalorder %s130, 2
      %p461 = por %p459, %p460
      %p463 = scmp.ne.s32.totalorder %s446, %s462
      %p464 = scmp.eq.s32.totalorder %s130, 0
      %p465 = por %p463, %p464
      %s466 = ssub.s32 %s124, %s131
      %p467 = scmp.eq.s32.totalorder %s466, 0
      %s469 = sadd.s32 %s468, 1
      %s470 = scalar_select %p467, %s468, %s469
      %p473 = pneg %p467
      %p474 = scmp.eq.s32.totalorder %s124, 2
      %p475 = por %p473, %p474
      %p476 = scmp.ne.s32.totalorder %s468, %s471
      %p477 = scmp.eq.s32.totalorder %s124, 0
      %p478 = por %p476, %p477
      %p479 = scmp.ne.s32.totalorder %s468, %s471
      %p480 = scmp.eq.s32.totalorder %s129, 2
      %p481 = por %p479, %p480
      %p482 = scmp.ne.s32.totalorder %s471, %s472
      %p483 = scmp.eq.s32.totalorder %s129, 0
      %p484 = por %p482, %p483
      %p485 = scmp.ne.s32.totalorder %s471, %s472
      %p486 = scmp.eq.s32.totalorder %s130, 2
      %p487 = por %p485, %p486
      %p489 = scmp.ne.s32.totalorder %s472, %s488
      %p490 = scmp.eq.s32.totalorder %s130, 0
      %p491 = por %p489, %p490
      %s492 = ssub.s32 %s124, %s131
      %p493 = scmp.eq.s32.totalorder %s492, 0
      %s495 = sadd.s32 %s494, 1
      %s496 = scalar_select %p493, %s494, %s495
      %p499 = pneg %p493
      %p500 = scmp.eq.s32.totalorder %s124, 2
      %p501 = por %p499, %p500
      %p502 = scmp.ne.s32.totalorder %s494, %s497
      %p503 = scmp.eq.s32.totalorder %s124, 0
      %p504 = por %p502, %p503
      %p505 = scmp.ne.s32.totalorder %s494, %s497
      %p506 = scmp.eq.s32.totalorder %s129, 2
      %p507 = por %p505, %p506
      %p508 = scmp.ne.s32.totalorder %s497, %s498
      %p509 = scmp.eq.s32.totalorder %s129, 0
      %p510 = por %p508, %p509
      %p511 = scmp.ne.s32.totalorder %s497, %s498
      %p512 = scmp.eq.s32.totalorder %s130, 2
      %p513 = por %p511, %p512
      %p515 = scmp.ne.s32.totalorder %s498, %s514
      %p516 = scmp.eq.s32.totalorder %s130, 0
      %p517 = por %p515, %p516
      %s518 = ssub.s32 %s124, %s131
      %p519 = scmp.eq.s32.totalorder %s518, 0
      %s521 = sadd.s32 %s520, 1
      %s522 = scalar_select %p519, %s520, %s521
      %p525 = pneg %p519
      %p526 = scmp.eq.s32.totalorder %s124, 2
      %p527 = por %p525, %p526
      %p528 = scmp.ne.s32.totalorder %s520, %s523
      %p529 = scmp.eq.s32.totalorder %s124, 0
      %p530 = por %p528, %p529
      %p531 = scmp.ne.s32.totalorder %s520, %s523
      %p532 = scmp.eq.s32.totalorder %s129, 2
      %p533 = por %p531, %p532
      %p534 = scmp.ne.s32.totalorder %s523, %s524
      %p535 = scmp.eq.s32.totalorder %s129, 0
      %p536 = por %p534, %p535
      %p537 = scmp.ne.s32.totalorder %s523, %s524
      %p538 = scmp.eq.s32.totalorder %s130, 2
      %p539 = por %p537, %p538
      %p541 = scmp.ne.s32.totalorder %s524, %s540
      %p542 = scmp.eq.s32.totalorder %s130, 0
      %p543 = por %p541, %p542
      %s544 = ssub.s32 %s124, %s131
      %p545 = scmp.eq.s32.totalorder %s544, 0
      %s547 = sadd.s32 %s546, 1
      %s548 = scalar_select %p545, %s546, %s547
      %p551 = pneg %p545
      %p552 = scmp.eq.s32.totalorder %s124, 2
      %p553 = por %p551, %p552
      %p554 = scmp.ne.s32.totalorder %s546, %s549
      %p555 = scmp.eq.s32.totalorder %s124, 0
      %p556 = por %p554, %p555
      %p557 = scmp.ne.s32.totalorder %s546, %s549
      %p558 = scmp.eq.s32.totalorder %s129, 2
      %p559 = por %p557, %p558
      %p560 = scmp.ne.s32.totalorder %s549, %s550
      %p561 = scmp.eq.s32.totalorder %s129, 0
      %p562 = por %p560, %p561
      %p563 = scmp.ne.s32.totalorder %s549, %s550
      %p564 = scmp.eq.s32.totalorder %s130, 2
      %p565 = por %p563, %p564
      %p567 = scmp.ne.s32.totalorder %s550, %s566
      %p568 = scmp.eq.s32.totalorder %s130, 0
      %p569 = por %p567, %p568
      %s570 = ssub.s32 %s124, %s131
      %p571 = scmp.eq.s32.totalorder %s570, 0
      %s573 = sadd.s32 %s572, 1
      %s574 = scalar_select %p571, %s572, %s573
      %p577 = pneg %p571
      %p578 = scmp.eq.s32.totalorder %s124, 2
      %p579 = por %p577, %p578
      %p580 = scmp.ne.s32.totalorder %s572, %s575
      %p581 = scmp.eq.s32.totalorder %s124, 0
      %p582 = por %p580, %p581
      %p583 = scmp.ne.s32.totalorder %s572, %s575
      %p584 = scmp.eq.s32.totalorder %s129, 2
      %p585 = por %p583, %p584
      %p586 = scmp.ne.s32.totalorder %s575, %s576
      %p587 = scmp.eq.s32.totalorder %s129, 0
      %p588 = por %p586, %p587
      %p589 = scmp.ne.s32.totalorder %s575, %s576
      %p590 = scmp.eq.s32.totalorder %s130, 2
      %p591 = por %p589, %p590
      %p593 = scmp.ne.s32.totalorder %s576, %s592
      %p594 = scmp.eq.s32.totalorder %s130, 0
      %p595 = por %p593, %p594
      %s596 = ssub.s32 %s124, %s131
      %p597 = scmp.eq.s32.totalorder %s596, 0
      %s599 = sadd.s32 %s598, 1
      %s600 = scalar_select %p597, %s598, %s599
      %p603 = pneg %p597
      %p604 = scmp.eq.s32.totalorder %s124, 2
      %p605 = por %p603, %p604
      %p606 = scmp.ne.s32.totalorder %s598, %s601
      %p607 = scmp.eq.s32.totalorder %s124, 0
      %p608 = por %p606, %p607
      %p609 = scmp.ne.s32.totalorder %s598, %s601
      %p610 = scmp.eq.s32.totalorder %s129, 2
      %p611 = por %p609, %p610
      %p612 = scmp.ne.s32.totalorder %s601, %s602
      %p613 = scmp.eq.s32.totalorder %s129, 0
      %p614 = por %p612, %p613
      %p615 = scmp.ne.s32.totalorder %s601, %s602
      %p616 = scmp.eq.s32.totalorder %s130, 2
      %p617 = por %p615, %p616
      %p619 = scmp.ne.s32.totalorder %s602, %s618
      %p620 = scmp.eq.s32.totalorder %s130, 0
      %p621 = por %p619, %p620
      %s622 = ssub.s32 %s124, %s131
      %p623 = scmp.eq.s32.totalorder %s622, 0
      %s625 = sadd.s32 %s624, 1
      %s626 = scalar_select %p623, %s624, %s625
      %p629 = pneg %p623
      %p630 = scmp.eq.s32.totalorder %s124, 2
      %p631 = por %p629, %p630
      %p632 = scmp.ne.s32.totalorder %s624, %s627
      %p633 = scmp.eq.s32.totalorder %s124, 0
      %p634 = por %p632, %p633
      %p635 = scmp.ne.s32.totalorder %s624, %s627
      %p636 = scmp.eq.s32.totalorder %s129, 2
      %p637 = por %p635, %p636
      %p638 = scmp.ne.s32.totalorder %s627, %s628
      %p639 = scmp.eq.s32.totalorder %s129, 0
      %p640 = por %p638, %p639
      %p641 = scmp.ne.s32.totalorder %s627, %s628
      %p642 = scmp.eq.s32.totalorder %s130, 2
      %p643 = por %p641, %p642
      %p645 = scmp.ne.s32.totalorder %s628, %s644
      %p646 = scmp.eq.s32.totalorder %s130, 0
      %p647 = por %p645, %p646
      %s648 = ssub.s32 %s124, %s131
      %p649 = scmp.eq.s32.totalorder %s648, 0
      %s651 = sadd.s32 %s650, 1
      %s652 = scalar_select %p649, %s650, %s651
      %p655 = pneg %p649
      %p656 = scmp.eq.s32.totalorder %s124, 2
      %p657 = por %p655, %p656
      %p658 = scmp.ne.s32.totalorder %s650, %s653
      %p659 = scmp.eq.s32.totalorder %s124, 0
      %p660 = por %p658, %p659
      %p661 = scmp.ne.s32.totalorder %s650, %s653
      %p662 = scmp.eq.s32.totalorder %s129, 2
      %p663 = por %p661, %p662
      %p664 = scmp.ne.s32.totalorder %s653, %s654
      %p665 = scmp.eq.s32.totalorder %s129, 0
      %p666 = por %p664, %p665
      %p667 = scmp.ne.s32.totalorder %s653, %s654
      %p668 = scmp.eq.s32.totalorder %s130, 2
      %p669 = por %p667, %p668
      %p671 = scmp.ne.s32.totalorder %s654, %s670
      %p672 = scmp.eq.s32.totalorder %s130, 0
      %p673 = por %p671, %p672
      %s674 = ssub.s32 %s124, %s131
      %p675 = scmp.eq.s32.totalorder %s674, 0
      %s677 = sadd.s32 %s676, 1
      %s678 = scalar_select %p675, %s676, %s677
      %p681 = pneg %p675
      %p682 = scmp.eq.s32.totalorder %s124, 2
      %p683 = por %p681, %p682
      %p684 = scmp.ne.s32.totalorder %s676, %s679
      %p685 = scmp.eq.s32.totalorder %s124, 0
      %p686 = por %p684, %p685
      %p687 = scmp.ne.s32.totalorder %s676, %s679
      %p688 = scmp.eq.s32.totalorder %s129, 2
      %p689 = por %p687, %p688
      %p690 = scmp.ne.s32.totalorder %s679, %s680
      %p691 = scmp.eq.s32.totalorder %s129, 0
      %p692 = por %p690, %p691
      %p693 = scmp.ne.s32.totalorder %s679, %s680
      %p694 = scmp.eq.s32.totalorder %s130, 2
      %p695 = por %p693, %p694
      %p697 = scmp.ne.s32.totalorder %s680, %s696
      %p698 = scmp.eq.s32.totalorder %s130, 0
      %p699 = por %p697, %p698
      %s700 = ssub.s32 %s124, %s131
      %p701 = scmp.eq.s32.totalorder %s700, 0
      %s703 = sadd.s32 %s702, 1
      %s704 = scalar_select %p701, %s702, %s703
      %p707 = pneg %p701
      %p708 = scmp.eq.s32.totalorder %s124, 2
      %p709 = por %p707, %p708
      %p710 = scmp.ne.s32.totalorder %s702, %s705
      %p711 = scmp.eq.s32.totalorder %s124, 0
      %p712 = por %p710, %p711
      %p713 = scmp.ne.s32.totalorder %s702, %s705
      %p714 = scmp.eq.s32.totalorder %s129, 2
      %p715 = por %p713, %p714
      %p716 = scmp.ne.s32.totalorder %s705, %s706
      %p717 = scmp.eq.s32.totalorder %s129, 0
      %p718 = por %p716, %p717
      %p719 = scmp.ne.s32.totalorder %s705, %s706
      %p720 = scmp.eq.s32.totalorder %s130, 2
      %p721 = por %p719, %p720
      %p723 = scmp.ne.s32.totalorder %s706, %s722
      %p724 = scmp.eq.s32.totalorder %s130, 0
      %p725 = por %p723, %p724
      %s726 = ssub.s32 %s124, %s131
      %p727 = scmp.eq.s32.totalorder %s726, 0
      %s729 = sadd.s32 %s728, 1
      %s730 = scalar_select %p727, %s728, %s729
      %p733 = pneg %p727
      %p734 = scmp.eq.s32.totalorder %s124, 2
      %p735 = por %p733, %p734
      %p736 = scmp.ne.s32.totalorder %s728, %s731
      %p737 = scmp.eq.s32.totalorder %s124, 0
      %p738 = por %p736, %p737
      %p739 = scmp.ne.s32.totalorder %s728, %s731
      %p740 = scmp.eq.s32.totalorder %s129, 2
      %p741 = por %p739, %p740
      %p742 = scmp.ne.s32.totalorder %s731, %s732
      %p743 = scmp.eq.s32.totalorder %s129, 0
      %p744 = por %p742, %p743
      %p745 = scmp.ne.s32.totalorder %s731, %s732
      %p746 = scmp.eq.s32.totalorder %s130, 2
      %p747 = por %p745, %p746
      %p749 = scmp.ne.s32.totalorder %s732, %s748
      %p750 = scmp.eq.s32.totalorder %s130, 0
      %p751 = por %p749, %p750
      %s752 = ssub.s32 %s124, %s131
      %p753 = scmp.eq.s32.totalorder %s752, 0
      %s755 = sadd.s32 %s754, 1
      %s756 = scalar_select %p753, %s754, %s755
      %p759 = pneg %p753
      %p760 = scmp.eq.s32.totalorder %s124, 2
      %p761 = por %p759, %p760
      %p762 = scmp.ne.s32.totalorder %s754, %s757
      %p763 = scmp.eq.s32.totalorder %s124, 0
      %p764 = por %p762, %p763
      %p765 = scmp.ne.s32.totalorder %s754, %s757
      %p766 = scmp.eq.s32.totalorder %s129, 2
      %p767 = por %p765, %p766
      %p768 = scmp.ne.s32.totalorder %s757, %s758
      %p769 = scmp.eq.s32.totalorder %s129, 0
      %p770 = por %p768, %p769
      %p771 = scmp.ne.s32.totalorder %s757, %s758
      %p772 = scmp.eq.s32.totalorder %s130, 2
      %p773 = por %p771, %p772
      %p775 = scmp.ne.s32.totalorder %s758, %s774
      %p776 = scmp.eq.s32.totalorder %s130, 0
      %p777 = por %p775, %p776
      %s778 = ssub.s32 %s124, %s131
      %p779 = scmp.eq.s32.totalorder %s778, 0
      %s781 = sadd.s32 %s780, 1
      %s782 = scalar_select %p779, %s780, %s781
      %p785 = pneg %p779
      %p786 = scmp.eq.s32.totalorder %s124, 2
      %p787 = por %p785, %p786
      %p788 = scmp.ne.s32.totalorder %s780, %s783
      %p789 = scmp.eq.s32.totalorder %s124, 0
      %p790 = por %p788, %p789
      %p791 = scmp.ne.s32.totalorder %s780, %s783
      %p792 = scmp.eq.s32.totalorder %s129, 2
      %p793 = por %p791, %p792
      %p794 = scmp.ne.s32.totalorder %s783, %s784
      %p795 = scmp.eq.s32.totalorder %s129, 0
      %p796 = por %p794, %p795
      %p797 = scmp.ne.s32.totalorder %s783, %s784
      %p798 = scmp.eq.s32.totalorder %s130, 2
      %p799 = por %p797, %p798
      %p801 = scmp.ne.s32.totalorder %s784, %s800
      %p802 = scmp.eq.s32.totalorder %s130, 0
      %p803 = por %p801, %p802
      %s804 = ssub.s32 %s124, %s131
      %p805 = scmp.eq.s32.totalorder %s804, 0
      %s807 = sadd.s32 %s806, 1
      %s808 = scalar_select %p805, %s806, %s807
      %p811 = pneg %p805
      %p812 = scmp.eq.s32.totalorder %s124, 2
      %p813 = por %p811, %p812
      %p814 = scmp.ne.s32.totalorder %s806, %s809
      %p815 = scmp.eq.s32.totalorder %s124, 0
      %p816 = por %p814, %p815
      %p817 = scmp.ne.s32.totalorder %s806, %s809
      %p818 = scmp.eq.s32.totalorder %s129, 2
      %p819 = por %p817, %p818
      %p820 = scmp.ne.s32.totalorder %s809, %s810
      %p821 = scmp.eq.s32.totalorder %s129, 0
      %p822 = por %p820, %p821
      %p823 = scmp.ne.s32.totalorder %s809, %s810
      %p824 = scmp.eq.s32.totalorder %s130, 2
      %p825 = por %p823, %p824
      %p827 = scmp.ne.s32.totalorder %s810, %s826
      %p828 = scmp.eq.s32.totalorder %s130, 0
      %p829 = por %p827, %p828
      %s830 = ssub.s32 %s124, %s131
      %p831 = scmp.eq.s32.totalorder %s830, 0
      %s833 = sadd.s32 %s832, 1
      %s834 = scalar_select %p831, %s832, %s833
      %p837 = pneg %p831
      %p838 = scmp.eq.s32.totalorder %s124, 2
      %p839 = por %p837, %p838
      %p840 = scmp.ne.s32.totalorder %s832, %s835
      %p841 = scmp.eq.s32.totalorder %s124, 0
      %p842 = por %p840, %p841
      %p843 = scmp.ne.s32.totalorder %s832, %s835
      %p844 = scmp.eq.s32.totalorder %s129, 2
      %p845 = por %p843, %p844
      %p846 = scmp.ne.s32.totalorder %s835, %s836
      %p847 = scmp.eq.s32.totalorder %s129, 0
      %p848 = por %p846, %p847
      %p849 = scmp.ne.s32.totalorder %s835, %s836
      %p850 = scmp.eq.s32.totalorder %s130, 2
      %p851 = por %p849, %p850
      %p853 = scmp.ne.s32.totalorder %s836, %s852
      %p854 = scmp.eq.s32.totalorder %s130, 0
      %p855 = por %p853, %p854
      %s856 = ssub.s32 %s124, %s131
      %p857 = scmp.eq.s32.totalorder %s856, 0
      %s859 = sadd.s32 %s858, 1
      %s860 = scalar_select %p857, %s858, %s859
      %p863 = pneg %p857
      %p864 = scmp.eq.s32.totalorder %s124, 2
      %p865 = por %p863, %p864
      %p866 = scmp.ne.s32.totalorder %s858, %s861
      %p867 = scmp.eq.s32.totalorder %s124, 0
      %p868 = por %p866, %p867
      %p869 = scmp.ne.s32.totalorder %s858, %s861
      %p870 = scmp.eq.s32.totalorder %s129, 2
      %p871 = por %p869, %p870
      %p872 = scmp.ne.s32.totalorder %s861, %s862
      %p873 = scmp.eq.s32.totalorder %s129, 0
      %p874 = por %p872, %p873
      %p875 = scmp.ne.s32.totalorder %s861, %s862
      %p876 = scmp.eq.s32.totalorder %s130, 2
      %p877 = por %p875, %p876
      %p879 = scmp.ne.s32.totalorder %s862, %s878
      %p880 = scmp.eq.s32.totalorder %s130, 0
      %p881 = por %p879, %p880
      %s882 = ssub.s32 %s124, %s131
      %p883 = scmp.eq.s32.totalorder %s882, 0
      %s885 = sadd.s32 %s884, 1
      %s886 = scalar_select %p883, %s884, %s885
      %p889 = pneg %p883
      %p890 = scmp.eq.s32.totalorder %s124, 2
      %p891 = por %p889, %p890
      %p892 = scmp.ne.s32.totalorder %s884, %s887
      %p893 = scmp.eq.s32.totalorder %s124, 0
      %p894 = por %p892, %p893
      %p895 = scmp.ne.s32.totalorder %s884, %s887
      %p896 = scmp.eq.s32.totalorder %s129, 2
      %p897 = por %p895, %p896
      %p898 = scmp.ne.s32.totalorder %s887, %s888
      %p899 = scmp.eq.s32.totalorder %s129, 0
      %p900 = por %p898, %p899
      %p901 = scmp.ne.s32.totalorder %s887, %s888
      %p902 = scmp.eq.s32.totalorder %s130, 2
      %p903 = por %p901, %p902
      %p905 = scmp.ne.s32.totalorder %s888, %s904
      %p906 = scmp.eq.s32.totalorder %s130, 0
      %p907 = por %p905, %p906
      %s908 = ssub.s32 %s124, %s131
      %p909 = scmp.eq.s32.totalorder %s908, 0
      %s911 = sadd.s32 %s910, 1
      %s912 = scalar_select %p909, %s910, %s911
      %p915 = pneg %p909
      %p916 = scmp.eq.s32.totalorder %s124, 2
      %p917 = por %p915, %p916
      %p918 = scmp.ne.s32.totalorder %s910, %s913
      %p919 = scmp.eq.s32.totalorder %s124, 0
      %p920 = por %p918, %p919
      %p921 = scmp.ne.s32.totalorder %s910, %s913
      %p922 = scmp.eq.s32.totalorder %s129, 2
      %p923 = por %p921, %p922
      %p924 = scmp.ne.s32.totalorder %s913, %s914
      %p925 = scmp.eq.s32.totalorder %s129, 0
      %p926 = por %p924, %p925
      %p927 = scmp.ne.s32.totalorder %s913, %s914
      %p928 = scmp.eq.s32.totalorder %s130, 2
      %p929 = por %p927, %p928
      %p931 = scmp.ne.s32.totalorder %s914, %s930
      %p932 = scmp.eq.s32.totalorder %s130, 0
      %p933 = por %p931, %p932
      %s934 = ssub.s32 %s124, %s131
      %p935 = scmp.eq.s32.totalorder %s934, 0
      %s937 = sadd.s32 %s936, 1
      %s938 = scalar_select %p935, %s936, %s937
      %p941 = pneg %p935
      %p942 = scmp.eq.s32.totalorder %s124, 2
      %p943 = por %p941, %p942
      %p944 = scmp.ne.s32.totalorder %s936, %s939
      %p945 = scmp.eq.s32.totalorder %s124, 0
      %p946 = por %p944, %p945
      %p947 = scmp.ne.s32.totalorder %s936, %s939
      %p948 = scmp.eq.s32.totalorder %s129, 2
      %p949 = por %p947, %p948
      %p950 = scmp.ne.s32.totalorder %s939, %s940
      %p951 = scmp.eq.s32.totalorder %s129, 0
      %p952 = por %p950, %p951
      %p953 = scmp.ne.s32.totalorder %s939, %s940
      %p954 = scmp.eq.s32.totalorder %s130, 2
      %p955 = por %p953, %p954
      %p957 = scmp.ne.s32.totalorder %s940, %s956
      %p958 = scmp.eq.s32.totalorder %s130, 0
      %p959 = por %p957, %p958
      %s960 = ssub.s32 %s124, %s131
      %p961 = scmp.eq.s32.totalorder %s960, 0
      %s963 = sadd.s32 %s962, 1
      %s964 = scalar_select %p961, %s962, %s963
      %p967 = pneg %p961
      %p968 = scmp.eq.s32.totalorder %s124, 2
      %p969 = por %p967, %p968
      %p970 = scmp.ne.s32.totalorder %s962, %s965
      %p971 = scmp.eq.s32.totalorder %s124, 0
      %p972 = por %p970, %p971
      %p973 = scmp.ne.s32.totalorder %s962, %s965
      %p974 = scmp.eq.s32.totalorder %s129, 2
      %p975 = por %p973, %p974
      %p976 = scmp.ne.s32.totalorder %s965, %s966
      %p977 = scmp.eq.s32.totalorder %s129, 0
      %p978 = por %p976, %p977
      %p979 = scmp.ne.s32.totalorder %s965, %s966
      %p980 = scmp.eq.s32.totalorder %s130, 2
      %p981 = por %p979, %p980
      %p983 = scmp.ne.s32.totalorder %s966, %s982
      %p984 = scmp.eq.s32.totalorder %s130, 0
      %p985 = por %p983, %p984
      %s986 = ssub.s32 %s124, %s131
      %p987 = scmp.eq.s32.totalorder %s986, 0
      %s989 = sadd.s32 %s988, 1
      %s990 = scalar_select %p987, %s988, %s989
      %p993 = pneg %p987
      %p994 = scmp.eq.s32.totalorder %s124, 2
      %p995 = por %p993, %p994
      %p996 = scmp.ne.s32.totalorder %s988, %s991
      %p997 = scmp.eq.s32.totalorder %s124, 0
      %p998 = por %p996, %p997
      %p999 = scmp.ne.s32.totalorder %s988, %s991
      %p1000 = scmp.eq.s32.totalorder %s129, 2
      %p1001 = por %p999, %p1000
      %p1002 = scmp.ne.s32.totalorder %s991, %s992
      %p1003 = scmp.eq.s32.totalorder %s129, 0
      %p1004 = por %p1002, %p1003
      %p1005 = scmp.ne.s32.totalorder %s991, %s992
      %p1006 = scmp.eq.s32.totalorder %s130, 2
      %p1007 = por %p1005, %p1006
      %p1009 = scmp.ne.s32.totalorder %s992, %s1008
      %p1010 = scmp.eq.s32.totalorder %s130, 0
      %p1011 = por %p1009, %p1010
      %s1012 = ssub.s32 %s124, %s131
      %p1013 = scmp.eq.s32.totalorder %s1012, 0
      %s1015 = sadd.s32 %s1014, 1
      %s1016 = scalar_select %p1013, %s1014, %s1015
      %p1019 = pneg %p1013
      %p1020 = scmp.eq.s32.totalorder %s124, 2
      %p1021 = por %p1019, %p1020
      %p1022 = scmp.ne.s32.totalorder %s1014, %s1017
      %p1023 = scmp.eq.s32.totalorder %s124, 0
      %p1024 = por %p1022, %p1023
      %p1025 = scmp.ne.s32.totalorder %s1014, %s1017
      %p1026 = scmp.eq.s32.totalorder %s129, 2
      %p1027 = por %p1025, %p1026
      %p1028 = scmp.ne.s32.totalorder %s1017, %s1018
      %p1029 = scmp.eq.s32.totalorder %s129, 0
      %p1030 = por %p1028, %p1029
      %p1031 = scmp.ne.s32.totalorder %s1017, %s1018
      %p1032 = scmp.eq.s32.totalorder %s130, 2
      %p1033 = por %p1031, %p1032
      %p1035 = scmp.ne.s32.totalorder %s1018, %s1034
      %p1036 = scmp.eq.s32.totalorder %s130, 0
      %p1037 = por %p1035, %p1036
      %s1038 = ssub.s32 %s124, %s131
      %p1039 = scmp.eq.s32.totalorder %s1038, 0
      %s1041 = sadd.s32 %s1040, 1
      %s1042 = scalar_select %p1039, %s1040, %s1041
      %p1045 = pneg %p1039
      %p1046 = scmp.eq.s32.totalorder %s124, 2
      %p1047 = por %p1045, %p1046
      %p1048 = scmp.ne.s32.totalorder %s1040, %s1043
      %p1049 = scmp.eq.s32.totalorder %s124, 0
      %p1050 = por %p1048, %p1049
      %p1051 = scmp.ne.s32.totalorder %s1040, %s1043
      %p1052 = scmp.eq.s32.totalorder %s129, 2
      %p1053 = por %p1051, %p1052
      %p1054 = scmp.ne.s32.totalorder %s1043, %s1044
      %p1055 = scmp.eq.s32.totalorder %s129, 0
      %p1056 = por %p1054, %p1055
      %p1057 = scmp.ne.s32.totalorder %s1043, %s1044
      %p1058 = scmp.eq.s32.totalorder %s130, 2
      %p1059 = por %p1057, %p1058
      %p1061 = scmp.ne.s32.totalorder %s1044, %s1060
      %p1062 = scmp.eq.s32.totalorder %s130, 0
      %p1063 = por %p1061, %p1062
      %s1064 = ssub.s32 %s124, %s131
      %p1065 = scmp.eq.s32.totalorder %s1064, 0
      %s1067 = sadd.s32 %s1066, 1
      %s1068 = scalar_select %p1065, %s1066, %s1067
      %p1071 = pneg %p1065
      %p1072 = scmp.eq.s32.totalorder %s124, 2
      %p1073 = por %p1071, %p1072
      %p1074 = scmp.ne.s32.totalorder %s1066, %s1069
      %p1075 = scmp.eq.s32.totalorder %s124, 0
      %p1076 = por %p1074, %p1075
      %p1077 = scmp.ne.s32.totalorder %s1066, %s1069
      %p1078 = scmp.eq.s32.totalorder %s129, 2
      %p1079 = por %p1077, %p1078
      %p1080 = scmp.ne.s32.totalorder %s1069, %s1070
      %p1081 = scmp.eq.s32.totalorder %s129, 0
      %p1082 = por %p1080, %p1081
      %p1083 = scmp.ne.s32.totalorder %s1069, %s1070
      %p1084 = scmp.eq.s32.totalorder %s130, 2
      %p1085 = por %p1083, %p1084
      %p1087 = scmp.ne.s32.totalorder %s1070, %s1086
      %p1088 = scmp.eq.s32.totalorder %s130, 0
      %p1089 = por %p1087, %p1088
      %s1090 = ssub.s32 %s124, %s131
      %p1091 = scmp.eq.s32.totalorder %s1090, 0
      %s1093 = sadd.s32 %s1092, 1
      %s1094 = scalar_select %p1091, %s1092, %s1093
      %p1097 = pneg %p1091
      %p1098 = scmp.eq.s32.totalorder %s124, 2
      %p1099 = por %p1097, %p1098
      %p1100 = scmp.ne.s32.totalorder %s1092, %s1095
      %p1101 = scmp.eq.s32.totalorder %s124, 0
      %p1102 = por %p1100, %p1101
      %p1103 = scmp.ne.s32.totalorder %s1092, %s1095
      %p1104 = scmp.eq.s32.totalorder %s129, 2
      %p1105 = por %p1103, %p1104
      %p1106 = scmp.ne.s32.totalorder %s1095, %s1096
      %p1107 = scmp.eq.s32.totalorder %s129, 0
      %p1108 = por %p1106, %p1107
      %p1109 = scmp.ne.s32.totalorder %s1095, %s1096
      %p1110 = scmp.eq.s32.totalorder %s130, 2
      %p1111 = por %p1109, %p1110
      %p1113 = scmp.ne.s32.totalorder %s1096, %s1112
      %p1114 = scmp.eq.s32.totalorder %s130, 0
      %p1115 = por %p1113, %p1114
      %s1116 = ssub.s32 %s124, %s131
      %p1117 = scmp.eq.s32.totalorder %s1116, 0
      %s1119 = sadd.s32 %s1118, 1
      %s1120 = scalar_select %p1117, %s1118, %s1119
      %p1123 = pneg %p1117
      %p1124 = scmp.eq.s32.totalorder %s124, 2
      %p1125 = por %p1123, %p1124
      %p1126 = scmp.ne.s32.totalorder %s1118, %s1121
      %p1127 = scmp.eq.s32.totalorder %s124, 0
      %p1128 = por %p1126, %p1127
      %p1129 = scmp.ne.s32.totalorder %s1118, %s1121
      %p1130 = scmp.eq.s32.totalorder %s129, 2
      %p1131 = por %p1129, %p1130
      %p1132 = scmp.ne.s32.totalorder %s1121, %s1122
      %p1133 = scmp.eq.s32.totalorder %s129, 0
      %p1134 = por %p1132, %p1133
      %p1135 = scmp.ne.s32.totalorder %s1121, %s1122
      %p1136 = scmp.eq.s32.totalorder %s130, 2
      %p1137 = por %p1135, %p1136
      %p1139 = scmp.ne.s32.totalorder %s1122, %s1138
      %p1140 = scmp.eq.s32.totalorder %s130, 0
      %p1141 = por %p1139, %p1140
      %s1142 = ssub.s32 %s124, %s131
      %p1143 = scmp.eq.s32.totalorder %s1142, 0
      %s1145 = sadd.s32 %s1144, 1
      %s1146 = scalar_select %p1143, %s1144, %s1145
      %p1149 = pneg %p1143
      %p1150 = scmp.eq.s32.totalorder %s124, 2
      %p1151 = por %p1149, %p1150
      %p1152 = scmp.ne.s32.totalorder %s1144, %s1147
      %p1153 = scmp.eq.s32.totalorder %s124, 0
      %p1154 = por %p1152, %p1153
      %p1155 = scmp.ne.s32.totalorder %s1144, %s1147
      %p1156 = scmp.eq.s32.totalorder %s129, 2
      %p1157 = por %p1155, %p1156
      %p1158 = scmp.ne.s32.totalorder %s1147, %s1148
      %p1159 = scmp.eq.s32.totalorder %s129, 0
      %p1160 = por %p1158, %p1159
      %p1161 = scmp.ne.s32.totalorder %s1147, %s1148
      %p1162 = scmp.eq.s32.totalorder %s130, 2
      %p1163 = por %p1161, %p1162
      %p1165 = scmp.ne.s32.totalorder %s1148, %s1164
      %p1166 = scmp.eq.s32.totalorder %s130, 0
      %p1167 = por %p1165, %p1166
      %s1168 = ssub.s32 %s124, %s131
      %p1169 = scmp.eq.s32.totalorder %s1168, 0
      %s1171 = sadd.s32 %s1170, 1
      %s1172 = scalar_select %p1169, %s1170, %s1171
      %p1175 = pneg %p1169
      %p1176 = scmp.eq.s32.totalorder %s124, 2
      %p1177 = por %p1175, %p1176
      %p1178 = scmp.ne.s32.totalorder %s1170, %s1173
      %p1179 = scmp.eq.s32.totalorder %s124, 0
      %p1180 = por %p1178, %p1179
      %p1181 = scmp.ne.s32.totalorder %s1170, %s1173
      %p1182 = scmp.eq.s32.totalorder %s129, 2
      %p1183 = por %p1181, %p1182
      %p1184 = scmp.ne.s32.totalorder %s1173, %s1174
      %p1185 = scmp.eq.s32.totalorder %s129, 0
      %p1186 = por %p1184, %p1185
      %p1187 = scmp.ne.s32.totalorder %s1173, %s1174
      %p1188 = scmp.eq.s32.totalorder %s130, 2
      %p1189 = por %p1187, %p1188
      %p1191 = scmp.ne.s32.totalorder %s1174, %s1190
      %p1192 = scmp.eq.s32.totalorder %s130, 0
      %p1193 = por %p1191, %p1192
      %s1194 = ssub.s32 %s124, %s131
      %p1195 = scmp.eq.s32.totalorder %s1194, 0
      %s1197 = sadd.s32 %s1196, 1
      %s1198 = scalar_select %p1195, %s1196, %s1197
      %p1201 = pneg %p1195
      %p1202 = scmp.eq.s32.totalorder %s124, 2
      %p1203 = por %p1201, %p1202
      %p1204 = scmp.ne.s32.totalorder %s1196, %s1199
      %p1205 = scmp.eq.s32.totalorder %s124, 0
      %p1206 = por %p1204, %p1205
      %p1207 = scmp.ne.s32.totalorder %s1196, %s1199
      %p1208 = scmp.eq.s32.totalorder %s129, 2
      %p1209 = por %p1207, %p1208
      %p1210 = scmp.ne.s32.totalorder %s1199, %s1200
      %p1211 = scmp.eq.s32.totalorder %s129, 0
      %p1212 = por %p1210, %p1211
      %p1213 = scmp.ne.s32.totalorder %s1199, %s1200
      %p1214 = scmp.eq.s32.totalorder %s130, 2
      %p1215 = por %p1213, %p1214
      %p1217 = scmp.ne.s32.totalorder %s1200, %s1216
      %p1218 = scmp.eq.s32.totalorder %s130, 0
      %p1219 = por %p1217, %p1218
      %s1220 = ssub.s32 %s124, %s131
      %p1221 = scmp.eq.s32.totalorder %s1220, 0
      %s1223 = sadd.s32 %s1222, 1
      %s1224 = scalar_select %p1221, %s1222, %s1223
      %p1227 = pneg %p1221
      %p1228 = scmp.eq.s32.totalorder %s124, 2
      %p1229 = por %p1227, %p1228
      %p1230 = scmp.ne.s32.totalorder %s1222, %s1225
      %p1231 = scmp.eq.s32.totalorder %s124, 0
      %p1232 = por %p1230, %p1231
      %p1233 = scmp.ne.s32.totalorder %s1222, %s1225
      %p1234 = scmp.eq.s32.totalorder %s129, 2
      %p1235 = por %p1233, %p1234
      %p1236 = scmp.ne.s32.totalorder %s1225, %s1226
      %p1237 = scmp.eq.s32.totalorder %s129, 0
      %p1238 = por %p1236, %p1237
      %p1239 = scmp.ne.s32.totalorder %s1225, %s1226
      %p1240 = scmp.eq.s32.totalorder %s130, 2
      %p1241 = por %p1239, %p1240
      %p1243 = scmp.ne.s32.totalorder %s1226, %s1242
      %p1244 = scmp.eq.s32.totalorder %s130, 0
      %p1245 = por %p1243, %p1244
      %s1247 = sadd.s32 %s1246, 1
      %p1250 = scmp.eq.s32.totalorder %s124, 2
      %p1251 = scmp.ne.s32.totalorder %s1246, %s1248
      %p1252 = scmp.eq.s32.totalorder %s124, 0
      %p1253 = por %p1251, %p1252
      %p1254 = scmp.ne.s32.totalorder %s1246, %s1248
      %p1255 = scmp.eq.s32.totalorder %s129, 2
      %p1256 = por %p1254, %p1255
      %p1257 = scmp.ne.s32.totalorder %s1248, %s1249
      %p1258 = scmp.eq.s32.totalorder %s129, 0
      %p1259 = por %p1257, %p1258
      %p1260 = scmp.ne.s32.totalorder %s1248, %s1249
      %p1261 = scmp.eq.s32.totalorder %s130, 2
      %p1262 = por %p1260, %p1261
      %p1264 = scmp.ne.s32.totalorder %s1249, %s1263
      %p1265 = scmp.eq.s32.totalorder %s130, 0
      %p1266 = por %p1264, %p1265
      %p1267 = scmp.le.s32.totalorder 1, %s124
      %p1268 = scmp.lt.s32.totalorder %s124, 4
      %p1269 = pnand %p1267, %p1268
      %p1270 = pneg %p1269
      // Predicated region
      $region9: #{_forward_impl.1} parent=5 // pred_check
        _
      $region10: #{_forward_impl.1} parent=5 // pred_check_branch
        %1272 = sbr.rel (%p1269) target = $region12
      $region11: #{_forward_impl.1} parent=5 // pred_region
        %s1273 = ssub.s32 %s124, 1
        // Predicated region
        $region13: #{_forward_impl.1} parent=11 // pred_check
          %p1274 = pneg %p145
        $region14: #{_forward_impl.1} parent=11 // pred_check_branch
          %1276 = sbr.rel (%p1274) target = $region16
        $region15: #{_forward_impl.1} parent=11 // pred_region
          _
        $region16: #{_forward_impl.1} parent=11 // pred_fallthru
          _
        // Predicated region
        $region17: #{_forward_impl.1} parent=11 // pred_check
          %p1277 = pneg %p166
        $region18: #{_forward_impl.1} parent=11 // pred_check_branch
          %1279 = sbr.rel (%p1277) target = $region20
        $region19: #{_forward_impl.1} parent=11 // pred_region
          %s1281 = ssub.s32 128, 128
          %1282 = vsyncadd [#allocation4], %s1281
          %s1284 = sshll.u32 [#allocation3], 4
          %s1285 = int_to_ptr.vmem [resolvable:$true] %s1284
          %1287 = dma.hbm_to_vmem [thread:$0]  %s3, 128, %s1285, [#allocation4]
        $region20: #{_forward_impl.1} parent=11 // pred_fallthru
          _
        // Predicated region
        $region21: #{_forward_impl.1} parent=11 // pred_check
          %p1288 = pneg %p187
        $region22: #{_forward_impl.1} parent=11 // pred_check_branch
          %1290 = sbr.rel (%p1288) target = $region24
        $region23: #{_forward_impl.1} parent=11 // pred_region
          _
        $region24: #{_forward_impl.1} parent=11 // pred_fallthru
          _
        // Predicated region
        $region25: #{_forward_impl.1} parent=11 // pred_check
          %p1291 = pneg %p208
        $region26: #{_forward_impl.1} parent=11 // pred_check_branch
          %1293 = sbr.rel (%p1291) target = $region28
        $region27: #{_forward_impl.1} parent=11 // pred_region
          _
        $region28: #{_forward_impl.1} parent=11 // pred_fallthru
          _
        // Predicated region
        $region29: #{_forward_impl.1} parent=11 // pred_check
          %p1294 = pneg %p229
        $region30: #{_forward_impl.1} parent=11 // pred_check_branch
          %1296 = sbr.rel (%p1294) target = $region32
        $region31: #{_forward_impl.1} parent=11 // pred_region
          %s1298 = ssub.s32 1024, 1024
          %1299 = vsyncadd [#allocation6], %s1298
          %s1300 = sshll.u32 [#allocation5], 4
          %s1301 = int_to_ptr.vmem [resolvable:$true] %s1300
          %1306 = dma.hbm_to_vmem [thread:$0]  %s9, 1024, %s1301, [#allocation6], 64, 64, 4
        $region32: #{_forward_impl.1} parent=11 // pred_fallthru
          _
        // Predicated region
        $region33: #{_forward_impl.1} parent=11 // pred_check
          %p1307 = pneg %p250
        $region34: #{_forward_impl.1} parent=11 // pred_check_branch
          %1309 = sbr.rel (%p1307) target = $region36
        $region35: #{_forward_impl.1} parent=11 // pred_region
          %s1311 = ssub.s32 16, 16
          %1312 = vsyncadd [#allocation6], %s1311
          %s1314 = sshll.u32 [#allocation7], 4
          %s1315 = int_to_ptr.vmem [resolvable:$true] %s1314
          %1317 = dma.hbm_to_vmem [thread:$0]  %s11, 16, %s1315, [#allocation6]
        $region36: #{_forward_impl.1} parent=11 // pred_fallthru
          _
      $region12: #{_forward_impl.1} parent=5 // pred_fallthru
        _
      %p1318 = scmp.lt.s32.totalorder %s124, 3
      // Predicated region
      $region37: #{_forward_impl.1} parent=5 // pred_check
        %p1319 = pneg %p1318
      $region38: #{_forward_impl.1} parent=5 // pred_check_branch
        %1321 = sbr.rel (%p1319) target = $region40
      $region39: #{_forward_impl.1} parent=5 // pred_region
        // Predicated region
        $region41: #{_forward_impl.1} parent=39 // pred_check
          %p1322 = pneg %p270
        $region42: #{_forward_impl.1} parent=39 // pred_check_branch
          %1324 = sbr.rel (%p1322) target = $region44
        $region43: #{_forward_impl.1} parent=39 // pred_region
          %s1325 = sand.u32 %s124, 1
          %s1326 = scalar_lea.sflag [#allocation9], %s1325
          %s1327 = sand.u32 %s260, 1
          %s1328 = scalar_lea.vmem [#allocation8], %s1327
          %s1330 = ssub.s32 16, 16
          %1331 = vsyncadd %s1326, %s1330
          %s1332 = smul.addr %s124, 16
          %s1333 = scalar_lea.hbm %s13, %s1332
          %s1335 = sshll.u32 %s1328, 4
          %s1336 = int_to_ptr.vmem [resolvable:$true] %s1335
          %1338 = dma.hbm_to_vmem [thread:$0]  %s1333, 16, %s1336, %s1326
        $region44: #{_forward_impl.1} parent=39 // pred_fallthru
          _
        // Predicated region
        $region45: #{_forward_impl.1} parent=39 // pred_check
          %p1339 = pneg %p296
        $region46: #{_forward_impl.1} parent=39 // pred_check_branch
          %1341 = sbr.rel (%p1339) target = $region48
        $region47: #{_forward_impl.1} parent=39 // pred_region
          %s1342 = sand.u32 %s124, 1
          %s1343 = scalar_lea.sflag [#allocation9], %s1342
          %s1344 = sand.u32 %s286, 1
          %s1345 = smul.addr %s1344, 64
          %s1346 = scalar_lea.vmem [#allocation10], %s1345
          %s1348 = ssub.s32 1024, 1024
          %1349 = vsyncadd %s1343, %s1348
          %s1350 = smul.addr %s124, 16
          %s1351 = smul.addr %s1350, 64
          %s1352 = scalar_lea.hbm %s15, %s1351
          %s1353 = sshll.u32 %s1346, 4
          %s1354 = int_to_ptr.vmem [resolvable:$true] %s1353
          %1359 = dma.hbm_to_vmem [thread:$0]  %s1352, 1024, %s1354, %s1343, 64, 64, 4
        $region48: #{_forward_impl.1} parent=39 // pred_fallthru
          _
        // Predicated region
        $region49: #{_forward_impl.1} parent=39 // pred_check
          %p1360 = pneg %p322
        $region50: #{_forward_impl.1} parent=39 // pred_check_branch
          %1362 = sbr.rel (%p1360) target = $region52
        $region51: #{_forward_impl.1} parent=39 // pred_region
          %s1363 = sand.u32 %s124, 1
          %s1364 = scalar_lea.sflag [#allocation12], %s1363
          %s1365 = sand.u32 %s312, 1
          %s1366 = smul.addr %s1365, 2
          %s1367 = scalar_lea.vmem [#allocation11], %s1366
          %s1369 = ssub.s32 32, 32
          %1370 = vsyncadd %s1364, %s1369
          %s1371 = smul.addr %s124, 2
          %s1372 = smul.addr %s1371, 16
          %s1373 = scalar_lea.hbm %s17, %s1372
          %s1375 = sshll.u32 %s1367, 4
          %s1376 = int_to_ptr.vmem [resolvable:$true] %s1375
          %1378 = dma.hbm_to_vmem [thread:$0]  %s1373, 32, %s1376, %s1364
        $region52: #{_forward_impl.1} parent=39 // pred_fallthru
          _
        // Predicated region
        $region53: #{_forward_impl.1} parent=39 // pred_check
          %p1379 = pneg %p348
        $region54: #{_forward_impl.1} parent=39 // pred_check_branch
          %1381 = sbr.rel (%p1379) target = $region56
        $region55: #{_forward_impl.1} parent=39 // pred_region
          %s1382 = sand.u32 %s124, 1
          %s1383 = scalar_lea.sflag [#allocation12], %s1382
          %s1384 = sand.u32 %s338, 1
          %s1385 = smul.addr %s1384, 128
          %s1386 = scalar_lea.vmem [#allocation13], %s1385
          %s1388 = ssub.s32 2048, 2048
          %1389 = vsyncadd %s1383, %s1388
          %s1390 = smul.addr %s124, 32
          %s1391 = smul.addr %s1390, 64
          %s1392 = scalar_lea.hbm %s19, %s1391
          %s1393 = sshll.u32 %s1386, 4
          %s1394 = int_to_ptr.vmem [resolvable:$true] %s1393
          %1399 = dma.hbm_to_vmem [thread:$0]  %s1392, 2048, %s1394, %s1383, 128, 128, 8
        $region56: #{_forward_impl.1} parent=39 // pred_fallthru
          _
        // Predicated region
        $region57: #{_forward_impl.1} parent=39 // pred_check
          %p1400 = pneg %p374
        $region58: #{_forward_impl.1} parent=39 // pred_check_branch
          %1402 = sbr.rel (%p1400) target = $region60
        $region59: #{_forward_impl.1} parent=39 // pred_region
          %p1403 = scmp.lt.s32.totalorder %s124, 2
          %s1404 = scalar_select %p1403, %s124, 2
          %s1405 = scalar_lea.vmem %s21, %s1404
        $region60: #{_forward_impl.1} parent=39 // pred_fallthru
          _
        // Predicated region
        $region61: #{_forward_impl.1} parent=39 // pred_check
          %p1406 = pneg %p400
        $region62: #{_forward_impl.1} parent=39 // pred_check_branch
          %1408 = sbr.rel (%p1406) target = $region64
        $region63: #{_forward_impl.1} parent=39 // pred_region
          %s1409 = sand.u32 %s124, 1
          %s1410 = scalar_lea.sflag [#allocation15], %s1409
          %s1411 = sand.u32 %s390, 1
          %s1412 = smul.addr %s1411, 64
          %s1413 = scalar_lea.vmem [#allocation14], %s1412
          %s1415 = ssub.s32 1024, 1024
          %1416 = vsyncadd %s1410, %s1415
          %s1417 = smul.addr %s124, 16
          %s1418 = smul.addr %s1417, 64
          %s1419 = scalar_lea.hbm %s23, %s1418
          %s1420 = sshll.u32 %s1413, 4
          %s1421 = int_to_ptr.vmem [resolvable:$true] %s1420
          %1426 = dma.hbm_to_vmem [thread:$0]  %s1419, 1024, %s1421, %s1410, 64, 64, 4
        $region64: #{_forward_impl.1} parent=39 // pred_fallthru
          _
        // Predicated region
        $region65: #{_forward_impl.1} parent=39 // pred_check
          %p1427 = pneg %p426
        $region66: #{_forward_impl.1} parent=39 // pred_check_branch
          %1429 = sbr.rel (%p1427) target = $region68
        $region67: #{_forward_impl.1} parent=39 // pred_region
          %s1430 = sand.u32 %s124, 1
          %s1431 = scalar_lea.sflag [#allocation15], %s1430
          %s1432 = sand.u32 %s416, 1
          %s1433 = scalar_lea.vmem [#allocation16], %s1432
          %s1435 = ssub.s32 16, 16
          %1436 = vsyncadd %s1431, %s1435
          %s1437 = smul.addr %s124, 16
          %s1438 = scalar_lea.hbm %s25, %s1437
          %s1440 = sshll.u32 %s1433, 4
          %s1441 = int_to_ptr.vmem [resolvable:$true] %s1440
          %1443 = dma.hbm_to_vmem [thread:$0]  %s1438, 16, %s1441, %s1431
        $region68: #{_forward_impl.1} parent=39 // pred_fallthru
          _
        // Predicated region
        $region69: #{_forward_impl.1} parent=39 // pred_check
          %p1444 = pneg %p452
        $region70: #{_forward_impl.1} parent=39 // pred_check_branch
          %1446 = sbr.rel (%p1444) target = $region72
        $region71: #{_forward_impl.1} parent=39 // pred_region
          %s1447 = sand.u32 %s124, 1
          %s1448 = scalar_lea.sflag [#allocation18], %s1447
          %s1449 = sand.u32 %s442, 1
          %s1450 = smul.addr %s1449, 64
          %s1451 = scalar_lea.vmem [#allocation17], %s1450
          %s1453 = ssub.s32 1024, 1024
          %1454 = vsyncadd %s1448, %s1453
          %s1455 = smul.addr %s124, 16
          %s1456 = smul.addr %s1455, 64
          %s1457 = scalar_lea.hbm %s27, %s1456
          %s1458 = sshll.u32 %s1451, 4
          %s1459 = int_to_ptr.vmem [resolvable:$true] %s1458
          %1464 = dma.hbm_to_vmem [thread:$0]  %s1457, 1024, %s1459, %s1448, 64, 64, 4
        $region72: #{_forward_impl.1} parent=39 // pred_fallthru
          _
        // Predicated region
        $region73: #{_forward_impl.1} parent=39 // pred_check
          %p1465 = pneg %p478
        $region74: #{_forward_impl.1} parent=39 // pred_check_branch
          %1467 = sbr.rel (%p1465) target = $region76
        $region75: #{_forward_impl.1} parent=39 // pred_region
          %s1468 = sand.u32 %s124, 1
          %s1469 = scalar_lea.sflag [#allocation18], %s1468
          %s1470 = sand.u32 %s468, 1
          %s1471 = scalar_lea.vmem [#allocation19], %s1470
          %s1473 = ssub.s32 16, 16
          %1474 = vsyncadd %s1469, %s1473
          %s1475 = smul.addr %s124, 16
          %s1476 = scalar_lea.hbm %s29, %s1475
          %s1478 = sshll.u32 %s1471, 4
          %s1479 = int_to_ptr.vmem [resolvable:$true] %s1478
          %1481 = dma.hbm_to_vmem [thread:$0]  %s1476, 16, %s1479, %s1469
        $region76: #{_forward_impl.1} parent=39 // pred_fallthru
          _
        // Predicated region
        $region77: #{_forward_impl.1} parent=39 // pred_check
          %p1482 = pneg %p504
        $region78: #{_forward_impl.1} parent=39 // pred_check_branch
          %1484 = sbr.rel (%p1482) target = $region80
        $region79: #{_forward_impl.1} parent=39 // pred_region
          %s1485 = sand.u32 %s124, 1
          %s1486 = scalar_lea.sflag [#allocation21], %s1485
          %s1487 = sand.u32 %s494, 1
          %s1488 = smul.addr %s1487, 64
          %s1489 = scalar_lea.vmem [#allocation20], %s1488
          %s1491 = ssub.s32 1024, 1024
          %1492 = vsyncadd %s1486, %s1491
          %s1493 = smul.addr %s124, 16
          %s1494 = smul.addr %s1493, 64
          %s1495 = scalar_lea.hbm %s31, %s1494
          %s1496 = sshll.u32 %s1489, 4
          %s1497 = int_to_ptr.vmem [resolvable:$true] %s1496
          %1502 = dma.hbm_to_vmem [thread:$0]  %s1495, 1024, %s1497, %s1486, 64, 64, 4
        $region80: #{_forward_impl.1} parent=39 // pred_fallthru
          _
        // Predicated region
        $region81: #{_forward_impl.1} parent=39 // pred_check
          %p1503 = pneg %p530
        $region82: #{_forward_impl.1} parent=39 // pred_check_branch
          %1505 = sbr.rel (%p1503) target = $region84
        $region83: #{_forward_impl.1} parent=39 // pred_region
          %s1506 = sand.u32 %s124, 1
          %s1507 = scalar_lea.sflag [#allocation21], %s1506
          %s1508 = sand.u32 %s520, 1
          %s1509 = scalar_lea.vmem [#allocation22], %s1508
          %s1511 = ssub.s32 16, 16
          %1512 = vsyncadd %s1507, %s1511
          %s1513 = smul.addr %s124, 16
          %s1514 = scalar_lea.hbm %s33, %s1513
          %s1516 = sshll.u32 %s1509, 4
          %s1517 = int_to_ptr.vmem [resolvable:$true] %s1516
          %1519 = dma.hbm_to_vmem [thread:$0]  %s1514, 16, %s1517, %s1507
        $region84: #{_forward_impl.1} parent=39 // pred_fallthru
          _
        // Predicated region
        $region85: #{_forward_impl.1} parent=39 // pred_check
          %p1520 = pneg %p556
        $region86: #{_forward_impl.1} parent=39 // pred_check_branch
          %1522 = sbr.rel (%p1520) target = $region88
        $region87: #{_forward_impl.1} parent=39 // pred_region
          %s1523 = sand.u32 %s124, 1
          %s1524 = scalar_lea.sflag [#allocation24], %s1523
          %s1525 = sand.u32 %s546, 1
          %s1526 = smul.addr %s1525, 64
          %s1527 = scalar_lea.vmem [#allocation23], %s1526
          %s1529 = ssub.s32 1024, 1024
          %1530 = vsyncadd %s1524, %s1529
          %s1531 = smul.addr %s124, 16
          %s1532 = smul.addr %s1531, 64
          %s1533 = scalar_lea.hbm %s35, %s1532
          %s1534 = sshll.u32 %s1527, 4
          %s1535 = int_to_ptr.vmem [resolvable:$true] %s1534
          %1540 = dma.hbm_to_vmem [thread:$0]  %s1533, 1024, %s1535, %s1524, 64, 64, 4
        $region88: #{_forward_impl.1} parent=39 // pred_fallthru
          _
        // Predicated region
        $region89: #{_forward_impl.1} parent=39 // pred_check
          %p1541 = pneg %p582
        $region90: #{_forward_impl.1} parent=39 // pred_check_branch
          %1543 = sbr.rel (%p1541) target = $region92
        $region91: #{_forward_impl.1} parent=39 // pred_region
          %p1544 = scmp.lt.s32.totalorder %s124, 2
          %s1545 = scalar_select %p1544, %s124, 2
          %s1546 = scalar_lea.vmem %s37, %s1545
        $region92: #{_forward_impl.1} parent=39 // pred_fallthru
          _
        // Predicated region
        $region93: #{_forward_impl.1} parent=39 // pred_check
          %p1547 = pneg %p608
        $region94: #{_forward_impl.1} parent=39 // pred_check_branch
          %1549 = sbr.rel (%p1547) target = $region96
        $region95: #{_forward_impl.1} parent=39 // pred_region
          %p1550 = scmp.lt.s32.totalorder %s124, 2
          %s1551 = scalar_select %p1550, %s124, 2
          %s1552 = scalar_lea.vmem %s39, %s1551
        $region96: #{_forward_impl.1} parent=39 // pred_fallthru
          _
        // Predicated region
        $region97: #{_forward_impl.1} parent=39 // pred_check
          %p1553 = pneg %p634
        $region98: #{_forward_impl.1} parent=39 // pred_check_branch
          %1555 = sbr.rel (%p1553) target = $region100
        $region99: #{_forward_impl.1} parent=39 // pred_region
          %p1556 = scmp.lt.s32.totalorder %s124, 2
          %s1557 = scalar_select %p1556, %s124, 2
          %s1558 = scalar_lea.vmem %s41, %s1557
        $region100: #{_forward_impl.1} parent=39 // pred_fallthru
          _
        // Predicated region
        $region101: #{_forward_impl.1} parent=39 // pred_check
          %p1559 = pneg %p660
        $region102: #{_forward_impl.1} parent=39 // pred_check_branch
          %1561 = sbr.rel (%p1559) target = $region104
        $region103: #{_forward_impl.1} parent=39 // pred_region
          %p1562 = scmp.lt.s32.totalorder %s124, 2
          %s1563 = scalar_select %p1562, %s124, 2
          %s1564 = scalar_lea.vmem %s43, %s1563
        $region104: #{_forward_impl.1} parent=39 // pred_fallthru
          _
        // Predicated region
        $region105: #{_forward_impl.1} parent=39 // pred_check
          %p1565 = pneg %p686
        $region106: #{_forward_impl.1} parent=39 // pred_check_branch
          %1567 = sbr.rel (%p1565) target = $region108
        $region107: #{_forward_impl.1} parent=39 // pred_region
          %p1568 = scmp.lt.s32.totalorder %s124, 2
          %s1569 = scalar_select %p1568, %s124, 2
          %s1570 = scalar_lea.vmem %s45, %s1569
        $region108: #{_forward_impl.1} parent=39 // pred_fallthru
          _
        // Predicated region
        $region109: #{_forward_impl.1} parent=39 // pred_check
          %p1571 = pneg %p712
        $region110: #{_forward_impl.1} parent=39 // pred_check_branch
          %1573 = sbr.rel (%p1571) target = $region112
        $region111: #{_forward_impl.1} parent=39 // pred_region
          %p1574 = scmp.lt.s32.totalorder %s124, 2
          %s1575 = scalar_select %p1574, %s124, 2
          %s1576 = scalar_lea.vmem %s47, %s1575
        $region112: #{_forward_impl.1} parent=39 // pred_fallthru
          _
        // Predicated region
        $region113: #{_forward_impl.1} parent=39 // pred_check
          %p1577 = pneg %p738
        $region114: #{_forward_impl.1} parent=39 // pred_check_branch
          %1579 = sbr.rel (%p1577) target = $region116
        $region115: #{_forward_impl.1} parent=39 // pred_region
          %p1580 = scmp.lt.s32.totalorder %s124, 2
          %s1581 = scalar_select %p1580, %s124, 2
          %s1582 = smul.addr %s1581, 3
          %s1583 = scalar_lea.vmem %s49, %s1582
        $region116: #{_forward_impl.1} parent=39 // pred_fallthru
          _
        // Predicated region
        $region117: #{_forward_impl.1} parent=39 // pred_check
          %p1584 = pneg %p764
        $region118: #{_forward_impl.1} parent=39 // pred_check_branch
          %1586 = sbr.rel (%p1584) target = $region120
        $region119: #{_forward_impl.1} parent=39 // pred_region
          %s1587 = sand.u32 %s124, 1
          %s1588 = scalar_lea.sflag [#allocation24], %s1587
          %s1589 = sand.u32 %s754, 1
          %s1590 = smul.addr %s1589, 192
          %s1591 = scalar_lea.vmem [#allocation25], %s1590
          %s1593 = ssub.s32 3072, 3072
          %1594 = vsyncadd %s1588, %s1593
          %s1595 = smul.addr %s124, 48
          %s1596 = smul.addr %s1595, 64
          %s1597 = scalar_lea.hbm %s51, %s1596
          %s1598 = sshll.u32 %s1591, 4
          %s1599 = int_to_ptr.vmem [resolvable:$true] %s1598
          %1604 = dma.hbm_to_vmem [thread:$0]  %s1597, 3072, %s1599, %s1588, 192, 192, 12
        $region120: #{_forward_impl.1} parent=39 // pred_fallthru
          _
        // Predicated region
        $region121: #{_forward_impl.1} parent=39 // pred_check
          %p1605 = pneg %p790
        $region122: #{_forward_impl.1} parent=39 // pred_check_branch
          %1607 = sbr.rel (%p1605) target = $region124
        $region123: #{_forward_impl.1} parent=39 // pred_region
          %p1608 = scmp.lt.s32.totalorder %s124, 2
          %s1609 = scalar_select %p1608, %s124, 2
          %s1610 = scalar_lea.vmem %s53, %s1609
        $region124: #{_forward_impl.1} parent=39 // pred_fallthru
          _
        // Predicated region
        $region125: #{_forward_impl.1} parent=39 // pred_check
          %p1611 = pneg %p816
        $region126: #{_forward_impl.1} parent=39 // pred_check_branch
          %1613 = sbr.rel (%p1611) target = $region128
        $region127: #{_forward_impl.1} parent=39 // pred_region
          %s1614 = sand.u32 %s124, 1
          %s1615 = scalar_lea.sflag [#allocation27], %s1614
          %s1616 = sand.u32 %s806, 1
          %s1617 = smul.addr %s1616, 64
          %s1618 = scalar_lea.vmem [#allocation26], %s1617
          %s1620 = ssub.s32 1024, 1024
          %1621 = vsyncadd %s1615, %s1620
          %s1622 = smul.addr %s124, 16
          %s1623 = smul.addr %s1622, 64
          %s1624 = scalar_lea.hbm %s55, %s1623
          %s1625 = sshll.u32 %s1618, 4
          %s1626 = int_to_ptr.vmem [resolvable:$true] %s1625
          %1631 = dma.hbm_to_vmem [thread:$0]  %s1624, 1024, %s1626, %s1615, 64, 64, 4
        $region128: #{_forward_impl.1} parent=39 // pred_fallthru
          _
        // Predicated region
        $region129: #{_forward_impl.1} parent=39 // pred_check
          %p1632 = pneg %p842
        $region130: #{_forward_impl.1} parent=39 // pred_check_branch
          %1634 = sbr.rel (%p1632) target = $region132
        $region131: #{_forward_impl.1} parent=39 // pred_region
          %p1635 = scmp.lt.s32.totalorder %s124, 2
          %s1636 = scalar_select %p1635, %s124, 2
          %s1637 = scalar_lea.vmem %s57, %s1636
        $region132: #{_forward_impl.1} parent=39 // pred_fallthru
          _
        // Predicated region
        $region133: #{_forward_impl.1} parent=39 // pred_check
          %p1638 = pneg %p868
        $region134: #{_forward_impl.1} parent=39 // pred_check_branch
          %1640 = sbr.rel (%p1638) target = $region136
        $region135: #{_forward_impl.1} parent=39 // pred_region
          %p1641 = scmp.lt.s32.totalorder %s124, 2
          %s1642 = scalar_select %p1641, %s124, 2
          %s1643 = scalar_lea.vmem %s59, %s1642
        $region136: #{_forward_impl.1} parent=39 // pred_fallthru
          _
        // Predicated region
        $region137: #{_forward_impl.1} parent=39 // pred_check
          %p1644 = pneg %p894
        $region138: #{_forward_impl.1} parent=39 // pred_check_branch
          %1646 = sbr.rel (%p1644) target = $region140
        $region139: #{_forward_impl.1} parent=39 // pred_region
          %p1647 = scmp.lt.s32.totalorder %s124, 2
          %s1648 = scalar_select %p1647, %s124, 2
          %s1649 = scalar_lea.vmem %s61, %s1648
        $region140: #{_forward_impl.1} parent=39 // pred_fallthru
          _
        // Predicated region
        $region141: #{_forward_impl.1} parent=39 // pred_check
          %p1650 = pneg %p920
        $region142: #{_forward_impl.1} parent=39 // pred_check_branch
          %1652 = sbr.rel (%p1650) target = $region144
        $region143: #{_forward_impl.1} parent=39 // pred_region
          %s1653 = sand.u32 %s124, 1
          %s1654 = scalar_lea.sflag [#allocation27], %s1653
          %s1655 = sand.u32 %s910, 1
          %s1656 = smul.addr %s1655, 64
          %s1657 = scalar_lea.vmem [#allocation28], %s1656
          %s1659 = ssub.s32 1024, 1024
          %1660 = vsyncadd %s1654, %s1659
          %s1661 = smul.addr %s124, 16
          %s1662 = smul.addr %s1661, 64
          %s1663 = scalar_lea.hbm %s63, %s1662
          %s1664 = sshll.u32 %s1657, 4
          %s1665 = int_to_ptr.vmem [resolvable:$true] %s1664
          %1670 = dma.hbm_to_vmem [thread:$0]  %s1663, 1024, %s1665, %s1654, 64, 64, 4
        $region144: #{_forward_impl.1} parent=39 // pred_fallthru
          _
        // Predicated region
        $region145: #{_forward_impl.1} parent=39 // pred_check
          %p1671 = pneg %p946
        $region146: #{_forward_impl.1} parent=39 // pred_check_branch
          %1673 = sbr.rel (%p1671) target = $region148
        $region147: #{_forward_impl.1} parent=39 // pred_region
          %p1674 = scmp.lt.s32.totalorder %s124, 2
          %s1675 = scalar_select %p1674, %s124, 2
          %s1676 = scalar_lea.vmem %s65, %s1675
        $region148: #{_forward_impl.1} parent=39 // pred_fallthru
          _
        // Predicated region
        $region149: #{_forward_impl.1} parent=39 // pred_check
          %p1677 = pneg %p972
        $region150: #{_forward_impl.1} parent=39 // pred_check_branch
          %1679 = sbr.rel (%p1677) target = $region152
        $region151: #{_forward_impl.1} parent=39 // pred_region
          %s1680 = sand.u32 %s124, 1
          %s1681 = scalar_lea.sflag [#allocation30], %s1680
          %s1682 = sand.u32 %s962, 1
          %s1683 = smul.addr %s1682, 64
          %s1684 = scalar_lea.vmem [#allocation29], %s1683
          %s1686 = ssub.s32 1024, 1024
          %1687 = vsyncadd %s1681, %s1686
          %s1688 = smul.addr %s124, 16
          %s1689 = smul.addr %s1688, 64
          %s1690 = scalar_lea.hbm %s67, %s1689
          %s1691 = sshll.u32 %s1684, 4
          %s1692 = int_to_ptr.vmem [resolvable:$true] %s1691
          %1697 = dma.hbm_to_vmem [thread:$0]  %s1690, 1024, %s1692, %s1681, 64, 64, 4
        $region152: #{_forward_impl.1} parent=39 // pred_fallthru
          _
        // Predicated region
        $region153: #{_forward_impl.1} parent=39 // pred_check
          %p1698 = pneg %p998
        $region154: #{_forward_impl.1} parent=39 // pred_check_branch
          %1700 = sbr.rel (%p1698) target = $region156
        $region155: #{_forward_impl.1} parent=39 // pred_region
          %p1701 = scmp.lt.s32.totalorder %s124, 2
          %s1702 = scalar_select %p1701, %s124, 2
          %s1703 = smul.addr %s1702, 3
          %s1704 = scalar_lea.vmem %s69, %s1703
        $region156: #{_forward_impl.1} parent=39 // pred_fallthru
          _
        // Predicated region
        $region157: #{_forward_impl.1} parent=39 // pred_check
          %p1705 = pneg %p1024
        $region158: #{_forward_impl.1} parent=39 // pred_check_branch
          %1707 = sbr.rel (%p1705) target = $region160
        $region159: #{_forward_impl.1} parent=39 // pred_region
          %s1708 = sand.u32 %s124, 1
          %s1709 = scalar_lea.sflag [#allocation30], %s1708
          %s1710 = sand.u32 %s1014, 1
          %s1711 = smul.addr %s1710, 192
          %s1712 = scalar_lea.vmem [#allocation31], %s1711
          %s1714 = ssub.s32 3072, 3072
          %1715 = vsyncadd %s1709, %s1714
          %s1716 = smul.addr %s124, 48
          %s1717 = smul.addr %s1716, 64
          %s1718 = scalar_lea.hbm %s71, %s1717
          %s1719 = sshll.u32 %s1712, 4
          %s1720 = int_to_ptr.vmem [resolvable:$true] %s1719
          %1725 = dma.hbm_to_vmem [thread:$0]  %s1718, 3072, %s1720, %s1709, 192, 192, 12
        $region160: #{_forward_impl.1} parent=39 // pred_fallthru
          _
        // Predicated region
        $region161: #{_forward_impl.1} parent=39 // pred_check
          %p1726 = pneg %p1050
        $region162: #{_forward_impl.1} parent=39 // pred_check_branch
          %1728 = sbr.rel (%p1726) target = $region164
        $region163: #{_forward_impl.1} parent=39 // pred_region
          %p1729 = scmp.lt.s32.totalorder %s124, 2
          %s1730 = scalar_select %p1729, %s124, 2
          %s1731 = scalar_lea.vmem %s73, %s1730
        $region164: #{_forward_impl.1} parent=39 // pred_fallthru
          _
        // Predicated region
        $region165: #{_forward_impl.1} parent=39 // pred_check
          %p1732 = pneg %p1076
        $region166: #{_forward_impl.1} parent=39 // pred_check_branch
          %1734 = sbr.rel (%p1732) target = $region168
        $region167: #{_forward_impl.1} parent=39 // pred_region
          %p1735 = scmp.lt.s32.totalorder %s124, 2
          %s1736 = scalar_select %p1735, %s124, 2
          %s1737 = scalar_lea.vmem %s75, %s1736
        $region168: #{_forward_impl.1} parent=39 // pred_fallthru
          _
        // Predicated region
        $region169: #{_forward_impl.1} parent=39 // pred_check
          %p1738 = pneg %p1102
        $region170: #{_forward_impl.1} parent=39 // pred_check_branch
          %1740 = sbr.rel (%p1738) target = $region172
        $region171: #{_forward_impl.1} parent=39 // pred_region
          %p1741 = scmp.lt.s32.totalorder %s124, 2
          %s1742 = scalar_select %p1741, %s124, 2
          %s1743 = scalar_lea.vmem %s77, %s1742
        $region172: #{_forward_impl.1} parent=39 // pred_fallthru
          _
        // Predicated region
        $region173: #{_forward_impl.1} parent=39 // pred_check
          %p1744 = pneg %p1128
        $region174: #{_forward_impl.1} parent=39 // pred_check_branch
          %1746 = sbr.rel (%p1744) target = $region176
        $region175: #{_forward_impl.1} parent=39 // pred_region
          %p1747 = scmp.lt.s32.totalorder %s124, 2
          %s1748 = scalar_select %p1747, %s124, 2
          %s1749 = scalar_lea.vmem %s79, %s1748
        $region176: #{_forward_impl.1} parent=39 // pred_fallthru
          _
        // Predicated region
        $region177: #{_forward_impl.1} parent=39 // pred_check
          %p1750 = pneg %p1154
        $region178: #{_forward_impl.1} parent=39 // pred_check_branch
          %1752 = sbr.rel (%p1750) target = $region180
        $region179: #{_forward_impl.1} parent=39 // pred_region
          %p1753 = scmp.lt.s32.totalorder %s124, 2
          %s1754 = scalar_select %p1753, %s124, 2
          %s1755 = scalar_lea.vmem %s81, %s1754
        $region180: #{_forward_impl.1} parent=39 // pred_fallthru
          _
        // Predicated region
        $region181: #{_forward_impl.1} parent=39 // pred_check
          %p1756 = pneg %p1180
        $region182: #{_forward_impl.1} parent=39 // pred_check_branch
          %1758 = sbr.rel (%p1756) target = $region184
        $region183: #{_forward_impl.1} parent=39 // pred_region
          %s1759 = sand.u32 %s1170, 1
          %s1760 = scalar_lea.sflag [#allocation33], %s1759
          %s1761 = sand.u32 %s1170, 1
          %s1762 = smul.addr %s1761, 64
          %s1763 = scalar_lea.vmem [#allocation32], %s1762
          %s1765 = ssub.s32 1024, 1024
          %1766 = vsyncadd %s1760, %s1765
          %s1767 = smul.addr %s124, 16
          %s1768 = smul.addr %s1767, 64
          %s1769 = scalar_lea.hbm %s83, %s1768
          %s1770 = sshll.u32 %s1763, 4
          %s1771 = int_to_ptr.vmem [resolvable:$true] %s1770
          %1776 = dma.hbm_to_vmem [thread:$0]  %s1769, 1024, %s1771, %s1760, 64, 64, 4
        $region184: #{_forward_impl.1} parent=39 // pred_fallthru
          _
        // Predicated region
        $region185: #{_forward_impl.1} parent=39 // pred_check
          %p1777 = pneg %p1206
        $region186: #{_forward_impl.1} parent=39 // pred_check_branch
          %1779 = sbr.rel (%p1777) target = $region188
        $region187: #{_forward_impl.1} parent=39 // pred_region
          %p1780 = scmp.lt.s32.totalorder %s124, 2
          %s1781 = scalar_select %p1780, %s124, 2
          %s1782 = scalar_lea.vmem %s85, %s1781
        $region188: #{_forward_impl.1} parent=39 // pred_fallthru
          _
        // Predicated region
        $region189: #{_forward_impl.1} parent=39 // pred_check
          %p1783 = pneg %p1232
        $region190: #{_forward_impl.1} parent=39 // pred_check_branch
          %1785 = sbr.rel (%p1783) target = $region192
        $region191: #{_forward_impl.1} parent=39 // pred_region
          %p1786 = scmp.lt.s32.totalorder %s124, 2
          %s1787 = scalar_select %p1786, %s124, 2
          %s1788 = scalar_lea.vmem %s87, %s1787
        $region192: #{_forward_impl.1} parent=39 // pred_fallthru
          _
      $region40: #{_forward_impl.1} parent=5 // pred_fallthru
        _
      %p1789 = scmp.le.s32.totalorder 1, %s124
      %p1790 = scmp.lt.s32.totalorder %s124, 4
      %p1791 = pnand %p1789, %p1790
      %p1792 = pneg %p1791
      // Predicated region
      $region193: #{_forward_impl.1} parent=5 // pred_check
        _
      $region194: #{_forward_impl.1} parent=5 // pred_check_branch
        %1794 = sbr.rel (%p1791) target = $region196
      $region195: #{_forward_impl.1} parent=5 // pred_region
        %s1795 = ssub.s32 %s124, 1
        // Predicated region
        $region197: #{_forward_impl.1} parent=195 // pred_check
          %p1796 = pneg %p166
        $region198: #{_forward_impl.1} parent=195 // pred_check_branch
          %1798 = sbr.rel (%p1796) target = $region200
        $region199: #{_forward_impl.1} parent=195 // pred_region
          %1799 = dma.done [#allocation4], 128
        $region200: #{_forward_impl.1} parent=195 // pred_fallthru
          _
        // Predicated region
        $region201: #{_forward_impl.1} parent=195 // pred_check
          %p1800 = pneg %p229
        $region202: #{_forward_impl.1} parent=195 // pred_check_branch
          %1802 = sbr.rel (%p1800) target = $region204
        $region203: #{_forward_impl.1} parent=195 // pred_region
          %1803 = dma.done [#allocation6], 1024
        $region204: #{_forward_impl.1} parent=195 // pred_fallthru
          _
        // Predicated region
        $region205: #{_forward_impl.1} parent=195 // pred_check
          %p1804 = pneg %p250
        $region206: #{_forward_impl.1} parent=195 // pred_check_branch
          %1806 = sbr.rel (%p1804) target = $region208
        $region207: #{_forward_impl.1} parent=195 // pred_region
          %1807 = dma.done [#allocation6], 16
        $region208: #{_forward_impl.1} parent=195 // pred_fallthru
          _
        %s1808 = sand.u32 %s129, 1
        %s1809 = scalar_lea.sflag [#allocation9], %s1808
        %s1810 = sand.u32 %s263, 1
        %s1811 = scalar_lea.vmem [#allocation8], %s1810
        // Predicated region
        $region209: #{_forward_impl.1} parent=195 // pred_check
          %p1812 = pneg %p276
        $region210: #{_forward_impl.1} parent=195 // pred_check_branch
          %1814 = sbr.rel (%p1812) target = $region212
        $region211: #{_forward_impl.1} parent=195 // pred_region
          %1815 = dma.done %s1809, 16
        $region212: #{_forward_impl.1} parent=195 // pred_fallthru
          _
        %s1816 = sand.u32 %s129, 1
        %s1817 = scalar_lea.sflag [#allocation9], %s1816
        %s1818 = sand.u32 %s289, 1
        %s1819 = smul.addr %s1818, 64
        %s1820 = scalar_lea.vmem [#allocation10], %s1819
        // Predicated region
        $region213: #{_forward_impl.1} parent=195 // pred_check
          %p1821 = pneg %p302
        $region214: #{_forward_impl.1} parent=195 // pred_check_branch
          %1823 = sbr.rel (%p1821) target = $region216
        $region215: #{_forward_impl.1} parent=195 // pred_region
          %1824 = dma.done %s1817, 1024
        $region216: #{_forward_impl.1} parent=195 // pred_fallthru
          _
        %s1825 = sand.u32 %s129, 1
        %s1826 = scalar_lea.sflag [#allocation12], %s1825
        %s1827 = sand.u32 %s315, 1
        %s1828 = smul.addr %s1827, 2
        %s1829 = scalar_lea.vmem [#allocation11], %s1828
        // Predicated region
        $region217: #{_forward_impl.1} parent=195 // pred_check
          %p1830 = pneg %p328
        $region218: #{_forward_impl.1} parent=195 // pred_check_branch
          %1832 = sbr.rel (%p1830) target = $region220
        $region219: #{_forward_impl.1} parent=195 // pred_region
          %1833 = dma.done %s1826, 32
        $region220: #{_forward_impl.1} parent=195 // pred_fallthru
          _
        %s1834 = sand.u32 %s129, 1
        %s1835 = scalar_lea.sflag [#allocation12], %s1834
        %s1836 = sand.u32 %s341, 1
        %s1837 = smul.addr %s1836, 128
        %s1838 = scalar_lea.vmem [#allocation13], %s1837
        // Predicated region
        $region221: #{_forward_impl.1} parent=195 // pred_check
          %p1839 = pneg %p354
        $region222: #{_forward_impl.1} parent=195 // pred_check_branch
          %1841 = sbr.rel (%p1839) target = $region224
        $region223: #{_forward_impl.1} parent=195 // pred_region
          %1842 = dma.done %s1835, 2048
        $region224: #{_forward_impl.1} parent=195 // pred_fallthru
          _
        %s1843 = sand.u32 %s129, 1
        %s1844 = scalar_lea.sflag [#allocation15], %s1843
        %s1845 = sand.u32 %s393, 1
        %s1846 = smul.addr %s1845, 64
        %s1847 = scalar_lea.vmem [#allocation14], %s1846
        // Predicated region
        $region225: #{_forward_impl.1} parent=195 // pred_check
          %p1848 = pneg %p406
        $region226: #{_forward_impl.1} parent=195 // pred_check_branch
          %1850 = sbr.rel (%p1848) target = $region228
        $region227: #{_forward_impl.1} parent=195 // pred_region
          %1851 = dma.done %s1844, 1024
        $region228: #{_forward_impl.1} parent=195 // pred_fallthru
          _
        %s1852 = sand.u32 %s129, 1
        %s1853 = scalar_lea.sflag [#allocation15], %s1852
        %s1854 = sand.u32 %s419, 1
        %s1855 = scalar_lea.vmem [#allocation16], %s1854
        // Predicated region
        $region229: #{_forward_impl.1} parent=195 // pred_check
          %p1856 = pneg %p432
        $region230: #{_forward_impl.1} parent=195 // pred_check_branch
          %1858 = sbr.rel (%p1856) target = $region232
        $region231: #{_forward_impl.1} parent=195 // pred_region
          %1859 = dma.done %s1853, 16
        $region232: #{_forward_impl.1} parent=195 // pred_fallthru
          _
        %s1860 = sand.u32 %s129, 1
        %s1861 = scalar_lea.sflag [#allocation18], %s1860
        %s1862 = sand.u32 %s445, 1
        %s1863 = smul.addr %s1862, 64
        %s1864 = scalar_lea.vmem [#allocation17], %s1863
        // Predicated region
        $region233: #{_forward_impl.1} parent=195 // pred_check
          %p1865 = pneg %p458
        $region234: #{_forward_impl.1} parent=195 // pred_check_branch
          %1867 = sbr.rel (%p1865) target = $region236
        $region235: #{_forward_impl.1} parent=195 // pred_region
          %1868 = dma.done %s1861, 1024
        $region236: #{_forward_impl.1} parent=195 // pred_fallthru
          _
        %s1869 = sand.u32 %s129, 1
        %s1870 = scalar_lea.sflag [#allocation18], %s1869
        %s1871 = sand.u32 %s471, 1
        %s1872 = scalar_lea.vmem [#allocation19], %s1871
        // Predicated region
        $region237: #{_forward_impl.1} parent=195 // pred_check
          %p1873 = pneg %p484
        $region238: #{_forward_impl.1} parent=195 // pred_check_branch
          %1875 = sbr.rel (%p1873) target = $region240
        $region239: #{_forward_impl.1} parent=195 // pred_region
          %1876 = dma.done %s1870, 16
        $region240: #{_forward_impl.1} parent=195 // pred_fallthru
          _
        %s1877 = sand.u32 %s129, 1
        %s1878 = scalar_lea.sflag [#allocation21], %s1877
        %s1879 = sand.u32 %s497, 1
        %s1880 = smul.addr %s1879, 64
        %s1881 = scalar_lea.vmem [#allocation20], %s1880
        // Predicated region
        $region241: #{_forward_impl.1} parent=195 // pred_check
          %p1882 = pneg %p510
        $region242: #{_forward_impl.1} parent=195 // pred_check_branch
          %1884 = sbr.rel (%p1882) target = $region244
        $region243: #{_forward_impl.1} parent=195 // pred_region
          %1885 = dma.done %s1878, 1024
        $region244: #{_forward_impl.1} parent=195 // pred_fallthru
          _
        %s1886 = sand.u32 %s129, 1
        %s1887 = scalar_lea.sflag [#allocation21], %s1886
        %s1888 = sand.u32 %s523, 1
        %s1889 = scalar_lea.vmem [#allocation22], %s1888
        // Predicated region
        $region245: #{_forward_impl.1} parent=195 // pred_check
          %p1890 = pneg %p536
        $region246: #{_forward_impl.1} parent=195 // pred_check_branch
          %1892 = sbr.rel (%p1890) target = $region248
        $region247: #{_forward_impl.1} parent=195 // pred_region
          %1893 = dma.done %s1887, 16
        $region248: #{_forward_impl.1} parent=195 // pred_fallthru
          _
        %s1894 = sand.u32 %s129, 1
        %s1895 = scalar_lea.sflag [#allocation24], %s1894
        %s1896 = sand.u32 %s549, 1
        %s1897 = smul.addr %s1896, 64
        %s1898 = scalar_lea.vmem [#allocation23], %s1897
        // Predicated region
        $region249: #{_forward_impl.1} parent=195 // pred_check
          %p1899 = pneg %p562
        $region250: #{_forward_impl.1} parent=195 // pred_check_branch
          %1901 = sbr.rel (%p1899) target = $region252
        $region251: #{_forward_impl.1} parent=195 // pred_region
          %1902 = dma.done %s1895, 1024
        $region252: #{_forward_impl.1} parent=195 // pred_fallthru
          _
        %s1903 = sand.u32 %s129, 1
        %s1904 = scalar_lea.sflag [#allocation24], %s1903
        %s1905 = sand.u32 %s757, 1
        %s1906 = smul.addr %s1905, 192
        %s1907 = scalar_lea.vmem [#allocation25], %s1906
        // Predicated region
        $region253: #{_forward_impl.1} parent=195 // pred_check
          %p1908 = pneg %p770
        $region254: #{_forward_impl.1} parent=195 // pred_check_branch
          %1910 = sbr.rel (%p1908) target = $region256
        $region255: #{_forward_impl.1} parent=195 // pred_region
          %1911 = dma.done %s1904, 3072
        $region256: #{_forward_impl.1} parent=195 // pred_fallthru
          _
        %s1912 = sand.u32 %s129, 1
        %s1913 = scalar_lea.sflag [#allocation27], %s1912
        %s1914 = sand.u32 %s809, 1
        %s1915 = smul.addr %s1914, 64
        %s1916 = scalar_lea.vmem [#allocation26], %s1915
        // Predicated region
        $region257: #{_forward_impl.1} parent=195 // pred_check
          %p1917 = pneg %p822
        $region258: #{_forward_impl.1} parent=195 // pred_check_branch
          %1919 = sbr.rel (%p1917) target = $region260
        $region259: #{_forward_impl.1} parent=195 // pred_region
          %1920 = dma.done %s1913, 1024
        $region260: #{_forward_impl.1} parent=195 // pred_fallthru
          _
        %s1921 = sand.u32 %s129, 1
        %s1922 = scalar_lea.sflag [#allocation27], %s1921
        %s1923 = sand.u32 %s913, 1
        %s1924 = smul.addr %s1923, 64
        %s1925 = scalar_lea.vmem [#allocation28], %s1924
        // Predicated region
        $region261: #{_forward_impl.1} parent=195 // pred_check
          %p1926 = pneg %p926
        $region262: #{_forward_impl.1} parent=195 // pred_check_branch
          %1928 = sbr.rel (%p1926) target = $region264
        $region263: #{_forward_impl.1} parent=195 // pred_region
          %1929 = dma.done %s1922, 1024
        $region264: #{_forward_impl.1} parent=195 // pred_fallthru
          _
        %s1930 = sand.u32 %s129, 1
        %s1931 = scalar_lea.sflag [#allocation30], %s1930
        %s1932 = sand.u32 %s965, 1
        %s1933 = smul.addr %s1932, 64
        %s1934 = scalar_lea.vmem [#allocation29], %s1933
        // Predicated region
        $region265: #{_forward_impl.1} parent=195 // pred_check
          %p1935 = pneg %p978
        $region266: #{_forward_impl.1} parent=195 // pred_check_branch
          %1937 = sbr.rel (%p1935) target = $region268
        $region267: #{_forward_impl.1} parent=195 // pred_region
          %1938 = dma.done %s1931, 1024
        $region268: #{_forward_impl.1} parent=195 // pred_fallthru
          _
        %s1939 = sand.u32 %s129, 1
        %s1940 = scalar_lea.sflag [#allocation30], %s1939
        %s1941 = sand.u32 %s1017, 1
        %s1942 = smul.addr %s1941, 192
        %s1943 = scalar_lea.vmem [#allocation31], %s1942
        // Predicated region
        $region269: #{_forward_impl.1} parent=195 // pred_check
          %p1944 = pneg %p1030
        $region270: #{_forward_impl.1} parent=195 // pred_check_branch
          %1946 = sbr.rel (%p1944) target = $region272
        $region271: #{_forward_impl.1} parent=195 // pred_region
          %1947 = dma.done %s1940, 3072
        $region272: #{_forward_impl.1} parent=195 // pred_fallthru
          _
        %s1948 = sand.u32 %s1173, 1
        %s1949 = scalar_lea.sflag [#allocation33], %s1948
        %s1950 = sand.u32 %s1173, 1
        %s1951 = smul.addr %s1950, 64
        %s1952 = scalar_lea.vmem [#allocation32], %s1951
        // Predicated region
        $region273: #{_forward_impl.1} parent=195 // pred_check
          %p1953 = pneg %p1186
        $region274: #{_forward_impl.1} parent=195 // pred_check_branch
          %1955 = sbr.rel (%p1953) target = $region276
        $region275: #{_forward_impl.1} parent=195 // pred_region
          %1956 = dma.done %s1949, 1024
        $region276: #{_forward_impl.1} parent=195 // pred_fallthru
          _
        %p1957 = pneg %p145
        %p1958 = pneg %p142
        %p1959 = pneg %p166
        %p1960 = pneg %p163
        %p1961 = pneg %p187
        %p1962 = pneg %p184
        %p1963 = pneg %p208
        %p1964 = pneg %p205
        %p1965 = pneg %p229
        %p1966 = pneg %p226
        %p1967 = pneg %p250
        %p1968 = pneg %p247
        %s1969 = sand.u32 %s129, 1
        %s1970 = scalar_lea.sflag [#allocation9], %s1969
        %s1971 = sand.u32 %s263, 1
        %s1972 = scalar_lea.vmem [#allocation8], %s1971
        %p1973 = pneg %p276
        %p1974 = pneg %p273
        %s1975 = sand.u32 %s129, 1
        %s1976 = scalar_lea.sflag [#allocation9], %s1975
        %s1977 = sand.u32 %s289, 1
        %s1978 = smul.addr %s1977, 64
        %s1979 = scalar_lea.vmem [#allocation10], %s1978
        %p1980 = pneg %p302
        %p1981 = pneg %p299
        %s1982 = sand.u32 %s129, 1
        %s1983 = scalar_lea.sflag [#allocation12], %s1982
        %s1984 = sand.u32 %s315, 1
        %s1985 = smul.addr %s1984, 2
        %s1986 = scalar_lea.vmem [#allocation11], %s1985
        %p1987 = pneg %p328
        %p1988 = pneg %p325
        %s1989 = sand.u32 %s129, 1
        %s1990 = scalar_lea.sflag [#allocation12], %s1989
        %s1991 = sand.u32 %s341, 1
        %s1992 = smul.addr %s1991, 128
        %s1993 = scalar_lea.vmem [#allocation13], %s1992
        %p1994 = pneg %p354
        %p1995 = pneg %p351
        %p1996 = scmp.lt.s32.totalorder %s129, 2
        %s1997 = scalar_select %p1996, %s129, 2
        %s1998 = scalar_lea.vmem %s21, %s1997
        %p1999 = pneg %p380
        %p2000 = pneg %p377
        %s2001 = sand.u32 %s129, 1
        %s2002 = scalar_lea.sflag [#allocation15], %s2001
        %s2003 = sand.u32 %s393, 1
        %s2004 = smul.addr %s2003, 64
        %s2005 = scalar_lea.vmem [#allocation14], %s2004
        %p2006 = pneg %p406
        %p2007 = pneg %p403
        %s2008 = sand.u32 %s129, 1
        %s2009 = scalar_lea.sflag [#allocation15], %s2008
        %s2010 = sand.u32 %s419, 1
        %s2011 = scalar_lea.vmem [#allocation16], %s2010
        %p2012 = pneg %p432
        %p2013 = pneg %p429
        %s2014 = sand.u32 %s129, 1
        %s2015 = scalar_lea.sflag [#allocation18], %s2014
        %s2016 = sand.u32 %s445, 1
        %s2017 = smul.addr %s2016, 64
        %s2018 = scalar_lea.vmem [#allocation17], %s2017
        %p2019 = pneg %p458
        %p2020 = pneg %p455
        %s2021 = sand.u32 %s129, 1
        %s2022 = scalar_lea.sflag [#allocation18], %s2021
        %s2023 = sand.u32 %s471, 1
        %s2024 = scalar_lea.vmem [#allocation19], %s2023
        %p2025 = pneg %p484
        %p2026 = pneg %p481
        %s2027 = sand.u32 %s129, 1
        %s2028 = scalar_lea.sflag [#allocation21], %s2027
        %s2029 = sand.u32 %s497, 1
        %s2030 = smul.addr %s2029, 64
        %s2031 = scalar_lea.vmem [#allocation20], %s2030
        %p2032 = pneg %p510
        %p2033 = pneg %p507
        %s2034 = sand.u32 %s129, 1
        %s2035 = scalar_lea.sflag [#allocation21], %s2034
        %s2036 = sand.u32 %s523, 1
        %s2037 = scalar_lea.vmem [#allocation22], %s2036
        %p2038 = pneg %p536
        %p2039 = pneg %p533
        %s2040 = sand.u32 %s129, 1
        %s2041 = scalar_lea.sflag [#allocation24], %s2040
        %s2042 = sand.u32 %s549, 1
        %s2043 = smul.addr %s2042, 64
        %s2044 = scalar_lea.vmem [#allocation23], %s2043
        %p2045 = pneg %p562
        %p2046 = pneg %p559
        %p2047 = scmp.lt.s32.totalorder %s129, 2
        %s2048 = scalar_select %p2047, %s129, 2
        %s2049 = scalar_lea.vmem %s37, %s2048
        %p2050 = pneg %p588
        %p2051 = pneg %p585
        %p2052 = scmp.lt.s32.totalorder %s129, 2
        %s2053 = scalar_select %p2052, %s129, 2
        %s2054 = scalar_lea.vmem %s39, %s2053
        %p2055 = pneg %p614
        %p2056 = pneg %p611
        %p2057 = scmp.lt.s32.totalorder %s129, 2
        %s2058 = scalar_select %p2057, %s129, 2
        %s2059 = scalar_lea.vmem %s41, %s2058
        %p2060 = pneg %p640
        %p2061 = pneg %p637
        %p2062 = scmp.lt.s32.totalorder %s129, 2
        %s2063 = scalar_select %p2062, %s129, 2
        %s2064 = scalar_lea.vmem %s43, %s2063
        %p2065 = pneg %p666
        %p2066 = pneg %p663
        %p2067 = scmp.lt.s32.totalorder %s129, 2
        %s2068 = scalar_select %p2067, %s129, 2
        %s2069 = scalar_lea.vmem %s45, %s2068
        %p2070 = pneg %p692
        %p2071 = pneg %p689
        %p2072 = scmp.lt.s32.totalorder %s129, 2
        %s2073 = scalar_select %p2072, %s129, 2
        %s2074 = scalar_lea.vmem %s47, %s2073
        %p2075 = pneg %p718
        %p2076 = pneg %p715
        %p2077 = scmp.lt.s32.totalorder %s129, 2
        %s2078 = scalar_select %p2077, %s129, 2
        %s2079 = smul.addr %s2078, 3
        %s2080 = scalar_lea.vmem %s49, %s2079
        %p2081 = pneg %p744
        %p2082 = pneg %p741
        %s2083 = sand.u32 %s129, 1
        %s2084 = scalar_lea.sflag [#allocation24], %s2083
        %s2085 = sand.u32 %s757, 1
        %s2086 = smul.addr %s2085, 192
        %s2087 = scalar_lea.vmem [#allocation25], %s2086
        %p2088 = pneg %p770
        %p2089 = pneg %p767
        %p2090 = scmp.lt.s32.totalorder %s129, 2
        %s2091 = scalar_select %p2090, %s129, 2
        %s2092 = scalar_lea.vmem %s53, %s2091
        %p2093 = pneg %p796
        %p2094 = pneg %p793
        %s2095 = sand.u32 %s129, 1
        %s2096 = scalar_lea.sflag [#allocation27], %s2095
        %s2097 = sand.u32 %s809, 1
        %s2098 = smul.addr %s2097, 64
        %s2099 = scalar_lea.vmem [#allocation26], %s2098
        %p2100 = pneg %p822
        %p2101 = pneg %p819
        %p2102 = scmp.lt.s32.totalorder %s129, 2
        %s2103 = scalar_select %p2102, %s129, 2
        %s2104 = scalar_lea.vmem %s57, %s2103
        %p2105 = pneg %p848
        %p2106 = pneg %p845
        %p2107 = scmp.lt.s32.totalorder %s129, 2
        %s2108 = scalar_select %p2107, %s129, 2
        %s2109 = scalar_lea.vmem %s59, %s2108
        %p2110 = pneg %p874
        %p2111 = pneg %p871
        %p2112 = scmp.lt.s32.totalorder %s129, 2
        %s2113 = scalar_select %p2112, %s129, 2
        %s2114 = scalar_lea.vmem %s61, %s2113
        %p2115 = pneg %p900
        %p2116 = pneg %p897
        %s2117 = sand.u32 %s129, 1
        %s2118 = scalar_lea.sflag [#allocation27], %s2117
        %s2119 = sand.u32 %s913, 1
        %s2120 = smul.addr %s2119, 64
        %s2121 = scalar_lea.vmem [#allocation28], %s2120
        %p2122 = pneg %p926
        %p2123 = pneg %p923
        %p2124 = scmp.lt.s32.totalorder %s129, 2
        %s2125 = scalar_select %p2124, %s129, 2
        %s2126 = scalar_lea.vmem %s65, %s2125
        %p2127 = pneg %p952
        %p2128 = pneg %p949
        %s2129 = sand.u32 %s129, 1
        %s2130 = scalar_lea.sflag [#allocation30], %s2129
        %s2131 = sand.u32 %s965, 1
        %s2132 = smul.addr %s2131, 64
        %s2133 = scalar_lea.vmem [#allocation29], %s2132
        %p2134 = pneg %p978
        %p2135 = pneg %p975
        %p2136 = scmp.lt.s32.totalorder %s129, 2
        %s2137 = scalar_select %p2136, %s129, 2
        %s2138 = smul.addr %s2137, 3
        %s2139 = scalar_lea.vmem %s69, %s2138
        %p2140 = pneg %p1004
        %p2141 = pneg %p1001
        %s2142 = sand.u32 %s129, 1
        %s2143 = scalar_lea.sflag [#allocation30], %s2142
        %s2144 = sand.u32 %s1017, 1
        %s2145 = smul.addr %s2144, 192
        %s2146 = scalar_lea.vmem [#allocation31], %s2145
        %p2147 = pneg %p1030
        %p2148 = pneg %p1027
        %p2149 = scmp.lt.s32.totalorder %s129, 2
        %s2150 = scalar_select %p2149, %s129, 2
        %s2151 = scalar_lea.vmem %s73, %s2150
        %p2152 = pneg %p1056
        %p2153 = pneg %p1053
        %p2154 = scmp.lt.s32.totalorder %s129, 2
        %s2155 = scalar_select %p2154, %s129, 2
        %s2156 = scalar_lea.vmem %s75, %s2155
        %p2157 = pneg %p1082
        %p2158 = pneg %p1079
        %p2159 = scmp.lt.s32.totalorder %s129, 2
        %s2160 = scalar_select %p2159, %s129, 2
        %s2161 = scalar_lea.vmem %s77, %s2160
        %p2162 = pneg %p1108
        %p2163 = pneg %p1105
        %p2164 = scmp.lt.s32.totalorder %s129, 2
        %s2165 = scalar_select %p2164, %s129, 2
        %s2166 = scalar_lea.vmem %s79, %s2165
        %p2167 = pneg %p1134
        %p2168 = pneg %p1131
        %p2169 = scmp.lt.s32.totalorder %s129, 2
        %s2170 = scalar_select %p2169, %s129, 2
        %s2171 = scalar_lea.vmem %s81, %s2170
        %p2172 = pneg %p1160
        %p2173 = pneg %p1157
        %s2174 = sand.u32 %s1173, 1
        %s2175 = scalar_lea.sflag [#allocation33], %s2174
        %s2176 = sand.u32 %s1173, 1
        %s2177 = smul.addr %s2176, 64
        %s2178 = scalar_lea.vmem [#allocation32], %s2177
        %p2179 = pneg %p1186
        %p2180 = pneg %p1183
        %p2181 = scmp.lt.s32.totalorder %s129, 2
        %s2182 = scalar_select %p2181, %s129, 2
        %s2183 = scalar_lea.vmem %s85, %s2182
        %p2184 = pneg %p1212
        %p2185 = pneg %p1209
        %p2186 = scmp.lt.s32.totalorder %s129, 2
        %s2187 = scalar_select %p2186, %s129, 2
        %s2188 = scalar_lea.vmem %s87, %s2187
        %p2189 = pneg %p1238
        %p2190 = pneg %p1235
        %p2191 = pneg %p1259
        %p2192 = pneg %p1256
        %p2193 = scmp.lt.s32.totalorder %s129, 2
        %s2194 = scalar_select %p2193, %s129, 2
        %s2195 = scalar_lea.vmem %s21, %s2194
        %p2196 = scmp.lt.s32.totalorder %s129, 2
        %s2197 = scalar_select %p2196, %s129, 2
        %s2198 = scalar_lea.vmem %s37, %s2197
        %p2199 = scmp.lt.s32.totalorder %s129, 2
        %s2200 = scalar_select %p2199, %s129, 2
        %s2201 = scalar_lea.vmem %s39, %s2200
        %p2202 = scmp.lt.s32.totalorder %s129, 2
        %s2203 = scalar_select %p2202, %s129, 2
        %s2204 = scalar_lea.vmem %s41, %s2203
        %p2205 = scmp.lt.s32.totalorder %s129, 2
        %s2206 = scalar_select %p2205, %s129, 2
        %s2207 = scalar_lea.vmem %s43, %s2206
        %p2208 = scmp.lt.s32.totalorder %s129, 2
        %s2209 = scalar_select %p2208, %s129, 2
        %s2210 = scalar_lea.vmem %s45, %s2209
        %p2211 = scmp.lt.s32.totalorder %s129, 2
        %s2212 = scalar_select %p2211, %s129, 2
        %s2213 = scalar_lea.vmem %s47, %s2212
        %p2214 = scmp.lt.s32.totalorder %s129, 2
        %s2215 = scalar_select %p2214, %s129, 2
        %s2216 = smul.addr %s2215, 3
        %s2217 = scalar_lea.vmem %s49, %s2216
        %p2218 = scmp.lt.s32.totalorder %s129, 2
        %s2219 = scalar_select %p2218, %s129, 2
        %s2220 = scalar_lea.vmem %s53, %s2219
        %p2221 = scmp.lt.s32.totalorder %s129, 2
        %s2222 = scalar_select %p2221, %s129, 2
        %s2223 = scalar_lea.vmem %s57, %s2222
        %p2224 = scmp.lt.s32.totalorder %s129, 2
        %s2225 = scalar_select %p2224, %s129, 2
        %s2226 = scalar_lea.vmem %s59, %s2225
        %p2227 = scmp.lt.s32.totalorder %s129, 2
        %s2228 = scalar_select %p2227, %s129, 2
        %s2229 = scalar_lea.vmem %s61, %s2228
        %p2230 = scmp.lt.s32.totalorder %s129, 2
        %s2231 = scalar_select %p2230, %s129, 2
        %s2232 = scalar_lea.vmem %s65, %s2231
        %p2233 = scmp.lt.s32.totalorder %s129, 2
        %s2234 = scalar_select %p2233, %s129, 2
        %s2235 = smul.addr %s2234, 3
        %s2236 = scalar_lea.vmem %s69, %s2235
        %p2237 = scmp.lt.s32.totalorder %s129, 2
        %s2238 = scalar_select %p2237, %s129, 2
        %s2239 = scalar_lea.vmem %s73, %s2238
        %p2240 = scmp.lt.s32.totalorder %s129, 2
        %s2241 = scalar_select %p2240, %s129, 2
        %s2242 = scalar_lea.vmem %s75, %s2241
        %p2243 = scmp.lt.s32.totalorder %s129, 2
        %s2244 = scalar_select %p2243, %s129, 2
        %s2245 = scalar_lea.vmem %s77, %s2244
        %p2246 = scmp.lt.s32.totalorder %s129, 2
        %s2247 = scalar_select %p2246, %s129, 2
        %s2248 = scalar_lea.vmem %s79, %s2247
        %p2249 = scmp.lt.s32.totalorder %s129, 2
        %s2250 = scalar_select %p2249, %s129, 2
        %s2251 = scalar_lea.vmem %s81, %s2250
        %p2252 = scmp.lt.s32.totalorder %s129, 2
        %s2253 = scalar_select %p2252, %s129, 2
        %s2254 = scalar_lea.vmem %s85, %s2253
        %p2255 = scmp.lt.s32.totalorder %s129, 2
        %s2256 = scalar_select %p2255, %s129, 2
        %s2257 = scalar_lea.vmem %s87, %s2256
        %p2259 = scmp.eq.s32.totalorder %s129, 0
        // Predicated region
        $region277: #{_forward_impl.1} parent=195 // pred_check
          %p2260 = pneg %p2259
        $region278: #{_forward_impl.1} parent=195 // pred_check_branch
          %2262 = sbr.rel (%p2260) target = $region280
        $region279: #{_forward_impl.1} parent=195 // pred_region
          %v2263 = vld [vmem:[%s1] sm:$0xff]
          %v2264 = vpack.c.bf16 %v2263, %v2263
          %v2265 = vld [vmem:[%s5] sm:$0xf]
          %v2266 = vld [vmem:[%s5 + $0x4] sm:$0xf]
          %v2267 = vld [vmem:[%s5 + $0x8] sm:$0xf]
          %v2268 = vld [vmem:[%s5 + $0xc] sm:$0xf]
          %v2269 = vld [vmem:[%s5 + $0x10] sm:$0x1]
          %v2270 = vld [vmem:[%s7] sm:$0x1]
          %v2272 = vlaneseq
          %v2273 = vshrl.u32 %v2272, 7
          %v2274 = vsub.s32 0, %v2273
          %v2275 = vrot.slane %v2270, %v2274
          %v2282 = vunpack.c.l.b16 %v2265
          %v2283 = vunpack.c.l.b16 %v2266
          %v2284 = vunpack.c.l.b16 %v2267
          %v2285 = vunpack.c.l.b16 %v2268
          %v2286 = vunpack.c.l.b16 %v2269
          %v2287 = vpack.c.b16 %v2283, %v2282
          %v2288 = vpack.c.b16 %v2285, %v2284
          %v2289 = vpack.c.b16 %v2286, %v2286
          %vm2292 = vcmask 277504
          %v2294 = vsel %vm2292, %v2264, 0
          %vm2296 = vcmask 1040384
          %v2298 = vsel %vm2296, %v2289, 0
          %2300 = vmatprep.subr.bf16.mxu0 0
          %2301 = vmatpush1.bf16.msra.mxu0 %v2287
          %2302 = vmatprep.subr.bf16.mxu0 0
          %2303 = vmatpush1.bf16.msra.mxu0 %v2288
          %2304 = vmatprep.subr.bf16.mxu0 0
          %2305 = vmatpush1.bf16.msra.mxu0 %v2298
          %2306 = vmatprep.subr.bf16.mxu0 0
          %2307 = vmatpush1.bf16.msra.mxu0 0
          %2308 = vmatprep.subr.bf16.mxu0 0
          %2309 = vmatpush1.bf16.msra.mxu0 0
          %2310 = vmatprep.subr.bf16.mxu0 0
          %2311 = vmatpush1.bf16.msra.mxu0 0
          %2312 = vmatprep.subr.bf16.mxu0 0
          %2313 = vmatpush1.bf16.msra.mxu0 0
          %2314 = vmatprep.subr.bf16.mxu0 0
          %2315 = vmatpush1.bf16.msra.mxu0 0
          %2316 = vmatprep.subr.bf16.mxu0 0
          %2317 = vmatpush1.bf16.msra.mxu0 0
          %2318 = vmatprep.subr.bf16.mxu0 0
          %2319 = vmatpush1.bf16.msra.mxu0 0
          %2320 = vmatprep.subr.bf16.mxu0 0
          %2321 = vmatpush1.bf16.msra.mxu0 0
          %2322 = vmatprep.subr.bf16.mxu0 0
          %2323 = vmatpush1.bf16.msra.mxu0 0
          %2324 = vmatprep.subr.bf16.mxu0 0
          %2325 = vmatpush1.bf16.msra.mxu0 0
          %2326 = vmatprep.subr.bf16.mxu0 0
          %2327 = vmatpush1.bf16.msra.mxu0 0
          %2328 = vmatprep.subr.bf16.mxu0 0
          %2329 = vmatpush1.bf16.msra.mxu0 0
          %2330 = vmatprep.subr.bf16.mxu0 0
          %2331 = vmatpush1.bf16.msra.mxu0 0
          %2332 = vmatprep.mubr.bf16.mxu0 0
          %2333 = vmatmul.mubr.bf16.gmra.mrb[0].mxu0 %v2294
          %v2334 = vpop.f32.mrb[0].mxu0
          %v2335 = vadd.f32 %v2275, %v2334
          %v2336 = vpop.f32.mrb[0].mxu0
          %v2337 = vpop.f32.mrb[0].mxu0
          %v2338 = vpop.f32.mrb[0].mxu0
          %2339 = vdwg.mxu0
          %v2340 = vmax.f32 %v2335, 0.0
          %2341 = vst [vmem:[#allocation2] sm:$0xff] %v2340
        $region280: #{_forward_impl.1} parent=195 // pred_fallthru
          _
        %v2342 = vld [vmem:[#allocation2] sm:$0xff]
        %v2343 = vld [vmem:[#allocation3] sm:$0xff]
        %v2344 = vpack.c.bf16 %v2342, %v2342
        %v2345 = vld [vmem:[%s1820] sm:$0xf]
        %v2346 = vld [vmem:[%s1820 + $0x4] sm:$0xf]
        %v2347 = vld [vmem:[%s1820 + $0x8] sm:$0xf]
        %v2348 = vld [vmem:[%s1820 + $0xc] sm:$0xf]
        %v2349 = vld [vmem:[%s1820 + $0x10] sm:$0xf]
        %v2350 = vld [vmem:[%s1820 + $0x14] sm:$0xf]
        %v2351 = vld [vmem:[%s1820 + $0x18] sm:$0xf]
        %v2352 = vld [vmem:[%s1820 + $0x1c] sm:$0xf]
        %v2353 = vld [vmem:[%s1820 + $0x20] sm:$0xf]
        %v2354 = vld [vmem:[%s1820 + $0x24] sm:$0xf]
        %v2355 = vld [vmem:[%s1820 + $0x28] sm:$0xf]
        %v2356 = vld [vmem:[%s1820 + $0x2c] sm:$0xf]
        %v2357 = vld [vmem:[%s1820 + $0x30] sm:$0xf]
        %v2358 = vld [vmem:[%s1820 + $0x34] sm:$0xf]
        %v2359 = vld [vmem:[%s1820 + $0x38] sm:$0xf]
        %v2360 = vld [vmem:[%s1820 + $0x3c] sm:$0xf]
        %v2361 = vld [vmem:[%s1811] sm:$0x1]
        %v2363 = vlaneseq
        %v2364 = vshrl.u32 %v2363, 7
        %v2365 = vsub.s32 0, %v2364
        %v2366 = vrot.slane %v2361, %v2365
        %v2384 = vunpack.c.l.b16 %v2345
        %v2385 = vunpack.c.l.b16 %v2346
        %v2386 = vunpack.c.l.b16 %v2347
        %v2387 = vunpack.c.l.b16 %v2348
        %v2388 = vunpack.c.l.b16 %v2349
        %v2389 = vunpack.c.l.b16 %v2350
        %v2390 = vunpack.c.l.b16 %v2351
        %v2391 = vunpack.c.l.b16 %v2352
        %v2392 = vunpack.c.l.b16 %v2353
        %v2393 = vunpack.c.l.b16 %v2354
        %v2394 = vunpack.c.l.b16 %v2355
        %v2395 = vunpack.c.l.b16 %v2356
        %v2396 = vunpack.c.l.b16 %v2357
        %v2397 = vunpack.c.l.b16 %v2358
        %v2398 = vunpack.c.l.b16 %v2359
        %v2399 = vunpack.c.l.b16 %v2360
        %v2400 = vpack.c.b16 %v2385, %v2384
        %v2401 = vpack.c.b16 %v2387, %v2386
        %v2402 = vpack.c.b16 %v2389, %v2388
        %v2403 = vpack.c.b16 %v2391, %v2390
        %v2404 = vpack.c.b16 %v2393, %v2392
        %v2405 = vpack.c.b16 %v2395, %v2394
        %v2406 = vpack.c.b16 %v2397, %v2396
        %v2407 = vpack.c.b16 %v2399, %v2398
        %2416 = vmatprep.subr.bf16.mxu0 0
        %2417 = vmatpush1.bf16.msra.mxu0 %v2400
        %2418 = vmatprep.subr.bf16.mxu0 0
        %2419 = vmatpush1.bf16.msra.mxu0 %v2401
        %2420 = vmatprep.subr.bf16.mxu0 0
        %2421 = vmatpush1.bf16.msra.mxu0 %v2402
        %2422 = vmatprep.subr.bf16.mxu0 0
        %2423 = vmatpush1.bf16.msra.mxu0 %v2403
        %2424 = vmatprep.subr.bf16.mxu0 0
        %2425 = vmatpush1.bf16.msra.mxu0 %v2404
        %2426 = vmatprep.subr.bf16.mxu0 0
        %2427 = vmatpush1.bf16.msra.mxu0 %v2405
        %2428 = vmatprep.subr.bf16.mxu0 0
        %2429 = vmatpush1.bf16.msra.mxu0 %v2406
        %2430 = vmatprep.subr.bf16.mxu0 0
        %2431 = vmatpush1.bf16.msra.mxu0 %v2407
        %2432 = vmatprep.subr.bf16.mxu0 0
        %2433 = vmatpush1.bf16.msra.mxu0 0
        %2434 = vmatprep.subr.bf16.mxu0 0
        %2435 = vmatpush1.bf16.msra.mxu0 0
        %2436 = vmatprep.subr.bf16.mxu0 0
        %2437 = vmatpush1.bf16.msra.mxu0 0
        %2438 = vmatprep.subr.bf16.mxu0 0
        %2439 = vmatpush1.bf16.msra.mxu0 0
        %2440 = vmatprep.subr.bf16.mxu0 0
        %2441 = vmatpush1.bf16.msra.mxu0 0
        %2442 = vmatprep.subr.bf16.mxu0 0
        %2443 = vmatpush1.bf16.msra.mxu0 0
        %2444 = vmatprep.subr.bf16.mxu0 0
        %2445 = vmatpush1.bf16.msra.mxu0 0
        %2446 = vmatprep.subr.bf16.mxu0 0
        %2447 = vmatpush1.bf16.msra.mxu0 0
        %2448 = vmatprep.mubr.bf16.mxu0 0
        %2449 = vmatmul.mubr.bf16.gmra.mrb[0].mxu0 %v2344
        %v2450 = vpop.f32.mrb[0].mxu0
        %v2451 = vadd.f32 %v2366, %v2450
        %v2452 = vpop.f32.mrb[0].mxu0
        %v2453 = vpop.f32.mrb[0].mxu0
        %v2454 = vpop.f32.mrb[0].mxu0
        %2455 = vdwg.mxu0
        %v2456 = vmax.f32 %v2451, 0.0
        %v2457 = vadd.f32 %v2342, %v2343
        %v2458 = vadd.f32 %v2456, %v2343
        %v2459 = vld [vmem:[%s1943] sm:$0xff]
        %v2460 = vld [vmem:[%s1943 + $0x8] sm:$0xf]
        %v2461 = vld [vmem:[%s1943 + $0xc] sm:$0xff]
        %v2462 = vld [vmem:[%s1943 + $0x14] sm:$0xf]
        %v2463 = vld [vmem:[%s1943 + $0x18] sm:$0xff]
        %v2464 = vld [vmem:[%s1943 + $0x20] sm:$0xf]
        %v2465 = vld [vmem:[%s1943 + $0x24] sm:$0xff]
        %v2466 = vld [vmem:[%s1943 + $0x2c] sm:$0xf]
        %v2467 = vld [vmem:[%s1943 + $0x30] sm:$0xff]
        %v2468 = vld [vmem:[%s1943 + $0x38] sm:$0xf]
        %v2469 = vld [vmem:[%s1943 + $0x3c] sm:$0xff]
        %v2470 = vld [vmem:[%s1943 + $0x44] sm:$0xf]
        %v2471 = vld [vmem:[%s1943 + $0x48] sm:$0xff]
        %v2472 = vld [vmem:[%s1943 + $0x50] sm:$0xf]
        %v2473 = vld [vmem:[%s1943 + $0x54] sm:$0xff]
        %v2474 = vld [vmem:[%s1943 + $0x5c] sm:$0xf]
        %v2475 = vld [vmem:[%s1943 + $0x60] sm:$0xff]
        %v2476 = vld [vmem:[%s1943 + $0x68] sm:$0xf]
        %v2477 = vld [vmem:[%s1943 + $0x6c] sm:$0xff]
        %v2478 = vld [vmem:[%s1943 + $0x74] sm:$0xf]
        %v2479 = vld [vmem:[%s1943 + $0x78] sm:$0xff]
        %v2480 = vld [vmem:[%s1943 + $0x80] sm:$0xf]
        %v2481 = vld [vmem:[%s1943 + $0x84] sm:$0xff]
        %v2482 = vld [vmem:[%s1943 + $0x8c] sm:$0xf]
        %v2483 = vld [vmem:[%s1943 + $0x90] sm:$0xff]
        %v2484 = vld [vmem:[%s1943 + $0x98] sm:$0xf]
        %v2485 = vld [vmem:[%s1943 + $0x9c] sm:$0xff]
        %v2486 = vld [vmem:[%s1943 + $0xa4] sm:$0xf]
        %v2487 = vld [vmem:[%s1943 + $0xa8] sm:$0xff]
        %v2488 = vld [vmem:[%s1943 + $0xb0] sm:$0xf]
        %v2489 = vld [vmem:[%s1943 + $0xb4] sm:$0xff]
        %v2490 = vld [vmem:[%s1943 + $0xbc] sm:$0xf]
        %v2491 = vld [vmem:[%s2236] sm:$0x7]
        %v2492 = vld [vmem:[%s1952] sm:$0xf]
        %v2493 = vld [vmem:[%s1952 + $0x4] sm:$0xf]
        %v2494 = vld [vmem:[%s1952 + $0x8] sm:$0xf]
        %v2495 = vld [vmem:[%s1952 + $0xc] sm:$0xf]
        %v2496 = vld [vmem:[%s1952 + $0x10] sm:$0xf]
        %v2497 = vld [vmem:[%s1952 + $0x14] sm:$0xf]
        %v2498 = vld [vmem:[%s1952 + $0x18] sm:$0xf]
        %v2499 = vld [vmem:[%s1952 + $0x1c] sm:$0xf]
        %v2500 = vld [vmem:[%s1952 + $0x20] sm:$0xf]
        %v2501 = vld [vmem:[%s1952 + $0x24] sm:$0xf]
        %v2502 = vld [vmem:[%s1952 + $0x28] sm:$0xf]
        %v2503 = vld [vmem:[%s1952 + $0x2c] sm:$0xf]
        %v2504 = vld [vmem:[%s1952 + $0x30] sm:$0xf]
        %v2505 = vld [vmem:[%s1952 + $0x34] sm:$0xf]
        %v2506 = vld [vmem:[%s1952 + $0x38] sm:$0xf]
        %v2507 = vld [vmem:[%s1952 + $0x3c] sm:$0xf]
        %v2508 = vld [vmem:[%s2251] sm:$0x1]
        %v2509 = vpack.c.bf16 %v2457, %v2457
        %v2511 = vlaneseq
        %v2512 = vshrl.u32 %v2511, 7
        %v2513 = vsub.s32 0, %v2512
        %v2514 = vrot.slane %v2491, %v2513
        %v2515 = vlaneseq
        %v2516 = vshrl.u32 %v2515, 7
        %v2517 = vsub.s32 1, %v2516
        %v2518 = vrot.slane %v2491, %v2517
        %v2519 = vlaneseq
        %v2520 = vshrl.u32 %v2519, 7
        %v2521 = vsub.s32 2, %v2520
        %v2522 = vrot.slane %v2491, %v2521
        %v2558 = vunpack.c.l.b16 %v2459
        %v2559 = vunpack.c.h.b16 %v2459
        %v2560 = vunpack.c.l.b16 %v2460
        %v2561 = vunpack.c.l.b16 %v2461
        %v2562 = vunpack.c.h.b16 %v2461
        %v2563 = vunpack.c.l.b16 %v2462
        %v2564 = vunpack.c.l.b16 %v2463
        %v2565 = vunpack.c.h.b16 %v2463
        %v2566 = vunpack.c.l.b16 %v2464
        %v2567 = vunpack.c.l.b16 %v2465
        %v2568 = vunpack.c.h.b16 %v2465
        %v2569 = vunpack.c.l.b16 %v2466
        %v2570 = vunpack.c.l.b16 %v2467
        %v2571 = vunpack.c.h.b16 %v2467
        %v2572 = vunpack.c.l.b16 %v2468
        %v2573 = vunpack.c.l.b16 %v2469
        %v2574 = vunpack.c.h.b16 %v2469
        %v2575 = vunpack.c.l.b16 %v2470
        %v2576 = vunpack.c.l.b16 %v2471
        %v2577 = vunpack.c.h.b16 %v2471
        %v2578 = vunpack.c.l.b16 %v2472
        %v2579 = vunpack.c.l.b16 %v2473
        %v2580 = vunpack.c.h.b16 %v2473
        %v2581 = vunpack.c.l.b16 %v2474
        %v2582 = vunpack.c.l.b16 %v2475
        %v2583 = vunpack.c.h.b16 %v2475
        %v2584 = vunpack.c.l.b16 %v2476
        %v2585 = vunpack.c.l.b16 %v2477
        %v2586 = vunpack.c.h.b16 %v2477
        %v2587 = vunpack.c.l.b16 %v2478
        %v2588 = vunpack.c.l.b16 %v2479
        %v2589 = vunpack.c.h.b16 %v2479
        %v2590 = vunpack.c.l.b16 %v2480
        %v2591 = vunpack.c.l.b16 %v2481
        %v2592 = vunpack.c.h.b16 %v2481
        %v2593 = vunpack.c.l.b16 %v2482
        %v2594 = vunpack.c.l.b16 %v2483
        %v2595 = vunpack.c.h.b16 %v2483
        %v2596 = vunpack.c.l.b16 %v2484
        %v2597 = vunpack.c.l.b16 %v2485
        %v2598 = vunpack.c.h.b16 %v2485
        %v2599 = vunpack.c.l.b16 %v2486
        %v2600 = vunpack.c.l.b16 %v2487
        %v2601 = vunpack.c.h.b16 %v2487
        %v2602 = vunpack.c.l.b16 %v2488
        %v2603 = vunpack.c.l.b16 %v2489
        %v2604 = vunpack.c.h.b16 %v2489
        %v2605 = vunpack.c.l.b16 %v2490
        %v2606 = vpack.c.b16 %v2561, %v2558
        %v2607 = vpack.c.b16 %v2562, %v2559
        %v2608 = vpack.c.b16 %v2563, %v2560
        %v2609 = vpack.c.b16 %v2567, %v2564
        %v2610 = vpack.c.b16 %v2568, %v2565
        %v2611 = vpack.c.b16 %v2569, %v2566
        %v2612 = vpack.c.b16 %v2573, %v2570
        %v2613 = vpack.c.b16 %v2574, %v2571
        %v2614 = vpack.c.b16 %v2575, %v2572
        %v2615 = vpack.c.b16 %v2579, %v2576
        %v2616 = vpack.c.b16 %v2580, %v2577
        %v2617 = vpack.c.b16 %v2581, %v2578
        %v2618 = vpack.c.b16 %v2585, %v2582
        %v2619 = vpack.c.b16 %v2586, %v2583
        %v2620 = vpack.c.b16 %v2587, %v2584
        %v2621 = vpack.c.b16 %v2591, %v2588
        %v2622 = vpack.c.b16 %v2592, %v2589
        %v2623 = vpack.c.b16 %v2593, %v2590
        %v2624 = vpack.c.b16 %v2597, %v2594
        %v2625 = vpack.c.b16 %v2598, %v2595
        %v2626 = vpack.c.b16 %v2599, %v2596
        %v2627 = vpack.c.b16 %v2603, %v2600
        %v2628 = vpack.c.b16 %v2604, %v2601
        %v2629 = vpack.c.b16 %v2605, %v2602
        %2654 = vmatprep.subr.bf16.mxu0 %v2607
        %2655 = vmatpush1.bf16.msra.mxu0 %v2606
        %2656 = vmatprep.subr.bf16.mxu0 %v2610
        %2657 = vmatpush1.bf16.msra.mxu0 %v2609
        %2658 = vmatprep.subr.bf16.mxu0 %v2613
        %2659 = vmatpush1.bf16.msra.mxu0 %v2612
        %2660 = vmatprep.subr.bf16.mxu0 %v2616
        %2661 = vmatpush1.bf16.msra.mxu0 %v2615
        %2662 = vmatprep.subr.bf16.mxu0 %v2619
        %2663 = vmatpush1.bf16.msra.mxu0 %v2618
        %2664 = vmatprep.subr.bf16.mxu0 %v2622
        %2665 = vmatpush1.bf16.msra.mxu0 %v2621
        %2666 = vmatprep.subr.bf16.mxu0 %v2625
        %2667 = vmatpush1.bf16.msra.mxu0 %v2624
        %2668 = vmatprep.subr.bf16.mxu0 %v2628
        %2669 = vmatpush1.bf16.msra.mxu0 %v2627
        %2670 = vmatprep.subr.bf16.mxu0 0
        %2671 = vmatpush1.bf16.msra.mxu0 0
        %2672 = vmatprep.subr.bf16.mxu0 0
        %2673 = vmatpush1.bf16.msra.mxu0 0
        %2674 = vmatprep.subr.bf16.mxu0 0
        %2675 = vmatpush1.bf16.msra.mxu0 0
        %2676 = vmatprep.subr.bf16.mxu0 0
        %2677 = vmatpush1.bf16.msra.mxu0 0
        %2678 = vmatprep.subr.bf16.mxu0 0
        %2679 = vmatpush1.bf16.msra.mxu0 0
        %2680 = vmatprep.subr.bf16.mxu0 0
        %2681 = vmatpush1.bf16.msra.mxu0 0
        %2682 = vmatprep.subr.bf16.mxu0 0
        %2683 = vmatpush1.bf16.msra.mxu0 0
        %2684 = vmatprep.subr.bf16.mxu0 0
        %2685 = vmatpush1.bf16.msra.mxu0 0
        %2686 = vmatprep.mubr.bf16.mxu0 0
        %2687 = vmatmul.mubr.bf16.gmra.mrb[0].mxu0 %v2509
        %v2688 = vpop.f32.mrb[0].mxu0
        %v2689 = vadd.f32 %v2514, %v2688
        %v2690 = vpop.f32.mrb[0].mxu0
        %v2691 = vadd.f32 %v2518, %v2690
        %v2692 = vpop.f32.mrb[0].mxu0
        %v2693 = vpop.f32.mrb[0].mxu0
        %2694 = vdwg.mxu0
        %2695 = vmatprep.subr.bf16.mxu0 0
        %2696 = vmatpush1.bf16.msra.mxu0 %v2608
        %2697 = vmatprep.subr.bf16.mxu0 0
        %2698 = vmatpush1.bf16.msra.mxu0 %v2611
        %2699 = vmatprep.subr.bf16.mxu0 0
        %2700 = vmatpush1.bf16.msra.mxu0 %v2614
        %2701 = vmatprep.subr.bf16.mxu0 0
        %2702 = vmatpush1.bf16.msra.mxu0 %v2617
        %2703 = vmatprep.subr.bf16.mxu0 0
        %2704 = vmatpush1.bf16.msra.mxu0 %v2620
        %2705 = vmatprep.subr.bf16.mxu0 0
        %2706 = vmatpush1.bf16.msra.mxu0 %v2623
        %2707 = vmatprep.subr.bf16.mxu0 0
        %2708 = vmatpush1.bf16.msra.mxu0 %v2626
        %2709 = vmatprep.subr.bf16.mxu0 0
        %2710 = vmatpush1.bf16.msra.mxu0 %v2629
        %2711 = vmatprep.subr.bf16.mxu0 0
        %2712 = vmatpush1.bf16.msra.mxu0 0
        %2713 = vmatprep.subr.bf16.mxu0 0
        %2714 = vmatpush1.bf16.msra.mxu0 0
        %2715 = vmatprep.subr.bf16.mxu0 0
        %2716 = vmatpush1.bf16.msra.mxu0 0
        %2717 = vmatprep.subr.bf16.mxu0 0
        %2718 = vmatpush1.bf16.msra.mxu0 0
        %2719 = vmatprep.subr.bf16.mxu0 0
        %2720 = vmatpush1.bf16.msra.mxu0 0
        %2721 = vmatprep.subr.bf16.mxu0 0
        %2722 = vmatpush1.bf16.msra.mxu0 0
        %2723 = vmatprep.subr.bf16.mxu0 0
        %2724 = vmatpush1.bf16.msra.mxu0 0
        %2725 = vmatprep.subr.bf16.mxu0 0
        %2726 = vmatpush1.bf16.msra.mxu0 0
        %2727 = vmatprep.mubr.bf16.mxu0 0
        %2728 = vmatmul.mubr.bf16.gmra.mrb[0].mxu0 %v2509
        %v2729 = vpop.f32.mrb[0].mxu0
        %v2730 = vadd.f32 %v2522, %v2729
        %v2731 = vpop.f32.mrb[0].mxu0
        %v2732 = vpop.f32.mrb[0].mxu0
        %v2733 = vpop.f32.mrb[0].mxu0
        %2734 = vdwg.mxu0
        %v2735 = vpack.c.bf16 %v2689, %v2689
        %v2736 = vpack.c.bf16 %v2691, %v2691
        %2737 = vmatprep.subr.bf16.mxu0 0
        %2738 = vmatpush1.bf16.xpose.msra.mxu0 %v2736
        %2739 = vmatprep.subr.bf16.mxu0 0
        %2740 = vmatpush1.bf16.xpose.msra.mxu0 0
        %2741 = vmatprep.subr.bf16.mxu0 0
        %2742 = vmatpush1.bf16.xpose.msra.mxu0 0
        %2743 = vmatprep.subr.bf16.mxu0 0
        %2744 = vmatpush1.bf16.xpose.msra.mxu0 0
        %2745 = vmatprep.subr.bf16.mxu0 0
        %2746 = vmatpush1.bf16.xpose.msra.mxu0 0
        %2747 = vmatprep.subr.bf16.mxu0 0
        %2748 = vmatpush1.bf16.xpose.msra.mxu0 0
        %2749 = vmatprep.subr.bf16.mxu0 0
        %2750 = vmatpush1.bf16.xpose.msra.mxu0 0
        %2751 = vmatprep.subr.bf16.mxu0 0
        %2752 = vmatpush1.bf16.xpose.msra.mxu0 0
        %2753 = vmatprep.subr.bf16.mxu0 0
        %2754 = vmatpush1.bf16.xpose.msra.mxu0 0
        %2755 = vmatprep.subr.bf16.mxu0 0
        %2756 = vmatpush1.bf16.xpose.msra.mxu0 0
        %2757 = vmatprep.subr.bf16.mxu0 0
        %2758 = vmatpush1.bf16.xpose.msra.mxu0 0
        %2759 = vmatprep.subr.bf16.mxu0 0
        %2760 = vmatpush1.bf16.xpose.msra.mxu0 0
        %2761 = vmatprep.subr.bf16.mxu0 0
        %2762 = vmatpush1.bf16.xpose.msra.mxu0 0
        %2763 = vmatprep.subr.bf16.mxu0 0
        %2764 = vmatpush1.bf16.xpose.msra.mxu0 0
        %2765 = vmatprep.subr.bf16.mxu0 0
        %2766 = vmatpush1.bf16.xpose.msra.mxu0 0
        %2767 = vmatprep.subr.bf16.mxu0 0
        %2768 = vmatpush1.bf16.xpose.msra.mxu0 0
        %2769 = vmatprep.mubr.bf16.mxu0 0
        %2770 = vmatmul.mubr.bf16.gmra.mrb[0].mxu0 %v2735
        %v2771 = vpop.f32.mrb[0].mxu0
        %v2772 = vadd.f32 0.0, %v2771
        %v2773 = vpop.f32.mrb[0].mxu0
        %v2774 = vpop.f32.mrb[0].mxu0
        %v2775 = vpop.f32.mrb[0].mxu0
        %2776 = vdwg.mxu0
        %vm2777 = vcmask 64512
        %v2778 = vsel %vm2777, %v2772, -inf
        %2779 = vmax.xlane.f32.xlu0 %v2778
        %v2780 = vpop.xlane.xlu0 %2779
        %v2781 = vsub.f32 %v2772, %v2780
        %v2782 = vmul.f32 %v2781, 1.442695
        %v2783 = vpow.pop %v2782
        %v2784 = vsel %vm2777, %v2783, 0.0
        %2785 = vadd.xlane.f32.xlu0 %v2784
        %v2786 = vpop.xlane.xlu0 %2785
        %v2787 = vrcp.pop %v2786
        %v2788 = vmul.f32 %v2783, %v2787
        %v2789 = vpack.c.bf16 %v2788, %v2788
        %v2790 = vpack.c.bf16 %v2730, %v2730
        %v2792 = vsel %vm2777, %v2789, 0
        %vm2794 = vcmask 1043456
        %v2796 = vsel %vm2794, %v2790, 0
        %2798 = vmatprep.subr.bf16.mxu0 0
        %2799 = vmatpush1.bf16.msra.mxu0 %v2796
        %2800 = vmatprep.subr.bf16.mxu0 0
        %2801 = vmatpush1.bf16.msra.mxu0 0
        %2802 = vmatprep.subr.bf16.mxu0 0
        %2803 = vmatpush1.bf16.msra.mxu0 0
        %2804 = vmatprep.subr.bf16.mxu0 0
        %2805 = vmatpush1.bf16.msra.mxu0 0
        %2806 = vmatprep.subr.bf16.mxu0 0
        %2807 = vmatpush1.bf16.msra.mxu0 0
        %2808 = vmatprep.subr.bf16.mxu0 0
        %2809 = vmatpush1.bf16.msra.mxu0 0
        %2810 = vmatprep.subr.bf16.mxu0 0
        %2811 = vmatpush1.bf16.msra.mxu0 0
        %2812 = vmatprep.subr.bf16.mxu0 0
        %2813 = vmatpush1.bf16.msra.mxu0 0
        %2814 = vmatprep.subr.bf16.mxu0 0
        %2815 = vmatpush1.bf16.msra.mxu0 0
        %2816 = vmatprep.subr.bf16.mxu0 0
        %2817 = vmatpush1.bf16.msra.mxu0 0
        %2818 = vmatprep.subr.bf16.mxu0 0
        %2819 = vmatpush1.bf16.msra.mxu0 0
        %2820 = vmatprep.subr.bf16.mxu0 0
        %2821 = vmatpush1.bf16.msra.mxu0 0
        %2822 = vmatprep.subr.bf16.mxu0 0
        %2823 = vmatpush1.bf16.msra.mxu0 0
        %2824 = vmatprep.subr.bf16.mxu0 0
        %2825 = vmatpush1.bf16.msra.mxu0 0
        %2826 = vmatprep.subr.bf16.mxu0 0
        %2827 = vmatpush1.bf16.msra.mxu0 0
        %2828 = vmatprep.subr.bf16.mxu0 0
        %2829 = vmatpush1.bf16.msra.mxu0 0
        %2830 = vmatprep.mubr.bf16.mxu0 0
        %2831 = vmatmul.mubr.bf16.gmra.mrb[0].mxu0 %v2792
        %v2832 = vpop.f32.mrb[0].mxu0
        %v2833 = vadd.f32 0.0, %v2832
        %v2834 = vpop.f32.mrb[0].mxu0
        %v2835 = vpop.f32.mrb[0].mxu0
        %v2836 = vpop.f32.mrb[0].mxu0
        %2837 = vdwg.mxu0
        %v2838 = vpack.c.bf16 %v2833, %v2833
        %v2840 = vlaneseq
        %v2841 = vshrl.u32 %v2840, 7
        %v2842 = vsub.s32 0, %v2841
        %v2843 = vrot.slane %v2508, %v2842
        %v2861 = vunpack.c.l.b16 %v2492
        %v2862 = vunpack.c.l.b16 %v2493
        %v2863 = vunpack.c.l.b16 %v2494
        %v2864 = vunpack.c.l.b16 %v2495
        %v2865 = vunpack.c.l.b16 %v2496
        %v2866 = vunpack.c.l.b16 %v2497
        %v2867 = vunpack.c.l.b16 %v2498
        %v2868 = vunpack.c.l.b16 %v2499
        %v2869 = vunpack.c.l.b16 %v2500
        %v2870 = vunpack.c.l.b16 %v2501
        %v2871 = vunpack.c.l.b16 %v2502
        %v2872 = vunpack.c.l.b16 %v2503
        %v2873 = vunpack.c.l.b16 %v2504
        %v2874 = vunpack.c.l.b16 %v2505
        %v2875 = vunpack.c.l.b16 %v2506
        %v2876 = vunpack.c.l.b16 %v2507
        %v2877 = vpack.c.b16 %v2862, %v2861
        %v2878 = vpack.c.b16 %v2864, %v2863
        %v2879 = vpack.c.b16 %v2866, %v2865
        %v2880 = vpack.c.b16 %v2868, %v2867
        %v2881 = vpack.c.b16 %v2870, %v2869
        %v2882 = vpack.c.b16 %v2872, %v2871
        %v2883 = vpack.c.b16 %v2874, %v2873
        %v2884 = vpack.c.b16 %v2876, %v2875
        %2893 = vmatprep.subr.bf16.mxu0 0
        %2894 = vmatpush1.bf16.msra.mxu0 %v2877
        %2895 = vmatprep.subr.bf16.mxu0 0
        %2896 = vmatpush1.bf16.msra.mxu0 %v2878
        %2897 = vmatprep.subr.bf16.mxu0 0
        %2898 = vmatpush1.bf16.msra.mxu0 %v2879
        %2899 = vmatprep.subr.bf16.mxu0 0
        %2900 = vmatpush1.bf16.msra.mxu0 %v2880
        %2901 = vmatprep.subr.bf16.mxu0 0
        %2902 = vmatpush1.bf16.msra.mxu0 %v2881
        %2903 = vmatprep.subr.bf16.mxu0 0
        %2904 = vmatpush1.bf16.msra.mxu0 %v2882
        %2905 = vmatprep.subr.bf16.mxu0 0
        %2906 = vmatpush1.bf16.msra.mxu0 %v2883
        %2907 = vmatprep.subr.bf16.mxu0 0
        %2908 = vmatpush1.bf16.msra.mxu0 %v2884
        %2909 = vmatprep.subr.bf16.mxu0 0
        %2910 = vmatpush1.bf16.msra.mxu0 0
        %2911 = vmatprep.subr.bf16.mxu0 0
        %2912 = vmatpush1.bf16.msra.mxu0 0
        %2913 = vmatprep.subr.bf16.mxu0 0
        %2914 = vmatpush1.bf16.msra.mxu0 0
        %2915 = vmatprep.subr.bf16.mxu0 0
        %2916 = vmatpush1.bf16.msra.mxu0 0
        %2917 = vmatprep.subr.bf16.mxu0 0
        %2918 = vmatpush1.bf16.msra.mxu0 0
        %2919 = vmatprep.subr.bf16.mxu0 0
        %2920 = vmatpush1.bf16.msra.mxu0 0
        %2921 = vmatprep.subr.bf16.mxu0 0
        %2922 = vmatpush1.bf16.msra.mxu0 0
        %2923 = vmatprep.subr.bf16.mxu0 0
        %2924 = vmatpush1.bf16.msra.mxu0 0
        %2925 = vmatprep.mubr.bf16.mxu0 0
        %2926 = vmatmul.mubr.bf16.gmra.mrb[0].mxu0 %v2838
        %v2927 = vpop.f32.mrb[0].mxu0
        %v2928 = vadd.f32 %v2843, %v2927
        %v2929 = vpop.f32.mrb[0].mxu0
        %v2930 = vpop.f32.mrb[0].mxu0
        %v2931 = vpop.f32.mrb[0].mxu0
        %2932 = vdwg.mxu0
        %v2933 = vadd.f32 %v2457, %v2928
        %v2934 = vld [vmem:[%s2242] sm:$0x1]
        %v2935 = vld [vmem:[%s2239] sm:$0x1]
        %2936 = vadd.xlane.f32.xlu0 %v2933
        %v2937 = vpop.xlane.xlu0 %2936
        %v2938 = vrcp.pop 128.0
        %v2939 = vmul.f32 %v2937, %v2938
        %v2940 = vsub.f32 %v2933, %v2939
        %v2941 = vmul.f32 %v2940, %v2940
        %2942 = vadd.xlane.f32.xlu0 %v2941
        %v2943 = vpop.xlane.xlu0 %2942
        %v2944 = vmul.f32 %v2943, %v2938
        %v2945 = vadd.f32 %v2944, 1e-05
        %v2946 = vrsqrt.pop %v2945
        %v2947 = vmul.f32 %v2940, %v2946
        %v2949 = vlaneseq
        %v2950 = vshrl.u32 %v2949, 7
        %v2951 = vsub.s32 0, %v2950
        %v2952 = vrot.slane %v2934, %v2951
        %v2954 = vmul.f32 %v2947, %v2952
        %v2956 = vlaneseq
        %v2957 = vshrl.u32 %v2956, 7
        %v2958 = vsub.s32 0, %v2957
        %v2959 = vrot.slane %v2935, %v2958
        %v2961 = vadd.f32 %v2954, %v2959
        %v2962 = vld [vmem:[%s1925] sm:$0xf]
        %v2963 = vld [vmem:[%s1925 + $0x4] sm:$0xf]
        %v2964 = vld [vmem:[%s1925 + $0x8] sm:$0xf]
        %v2965 = vld [vmem:[%s1925 + $0xc] sm:$0xf]
        %v2966 = vld [vmem:[%s1925 + $0x10] sm:$0xf]
        %v2967 = vld [vmem:[%s1925 + $0x14] sm:$0xf]
        %v2968 = vld [vmem:[%s1925 + $0x18] sm:$0xf]
        %v2969 = vld [vmem:[%s1925 + $0x1c] sm:$0xf]
        %v2970 = vld [vmem:[%s1925 + $0x20] sm:$0xf]
        %v2971 = vld [vmem:[%s1925 + $0x24] sm:$0xf]
        %v2972 = vld [vmem:[%s1925 + $0x28] sm:$0xf]
        %v2973 = vld [vmem:[%s1925 + $0x2c] sm:$0xf]
        %v2974 = vld [vmem:[%s1925 + $0x30] sm:$0xf]
        %v2975 = vld [vmem:[%s1925 + $0x34] sm:$0xf]
        %v2976 = vld [vmem:[%s1925 + $0x38] sm:$0xf]
        %v2977 = vld [vmem:[%s1925 + $0x3c] sm:$0xf]
        %v2978 = vld [vmem:[%s2229] sm:$0x1]
        %v2979 = vld [vmem:[%s1934] sm:$0xf]
        %v2980 = vld [vmem:[%s1934 + $0x4] sm:$0xf]
        %v2981 = vld [vmem:[%s1934 + $0x8] sm:$0xf]
        %v2982 = vld [vmem:[%s1934 + $0xc] sm:$0xf]
        %v2983 = vld [vmem:[%s1934 + $0x10] sm:$0xf]
        %v2984 = vld [vmem:[%s1934 + $0x14] sm:$0xf]
        %v2985 = vld [vmem:[%s1934 + $0x18] sm:$0xf]
        %v2986 = vld [vmem:[%s1934 + $0x1c] sm:$0xf]
        %v2987 = vld [vmem:[%s1934 + $0x20] sm:$0xf]
        %v2988 = vld [vmem:[%s1934 + $0x24] sm:$0xf]
        %v2989 = vld [vmem:[%s1934 + $0x28] sm:$0xf]
        %v2990 = vld [vmem:[%s1934 + $0x2c] sm:$0xf]
        %v2991 = vld [vmem:[%s1934 + $0x30] sm:$0xf]
        %v2992 = vld [vmem:[%s1934 + $0x34] sm:$0xf]
        %v2993 = vld [vmem:[%s1934 + $0x38] sm:$0xf]
        %v2994 = vld [vmem:[%s1934 + $0x3c] sm:$0xf]
        %v2995 = vld [vmem:[%s2232] sm:$0x1]
        %v2996 = vpack.c.bf16 %v2961, %v2961
        %v2998 = vlaneseq
        %v2999 = vshrl.u32 %v2998, 7
        %v3000 = vsub.s32 0, %v2999
        %v3001 = vrot.slane %v2978, %v3000
        %v3019 = vunpack.c.l.b16 %v2962
        %v3020 = vunpack.c.l.b16 %v2963
        %v3021 = vunpack.c.l.b16 %v2964
        %v3022 = vunpack.c.l.b16 %v2965
        %v3023 = vunpack.c.l.b16 %v2966
        %v3024 = vunpack.c.l.b16 %v2967
        %v3025 = vunpack.c.l.b16 %v2968
        %v3026 = vunpack.c.l.b16 %v2969
        %v3027 = vunpack.c.l.b16 %v2970
        %v3028 = vunpack.c.l.b16 %v2971
        %v3029 = vunpack.c.l.b16 %v2972
        %v3030 = vunpack.c.l.b16 %v2973
        %v3031 = vunpack.c.l.b16 %v2974
        %v3032 = vunpack.c.l.b16 %v2975
        %v3033 = vunpack.c.l.b16 %v2976
        %v3034 = vunpack.c.l.b16 %v2977
        %v3035 = vpack.c.b16 %v3020, %v3019
        %v3036 = vpack.c.b16 %v3022, %v3021
        %v3037 = vpack.c.b16 %v3024, %v3023
        %v3038 = vpack.c.b16 %v3026, %v3025
        %v3039 = vpack.c.b16 %v3028, %v3027
        %v3040 = vpack.c.b16 %v3030, %v3029
        %v3041 = vpack.c.b16 %v3032, %v3031
        %v3042 = vpack.c.b16 %v3034, %v3033
        %3051 = vmatprep.subr.bf16.mxu0 0
        %3052 = vmatpush1.bf16.msra.mxu0 %v3035
        %3053 = vmatprep.subr.bf16.mxu0 0
        %3054 = vmatpush1.bf16.msra.mxu0 %v3036
        %3055 = vmatprep.subr.bf16.mxu0 0
        %3056 = vmatpush1.bf16.msra.mxu0 %v3037
        %3057 = vmatprep.subr.bf16.mxu0 0
        %3058 = vmatpush1.bf16.msra.mxu0 %v3038
        %3059 = vmatprep.subr.bf16.mxu0 0
        %3060 = vmatpush1.bf16.msra.mxu0 %v3039
        %3061 = vmatprep.subr.bf16.mxu0 0
        %3062 = vmatpush1.bf16.msra.mxu0 %v3040
        %3063 = vmatprep.subr.bf16.mxu0 0
        %3064 = vmatpush1.bf16.msra.mxu0 %v3041
        %3065 = vmatprep.subr.bf16.mxu0 0
        %3066 = vmatpush1.bf16.msra.mxu0 %v3042
        %3067 = vmatprep.subr.bf16.mxu0 0
        %3068 = vmatpush1.bf16.msra.mxu0 0
        %3069 = vmatprep.subr.bf16.mxu0 0
        %3070 = vmatpush1.bf16.msra.mxu0 0
        %3071 = vmatprep.subr.bf16.mxu0 0
        %3072 = vmatpush1.bf16.msra.mxu0 0
        %3073 = vmatprep.subr.bf16.mxu0 0
        %3074 = vmatpush1.bf16.msra.mxu0 0
        %3075 = vmatprep.subr.bf16.mxu0 0
        %3076 = vmatpush1.bf16.msra.mxu0 0
        %3077 = vmatprep.subr.bf16.mxu0 0
        %3078 = vmatpush1.bf16.msra.mxu0 0
        %3079 = vmatprep.subr.bf16.mxu0 0
        %3080 = vmatpush1.bf16.msra.mxu0 0
        %3081 = vmatprep.subr.bf16.mxu0 0
        %3082 = vmatpush1.bf16.msra.mxu0 0
        %3083 = vmatprep.mubr.bf16.mxu0 0
        %3084 = vmatmul.mubr.bf16.gmra.mrb[0].mxu0 %v2996
        %v3085 = vpop.f32.mrb[0].mxu0
        %v3086 = vadd.f32 %v3001, %v3085
        %v3087 = vpop.f32.mrb[0].mxu0
        %v3088 = vpop.f32.mrb[0].mxu0
        %v3089 = vpop.f32.mrb[0].mxu0
        %3090 = vdwg.mxu0
        %v3091 = vmax.f32 %v3086, 0.0
        %v3092 = vpack.c.bf16 %v3091, %v3091
        %v3094 = vlaneseq
        %v3095 = vshrl.u32 %v3094, 7
        %v3096 = vsub.s32 0, %v3095
        %v3097 = vrot.slane %v2995, %v3096
        %v3115 = vunpack.c.l.b16 %v2979
        %v3116 = vunpack.c.l.b16 %v2980
        %v3117 = vunpack.c.l.b16 %v2981
        %v3118 = vunpack.c.l.b16 %v2982
        %v3119 = vunpack.c.l.b16 %v2983
        %v3120 = vunpack.c.l.b16 %v2984
        %v3121 = vunpack.c.l.b16 %v2985
        %v3122 = vunpack.c.l.b16 %v2986
        %v3123 = vunpack.c.l.b16 %v2987
        %v3124 = vunpack.c.l.b16 %v2988
        %v3125 = vunpack.c.l.b16 %v2989
        %v3126 = vunpack.c.l.b16 %v2990
        %v3127 = vunpack.c.l.b16 %v2991
        %v3128 = vunpack.c.l.b16 %v2992
        %v3129 = vunpack.c.l.b16 %v2993
        %v3130 = vunpack.c.l.b16 %v2994
        %v3131 = vpack.c.b16 %v3116, %v3115
        %v3132 = vpack.c.b16 %v3118, %v3117
        %v3133 = vpack.c.b16 %v3120, %v3119
        %v3134 = vpack.c.b16 %v3122, %v3121
        %v3135 = vpack.c.b16 %v3124, %v3123
        %v3136 = vpack.c.b16 %v3126, %v3125
        %v3137 = vpack.c.b16 %v3128, %v3127
        %v3138 = vpack.c.b16 %v3130, %v3129
        %3147 = vmatprep.subr.bf16.mxu0 0
        %3148 = vmatpush1.bf16.msra.mxu0 %v3131
        %3149 = vmatprep.subr.bf16.mxu0 0
        %3150 = vmatpush1.bf16.msra.mxu0 %v3132
        %3151 = vmatprep.subr.bf16.mxu0 0
        %3152 = vmatpush1.bf16.msra.mxu0 %v3133
        %3153 = vmatprep.subr.bf16.mxu0 0
        %3154 = vmatpush1.bf16.msra.mxu0 %v3134
        %3155 = vmatprep.subr.bf16.mxu0 0
        %3156 = vmatpush1.bf16.msra.mxu0 %v3135
        %3157 = vmatprep.subr.bf16.mxu0 0
        %3158 = vmatpush1.bf16.msra.mxu0 %v3136
        %3159 = vmatprep.subr.bf16.mxu0 0
        %3160 = vmatpush1.bf16.msra.mxu0 %v3137
        %3161 = vmatprep.subr.bf16.mxu0 0
        %3162 = vmatpush1.bf16.msra.mxu0 %v3138
        %3163 = vmatprep.subr.bf16.mxu0 0
        %3164 = vmatpush1.bf16.msra.mxu0 0
        %3165 = vmatprep.subr.bf16.mxu0 0
        %3166 = vmatpush1.bf16.msra.mxu0 0
        %3167 = vmatprep.subr.bf16.mxu0 0
        %3168 = vmatpush1.bf16.msra.mxu0 0
        %3169 = vmatprep.subr.bf16.mxu0 0
        %3170 = vmatpush1.bf16.msra.mxu0 0
        %3171 = vmatprep.subr.bf16.mxu0 0
        %3172 = vmatpush1.bf16.msra.mxu0 0
        %3173 = vmatprep.subr.bf16.mxu0 0
        %3174 = vmatpush1.bf16.msra.mxu0 0
        %3175 = vmatprep.subr.bf16.mxu0 0
        %3176 = vmatpush1.bf16.msra.mxu0 0
        %3177 = vmatprep.subr.bf16.mxu0 0
        %3178 = vmatpush1.bf16.msra.mxu0 0
        %3179 = vmatprep.mubr.bf16.mxu0 0
        %3180 = vmatmul.mubr.bf16.gmra.mrb[0].mxu0 %v3092
        %v3181 = vpop.f32.mrb[0].mxu0
        %v3182 = vadd.f32 %v3097, %v3181
        %v3183 = vpop.f32.mrb[0].mxu0
        %v3184 = vpop.f32.mrb[0].mxu0
        %v3185 = vpop.f32.mrb[0].mxu0
        %3186 = vdwg.mxu0
        %v3187 = vadd.f32 %v2961, %v3182
        %v3188 = vld [vmem:[%s2248] sm:$0x1]
        %v3189 = vld [vmem:[%s2245] sm:$0x1]
        %3190 = vadd.xlane.f32.xlu0 %v3187
        %v3191 = vpop.xlane.xlu0 %3190
        %v3192 = vmul.f32 %v3191, %v2938
        %v3193 = vsub.f32 %v3187, %v3192
        %v3194 = vmul.f32 %v3193, %v3193
        %3195 = vadd.xlane.f32.xlu0 %v3194
        %v3196 = vpop.xlane.xlu0 %3195
        %v3197 = vmul.f32 %v3196, %v2938
        %v3198 = vadd.f32 %v3197, 1e-05
        %v3199 = vrsqrt.pop %v3198
        %v3200 = vmul.f32 %v3193, %v3199
        %v3202 = vlaneseq
        %v3203 = vshrl.u32 %v3202, 7
        %v3204 = vsub.s32 0, %v3203
        %v3205 = vrot.slane %v3188, %v3204
        %v3207 = vmul.f32 %v3200, %v3205
        %v3209 = vlaneseq
        %v3210 = vshrl.u32 %v3209, 7
        %v3211 = vsub.s32 0, %v3210
        %v3212 = vrot.slane %v3189, %v3211
        %v3214 = vadd.f32 %v3207, %v3212
        %v3215 = vld [vmem:[%s2257] sm:$0x1]
        %v3216 = vld [vmem:[%s2254] sm:$0x1]
        %3217 = vadd.xlane.f32.xlu0 %v3214
        %v3218 = vpop.xlane.xlu0 %3217
        %v3219 = vmul.f32 %v3218, %v2938
        %v3220 = vsub.f32 %v3214, %v3219
        %v3221 = vmul.f32 %v3220, %v3220
        %3222 = vadd.xlane.f32.xlu0 %v3221
        %v3223 = vpop.xlane.xlu0 %3222
        %v3224 = vmul.f32 %v3223, %v2938
        %v3225 = vadd.f32 %v3224, 1e-05
        %v3226 = vrsqrt.pop %v3225
        %v3227 = vmul.f32 %v3220, %v3226
        %v3229 = vlaneseq
        %v3230 = vshrl.u32 %v3229, 7
        %v3231 = vsub.s32 0, %v3230
        %v3232 = vrot.slane %v3215, %v3231
        %v3234 = vmul.f32 %v3227, %v3232
        %v3236 = vlaneseq
        %v3237 = vshrl.u32 %v3236, 7
        %v3238 = vsub.s32 0, %v3237
        %v3239 = vrot.slane %v3216, %v3238
        %v3241 = vadd.f32 %v3234, %v3239
        %v3242 = vld [vmem:[%s1907] sm:$0xff]
        %v3243 = vld [vmem:[%s1907 + $0x8] sm:$0xf]
        %v3244 = vld [vmem:[%s1907 + $0xc] sm:$0xff]
        %v3245 = vld [vmem:[%s1907 + $0x14] sm:$0xf]
        %v3246 = vld [vmem:[%s1907 + $0x18] sm:$0xff]
        %v3247 = vld [vmem:[%s1907 + $0x20] sm:$0xf]
        %v3248 = vld [vmem:[%s1907 + $0x24] sm:$0xff]
        %v3249 = vld [vmem:[%s1907 + $0x2c] sm:$0xf]
        %v3250 = vld [vmem:[%s1907 + $0x30] sm:$0xff]
        %v3251 = vld [vmem:[%s1907 + $0x38] sm:$0xf]
        %v3252 = vld [vmem:[%s1907 + $0x3c] sm:$0xff]
        %v3253 = vld [vmem:[%s1907 + $0x44] sm:$0xf]
        %v3254 = vld [vmem:[%s1907 + $0x48] sm:$0xff]
        %v3255 = vld [vmem:[%s1907 + $0x50] sm:$0xf]
        %v3256 = vld [vmem:[%s1907 + $0x54] sm:$0xff]
        %v3257 = vld [vmem:[%s1907 + $0x5c] sm:$0xf]
        %v3258 = vld [vmem:[%s1907 + $0x60] sm:$0xff]
        %v3259 = vld [vmem:[%s1907 + $0x68] sm:$0xf]
        %v3260 = vld [vmem:[%s1907 + $0x6c] sm:$0xff]
        %v3261 = vld [vmem:[%s1907 + $0x74] sm:$0xf]
        %v3262 = vld [vmem:[%s1907 + $0x78] sm:$0xff]
        %v3263 = vld [vmem:[%s1907 + $0x80] sm:$0xf]
        %v3264 = vld [vmem:[%s1907 + $0x84] sm:$0xff]
        %v3265 = vld [vmem:[%s1907 + $0x8c] sm:$0xf]
        %v3266 = vld [vmem:[%s1907 + $0x90] sm:$0xff]
        %v3267 = vld [vmem:[%s1907 + $0x98] sm:$0xf]
        %v3268 = vld [vmem:[%s1907 + $0x9c] sm:$0xff]
        %v3269 = vld [vmem:[%s1907 + $0xa4] sm:$0xf]
        %v3270 = vld [vmem:[%s1907 + $0xa8] sm:$0xff]
        %v3271 = vld [vmem:[%s1907 + $0xb0] sm:$0xf]
        %v3272 = vld [vmem:[%s1907 + $0xb4] sm:$0xff]
        %v3273 = vld [vmem:[%s1907 + $0xbc] sm:$0xf]
        %v3274 = vld [vmem:[%s2217] sm:$0x7]
        %v3275 = vld [vmem:[%s1916] sm:$0xf]
        %v3276 = vld [vmem:[%s1916 + $0x4] sm:$0xf]
        %v3277 = vld [vmem:[%s1916 + $0x8] sm:$0xf]
        %v3278 = vld [vmem:[%s1916 + $0xc] sm:$0xf]
        %v3279 = vld [vmem:[%s1916 + $0x10] sm:$0xf]
        %v3280 = vld [vmem:[%s1916 + $0x14] sm:$0xf]
        %v3281 = vld [vmem:[%s1916 + $0x18] sm:$0xf]
        %v3282 = vld [vmem:[%s1916 + $0x1c] sm:$0xf]
        %v3283 = vld [vmem:[%s1916 + $0x20] sm:$0xf]
        %v3284 = vld [vmem:[%s1916 + $0x24] sm:$0xf]
        %v3285 = vld [vmem:[%s1916 + $0x28] sm:$0xf]
        %v3286 = vld [vmem:[%s1916 + $0x2c] sm:$0xf]
        %v3287 = vld [vmem:[%s1916 + $0x30] sm:$0xf]
        %v3288 = vld [vmem:[%s1916 + $0x34] sm:$0xf]
        %v3289 = vld [vmem:[%s1916 + $0x38] sm:$0xf]
        %v3290 = vld [vmem:[%s1916 + $0x3c] sm:$0xf]
        %v3291 = vld [vmem:[%s2220] sm:$0x1]
        %v3292 = vpack.c.bf16 %v2458, %v2458
        %v3294 = vlaneseq
        %v3295 = vshrl.u32 %v3294, 7
        %v3296 = vsub.s32 0, %v3295
        %v3297 = vrot.slane %v3274, %v3296
        %v3298 = vlaneseq
        %v3299 = vshrl.u32 %v3298, 7
        %v3300 = vsub.s32 1, %v3299
        %v3301 = vrot.slane %v3274, %v3300
        %v3302 = vlaneseq
        %v3303 = vshrl.u32 %v3302, 7
        %v3304 = vsub.s32 2, %v3303
        %v3305 = vrot.slane %v3274, %v3304
        %v3341 = vunpack.c.l.b16 %v3242
        %v3342 = vunpack.c.h.b16 %v3242
        %v3343 = vunpack.c.l.b16 %v3243
        %v3344 = vunpack.c.l.b16 %v3244
        %v3345 = vunpack.c.h.b16 %v3244
        %v3346 = vunpack.c.l.b16 %v3245
        %v3347 = vunpack.c.l.b16 %v3246
        %v3348 = vunpack.c.h.b16 %v3246
        %v3349 = vunpack.c.l.b16 %v3247
        %v3350 = vunpack.c.l.b16 %v3248
        %v3351 = vunpack.c.h.b16 %v3248
        %v3352 = vunpack.c.l.b16 %v3249
        %v3353 = vunpack.c.l.b16 %v3250
        %v3354 = vunpack.c.h.b16 %v3250
        %v3355 = vunpack.c.l.b16 %v3251
        %v3356 = vunpack.c.l.b16 %v3252
        %v3357 = vunpack.c.h.b16 %v3252
        %v3358 = vunpack.c.l.b16 %v3253
        %v3359 = vunpack.c.l.b16 %v3254
        %v3360 = vunpack.c.h.b16 %v3254
        %v3361 = vunpack.c.l.b16 %v3255
        %v3362 = vunpack.c.l.b16 %v3256
        %v3363 = vunpack.c.h.b16 %v3256
        %v3364 = vunpack.c.l.b16 %v3257
        %v3365 = vunpack.c.l.b16 %v3258
        %v3366 = vunpack.c.h.b16 %v3258
        %v3367 = vunpack.c.l.b16 %v3259
        %v3368 = vunpack.c.l.b16 %v3260
        %v3369 = vunpack.c.h.b16 %v3260
        %v3370 = vunpack.c.l.b16 %v3261
        %v3371 = vunpack.c.l.b16 %v3262
        %v3372 = vunpack.c.h.b16 %v3262
        %v3373 = vunpack.c.l.b16 %v3263
        %v3374 = vunpack.c.l.b16 %v3264
        %v3375 = vunpack.c.h.b16 %v3264
        %v3376 = vunpack.c.l.b16 %v3265
        %v3377 = vunpack.c.l.b16 %v3266
        %v3378 = vunpack.c.h.b16 %v3266
        %v3379 = vunpack.c.l.b16 %v3267
        %v3380 = vunpack.c.l.b16 %v3268
        %v3381 = vunpack.c.h.b16 %v3268
        %v3382 = vunpack.c.l.b16 %v3269
        %v3383 = vunpack.c.l.b16 %v3270
        %v3384 = vunpack.c.h.b16 %v3270
        %v3385 = vunpack.c.l.b16 %v3271
        %v3386 = vunpack.c.l.b16 %v3272
        %v3387 = vunpack.c.h.b16 %v3272
        %v3388 = vunpack.c.l.b16 %v3273
        %v3389 = vpack.c.b16 %v3344, %v3341
        %v3390 = vpack.c.b16 %v3345, %v3342
        %v3391 = vpack.c.b16 %v3346, %v3343
        %v3392 = vpack.c.b16 %v3350, %v3347
        %v3393 = vpack.c.b16 %v3351, %v3348
        %v3394 = vpack.c.b16 %v3352, %v3349
        %v3395 = vpack.c.b16 %v3356, %v3353
        %v3396 = vpack.c.b16 %v3357, %v3354
        %v3397 = vpack.c.b16 %v3358, %v3355
        %v3398 = vpack.c.b16 %v3362, %v3359
        %v3399 = vpack.c.b16 %v3363, %v3360
        %v3400 = vpack.c.b16 %v3364, %v3361
        %v3401 = vpack.c.b16 %v3368, %v3365
        %v3402 = vpack.c.b16 %v3369, %v3366
        %v3403 = vpack.c.b16 %v3370, %v3367
        %v3404 = vpack.c.b16 %v3374, %v3371
        %v3405 = vpack.c.b16 %v3375, %v3372
        %v3406 = vpack.c.b16 %v3376, %v3373
        %v3407 = vpack.c.b16 %v3380, %v3377
        %v3408 = vpack.c.b16 %v3381, %v3378
        %v3409 = vpack.c.b16 %v3382, %v3379
        %v3410 = vpack.c.b16 %v3386, %v3383
        %v3411 = vpack.c.b16 %v3387, %v3384
        %v3412 = vpack.c.b16 %v3388, %v3385
        %3437 = vmatprep.subr.bf16.mxu0 %v3390
        %3438 = vmatpush1.bf16.msra.mxu0 %v3389
        %3439 = vmatprep.subr.bf16.mxu0 %v3393
        %3440 = vmatpush1.bf16.msra.mxu0 %v3392
        %3441 = vmatprep.subr.bf16.mxu0 %v3396
        %3442 = vmatpush1.bf16.msra.mxu0 %v3395
        %3443 = vmatprep.subr.bf16.mxu0 %v3399
        %3444 = vmatpush1.bf16.msra.mxu0 %v3398
        %3445 = vmatprep.subr.bf16.mxu0 %v3402
        %3446 = vmatpush1.bf16.msra.mxu0 %v3401
        %3447 = vmatprep.subr.bf16.mxu0 %v3405
        %3448 = vmatpush1.bf16.msra.mxu0 %v3404
        %3449 = vmatprep.subr.bf16.mxu0 %v3408
        %3450 = vmatpush1.bf16.msra.mxu0 %v3407
        %3451 = vmatprep.subr.bf16.mxu0 %v3411
        %3452 = vmatpush1.bf16.msra.mxu0 %v3410
        %3453 = vmatprep.subr.bf16.mxu0 0
        %3454 = vmatpush1.bf16.msra.mxu0 0
        %3455 = vmatprep.subr.bf16.mxu0 0
        %3456 = vmatpush1.bf16.msra.mxu0 0
        %3457 = vmatprep.subr.bf16.mxu0 0
        %3458 = vmatpush1.bf16.msra.mxu0 0
        %3459 = vmatprep.subr.bf16.mxu0 0
        %3460 = vmatpush1.bf16.msra.mxu0 0
        %3461 = vmatprep.subr.bf16.mxu0 0
        %3462 = vmatpush1.bf16.msra.mxu0 0
        %3463 = vmatprep.subr.bf16.mxu0 0
        %3464 = vmatpush1.bf16.msra.mxu0 0
        %3465 = vmatprep.subr.bf16.mxu0 0
        %3466 = vmatpush1.bf16.msra.mxu0 0
        %3467 = vmatprep.subr.bf16.mxu0 0
        %3468 = vmatpush1.bf16.msra.mxu0 0
        %3469 = vmatprep.mubr.bf16.mxu0 0
        %3470 = vmatmul.mubr.bf16.gmra.mrb[0].mxu0 %v3292
        %v3471 = vpop.f32.mrb[0].mxu0
        %v3472 = vadd.f32 %v3297, %v3471
        %v3473 = vpop.f32.mrb[0].mxu0
        %v3474 = vadd.f32 %v3301, %v3473
        %v3475 = vpop.f32.mrb[0].mxu0
        %v3476 = vpop.f32.mrb[0].mxu0
        %3477 = vdwg.mxu0
        %3478 = vmatprep.subr.bf16.mxu0 0
        %3479 = vmatpush1.bf16.msra.mxu0 %v3391
        %3480 = vmatprep.subr.bf16.mxu0 0
        %3481 = vmatpush1.bf16.msra.mxu0 %v3394
        %3482 = vmatprep.subr.bf16.mxu0 0
        %3483 = vmatpush1.bf16.msra.mxu0 %v3397
        %3484 = vmatprep.subr.bf16.mxu0 0
        %3485 = vmatpush1.bf16.msra.mxu0 %v3400
        %3486 = vmatprep.subr.bf16.mxu0 0
        %3487 = vmatpush1.bf16.msra.mxu0 %v3403
        %3488 = vmatprep.subr.bf16.mxu0 0
        %3489 = vmatpush1.bf16.msra.mxu0 %v3406
        %3490 = vmatprep.subr.bf16.mxu0 0
        %3491 = vmatpush1.bf16.msra.mxu0 %v3409
        %3492 = vmatprep.subr.bf16.mxu0 0
        %3493 = vmatpush1.bf16.msra.mxu0 %v3412
        %3494 = vmatprep.subr.bf16.mxu0 0
        %3495 = vmatpush1.bf16.msra.mxu0 0
        %3496 = vmatprep.subr.bf16.mxu0 0
        %3497 = vmatpush1.bf16.msra.mxu0 0
        %3498 = vmatprep.subr.bf16.mxu0 0
        %3499 = vmatpush1.bf16.msra.mxu0 0
        %3500 = vmatprep.subr.bf16.mxu0 0
        %3501 = vmatpush1.bf16.msra.mxu0 0
        %3502 = vmatprep.subr.bf16.mxu0 0
        %3503 = vmatpush1.bf16.msra.mxu0 0
        %3504 = vmatprep.subr.bf16.mxu0 0
        %3505 = vmatpush1.bf16.msra.mxu0 0
        %3506 = vmatprep.subr.bf16.mxu0 0
        %3507 = vmatpush1.bf16.msra.mxu0 0
        %3508 = vmatprep.subr.bf16.mxu0 0
        %3509 = vmatpush1.bf16.msra.mxu0 0
        %3510 = vmatprep.mubr.bf16.mxu0 0
        %3511 = vmatmul.mubr.bf16.gmra.mrb[0].mxu0 %v3292
        %v3512 = vpop.f32.mrb[0].mxu0
        %v3513 = vadd.f32 %v3305, %v3512
        %v3514 = vpop.f32.mrb[0].mxu0
        %v3515 = vpop.f32.mrb[0].mxu0
        %v3516 = vpop.f32.mrb[0].mxu0
        %3517 = vdwg.mxu0
        %v3518 = vpack.c.bf16 %v3472, %v3472
        %v3519 = vpack.c.bf16 %v3474, %v3474
        %3520 = vmatprep.subr.bf16.mxu0 0
        %3521 = vmatpush1.bf16.xpose.msra.mxu0 %v3519
        %3522 = vmatprep.subr.bf16.mxu0 0
        %3523 = vmatpush1.bf16.xpose.msra.mxu0 0
        %3524 = vmatprep.subr.bf16.mxu0 0
        %3525 = vmatpush1.bf16.xpose.msra.mxu0 0
        %3526 = vmatprep.subr.bf16.mxu0 0
        %3527 = vmatpush1.bf16.xpose.msra.mxu0 0
        %3528 = vmatprep.subr.bf16.mxu0 0
        %3529 = vmatpush1.bf16.xpose.msra.mxu0 0
        %3530 = vmatprep.subr.bf16.mxu0 0
        %3531 = vmatpush1.bf16.xpose.msra.mxu0 0
        %3532 = vmatprep.subr.bf16.mxu0 0
        %3533 = vmatpush1.bf16.xpose.msra.mxu0 0
        %3534 = vmatprep.subr.bf16.mxu0 0
        %3535 = vmatpush1.bf16.xpose.msra.mxu0 0
        %3536 = vmatprep.subr.bf16.mxu0 0
        %3537 = vmatpush1.bf16.xpose.msra.mxu0 0
        %3538 = vmatprep.subr.bf16.mxu0 0
        %3539 = vmatpush1.bf16.xpose.msra.mxu0 0
        %3540 = vmatprep.subr.bf16.mxu0 0
        %3541 = vmatpush1.bf16.xpose.msra.mxu0 0
        %3542 = vmatprep.subr.bf16.mxu0 0
        %3543 = vmatpush1.bf16.xpose.msra.mxu0 0
        %3544 = vmatprep.subr.bf16.mxu0 0
        %3545 = vmatpush1.bf16.xpose.msra.mxu0 0
        %3546 = vmatprep.subr.bf16.mxu0 0
        %3547 = vmatpush1.bf16.xpose.msra.mxu0 0
        %3548 = vmatprep.subr.bf16.mxu0 0
        %3549 = vmatpush1.bf16.xpose.msra.mxu0 0
        %3550 = vmatprep.subr.bf16.mxu0 0
        %3551 = vmatpush1.bf16.xpose.msra.mxu0 0
        %3552 = vmatprep.mubr.bf16.mxu0 0
        %3553 = vmatmul.mubr.bf16.gmra.mrb[0].mxu0 %v3518
        %v3554 = vpop.f32.mrb[0].mxu0
        %v3555 = vadd.f32 0.0, %v3554
        %v3556 = vpop.f32.mrb[0].mxu0
        %v3557 = vpop.f32.mrb[0].mxu0
        %v3558 = vpop.f32.mrb[0].mxu0
        %3559 = vdwg.mxu0
        %v3560 = vsel %vm2777, %v3555, -inf
        %3561 = vmax.xlane.f32.xlu0 %v3560
        %v3562 = vpop.xlane.xlu0 %3561
        %v3563 = vsub.f32 %v3555, %v3562
        %v3564 = vmul.f32 %v3563, 1.442695
        %v3565 = vpow.pop %v3564
        %v3566 = vsel %vm2777, %v3565, 0.0
        %3567 = vadd.xlane.f32.xlu0 %v3566
        %v3568 = vpop.xlane.xlu0 %3567
        %v3569 = vrcp.pop %v3568
        %v3570 = vmul.f32 %v3565, %v3569
        %v3571 = vpack.c.bf16 %v3570, %v3570
        %v3572 = vpack.c.bf16 %v3513, %v3513
        %v3574 = vsel %vm2777, %v3571, 0
        %v3577 = vsel %vm2794, %v3572, 0
        %3579 = vmatprep.subr.bf16.mxu0 0
        %3580 = vmatpush1.bf16.msra.mxu0 %v3577
        %3581 = vmatprep.subr.bf16.mxu0 0
        %3582 = vmatpush1.bf16.msra.mxu0 0
        %3583 = vmatprep.subr.bf16.mxu0 0
        %3584 = vmatpush1.bf16.msra.mxu0 0
        %3585 = vmatprep.subr.bf16.mxu0 0
        %3586 = vmatpush1.bf16.msra.mxu0 0
        %3587 = vmatprep.subr.bf16.mxu0 0
        %3588 = vmatpush1.bf16.msra.mxu0 0
        %3589 = vmatprep.subr.bf16.mxu0 0
        %3590 = vmatpush1.bf16.msra.mxu0 0
        %3591 = vmatprep.subr.bf16.mxu0 0
        %3592 = vmatpush1.bf16.msra.mxu0 0
        %3593 = vmatprep.subr.bf16.mxu0 0
        %3594 = vmatpush1.bf16.msra.mxu0 0
        %3595 = vmatprep.subr.bf16.mxu0 0
        %3596 = vmatpush1.bf16.msra.mxu0 0
        %3597 = vmatprep.subr.bf16.mxu0 0
        %3598 = vmatpush1.bf16.msra.mxu0 0
        %3599 = vmatprep.subr.bf16.mxu0 0
        %3600 = vmatpush1.bf16.msra.mxu0 0
        %3601 = vmatprep.subr.bf16.mxu0 0
        %3602 = vmatpush1.bf16.msra.mxu0 0
        %3603 = vmatprep.subr.bf16.mxu0 0
        %3604 = vmatpush1.bf16.msra.mxu0 0
        %3605 = vmatprep.subr.bf16.mxu0 0
        %3606 = vmatpush1.bf16.msra.mxu0 0
        %3607 = vmatprep.subr.bf16.mxu0 0
        %3608 = vmatpush1.bf16.msra.mxu0 0
        %3609 = vmatprep.subr.bf16.mxu0 0
        %3610 = vmatpush1.bf16.msra.mxu0 0
        %3611 = vmatprep.mubr.bf16.mxu0 0
        %3612 = vmatmul.mubr.bf16.gmra.mrb[0].mxu0 %v3574
        %v3613 = vpop.f32.mrb[0].mxu0
        %v3614 = vadd.f32 0.0, %v3613
        %v3615 = vpop.f32.mrb[0].mxu0
        %v3616 = vpop.f32.mrb[0].mxu0
        %v3617 = vpop.f32.mrb[0].mxu0
        %3618 = vdwg.mxu0
        %v3619 = vpack.c.bf16 %v3614, %v3614
        %v3621 = vlaneseq
        %v3622 = vshrl.u32 %v3621, 7
        %v3623 = vsub.s32 0, %v3622
        %v3624 = vrot.slane %v3291, %v3623
        %v3642 = vunpack.c.l.b16 %v3275
        %v3643 = vunpack.c.l.b16 %v3276
        %v3644 = vunpack.c.l.b16 %v3277
        %v3645 = vunpack.c.l.b16 %v3278
        %v3646 = vunpack.c.l.b16 %v3279
        %v3647 = vunpack.c.l.b16 %v3280
        %v3648 = vunpack.c.l.b16 %v3281
        %v3649 = vunpack.c.l.b16 %v3282
        %v3650 = vunpack.c.l.b16 %v3283
        %v3651 = vunpack.c.l.b16 %v3284
        %v3652 = vunpack.c.l.b16 %v3285
        %v3653 = vunpack.c.l.b16 %v3286
        %v3654 = vunpack.c.l.b16 %v3287
        %v3655 = vunpack.c.l.b16 %v3288
        %v3656 = vunpack.c.l.b16 %v3289
        %v3657 = vunpack.c.l.b16 %v3290
        %v3658 = vpack.c.b16 %v3643, %v3642
        %v3659 = vpack.c.b16 %v3645, %v3644
        %v3660 = vpack.c.b16 %v3647, %v3646
        %v3661 = vpack.c.b16 %v3649, %v3648
        %v3662 = vpack.c.b16 %v3651, %v3650
        %v3663 = vpack.c.b16 %v3653, %v3652
        %v3664 = vpack.c.b16 %v3655, %v3654
        %v3665 = vpack.c.b16 %v3657, %v3656
        %3674 = vmatprep.subr.bf16.mxu0 0
        %3675 = vmatpush1.bf16.msra.mxu0 %v3658
        %3676 = vmatprep.subr.bf16.mxu0 0
        %3677 = vmatpush1.bf16.msra.mxu0 %v3659
        %3678 = vmatprep.subr.bf16.mxu0 0
        %3679 = vmatpush1.bf16.msra.mxu0 %v3660
        %3680 = vmatprep.subr.bf16.mxu0 0
        %3681 = vmatpush1.bf16.msra.mxu0 %v3661
        %3682 = vmatprep.subr.bf16.mxu0 0
        %3683 = vmatpush1.bf16.msra.mxu0 %v3662
        %3684 = vmatprep.subr.bf16.mxu0 0
        %3685 = vmatpush1.bf16.msra.mxu0 %v3663
        %3686 = vmatprep.subr.bf16.mxu0 0
        %3687 = vmatpush1.bf16.msra.mxu0 %v3664
        %3688 = vmatprep.subr.bf16.mxu0 0
        %3689 = vmatpush1.bf16.msra.mxu0 %v3665
        %3690 = vmatprep.subr.bf16.mxu0 0
        %3691 = vmatpush1.bf16.msra.mxu0 0
        %3692 = vmatprep.subr.bf16.mxu0 0
        %3693 = vmatpush1.bf16.msra.mxu0 0
        %3694 = vmatprep.subr.bf16.mxu0 0
        %3695 = vmatpush1.bf16.msra.mxu0 0
        %3696 = vmatprep.subr.bf16.mxu0 0
        %3697 = vmatpush1.bf16.msra.mxu0 0
        %3698 = vmatprep.subr.bf16.mxu0 0
        %3699 = vmatpush1.bf16.msra.mxu0 0
        %3700 = vmatprep.subr.bf16.mxu0 0
        %3701 = vmatpush1.bf16.msra.mxu0 0
        %3702 = vmatprep.subr.bf16.mxu0 0
        %3703 = vmatpush1.bf16.msra.mxu0 0
        %3704 = vmatprep.subr.bf16.mxu0 0
        %3705 = vmatpush1.bf16.msra.mxu0 0
        %3706 = vmatprep.mubr.bf16.mxu0 0
        %3707 = vmatmul.mubr.bf16.gmra.mrb[0].mxu0 %v3619
        %v3708 = vpop.f32.mrb[0].mxu0
        %v3709 = vadd.f32 %v3624, %v3708
        %v3710 = vpop.f32.mrb[0].mxu0
        %v3711 = vpop.f32.mrb[0].mxu0
        %v3712 = vpop.f32.mrb[0].mxu0
        %3713 = vdwg.mxu0
        %v3714 = vadd.f32 %v2458, %v3709
        %v3715 = vld [vmem:[%s2201] sm:$0x1]
        %v3716 = vld [vmem:[%s2198] sm:$0x1]
        %3717 = vadd.xlane.f32.xlu0 %v3714
        %v3718 = vpop.xlane.xlu0 %3717
        %v3719 = vmul.f32 %v3718, %v2938
        %v3720 = vsub.f32 %v3714, %v3719
        %v3721 = vmul.f32 %v3720, %v3720
        %3722 = vadd.xlane.f32.xlu0 %v3721
        %v3723 = vpop.xlane.xlu0 %3722
        %v3724 = vmul.f32 %v3723, %v2938
        %v3725 = vadd.f32 %v3724, 1e-05
        %v3726 = vrsqrt.pop %v3725
        %v3727 = vmul.f32 %v3720, %v3726
        %v3729 = vlaneseq
        %v3730 = vshrl.u32 %v3729, 7
        %v3731 = vsub.s32 0, %v3730
        %v3732 = vrot.slane %v3715, %v3731
        %v3734 = vmul.f32 %v3727, %v3732
        %v3736 = vlaneseq
        %v3737 = vshrl.u32 %v3736, 7
        %v3738 = vsub.s32 0, %v3737
        %v3739 = vrot.slane %v3716, %v3738
        %v3741 = vadd.f32 %v3734, %v3739
        %v3742 = vld [vmem:[%s1864] sm:$0xf]
        %v3743 = vld [vmem:[%s1864 + $0x4] sm:$0xf]
        %v3744 = vld [vmem:[%s1864 + $0x8] sm:$0xf]
        %v3745 = vld [vmem:[%s1864 + $0xc] sm:$0xf]
        %v3746 = vld [vmem:[%s1864 + $0x10] sm:$0xf]
        %v3747 = vld [vmem:[%s1864 + $0x14] sm:$0xf]
        %v3748 = vld [vmem:[%s1864 + $0x18] sm:$0xf]
        %v3749 = vld [vmem:[%s1864 + $0x1c] sm:$0xf]
        %v3750 = vld [vmem:[%s1864 + $0x20] sm:$0xf]
        %v3751 = vld [vmem:[%s1864 + $0x24] sm:$0xf]
        %v3752 = vld [vmem:[%s1864 + $0x28] sm:$0xf]
        %v3753 = vld [vmem:[%s1864 + $0x2c] sm:$0xf]
        %v3754 = vld [vmem:[%s1864 + $0x30] sm:$0xf]
        %v3755 = vld [vmem:[%s1864 + $0x34] sm:$0xf]
        %v3756 = vld [vmem:[%s1864 + $0x38] sm:$0xf]
        %v3757 = vld [vmem:[%s1864 + $0x3c] sm:$0xf]
        %v3758 = vld [vmem:[%s1855] sm:$0x1]
        %v3759 = vld [vmem:[%s1838] sm:$0xff]
        %v3760 = vld [vmem:[%s1838 + $0x8] sm:$0xff]
        %v3761 = vld [vmem:[%s1838 + $0x10] sm:$0xff]
        %v3762 = vld [vmem:[%s1838 + $0x18] sm:$0xff]
        %v3763 = vld [vmem:[%s1838 + $0x20] sm:$0xff]
        %v3764 = vld [vmem:[%s1838 + $0x28] sm:$0xff]
        %v3765 = vld [vmem:[%s1838 + $0x30] sm:$0xff]
        %v3766 = vld [vmem:[%s1838 + $0x38] sm:$0xff]
        %v3767 = vld [vmem:[%s1838 + $0x40] sm:$0xff]
        %v3768 = vld [vmem:[%s1838 + $0x48] sm:$0xff]
        %v3769 = vld [vmem:[%s1838 + $0x50] sm:$0xff]
        %v3770 = vld [vmem:[%s1838 + $0x58] sm:$0xff]
        %v3771 = vld [vmem:[%s1838 + $0x60] sm:$0xff]
        %v3772 = vld [vmem:[%s1838 + $0x68] sm:$0xff]
        %v3773 = vld [vmem:[%s1838 + $0x70] sm:$0xff]
        %v3774 = vld [vmem:[%s1838 + $0x78] sm:$0xff]
        %v3775 = vld [vmem:[%s1829] sm:$0x3]
        %v3776 = vld [vmem:[%s1847] sm:$0xf]
        %v3777 = vld [vmem:[%s1847 + $0x4] sm:$0xf]
        %v3778 = vld [vmem:[%s1847 + $0x8] sm:$0xf]
        %v3779 = vld [vmem:[%s1847 + $0xc] sm:$0xf]
        %v3780 = vld [vmem:[%s1847 + $0x10] sm:$0xf]
        %v3781 = vld [vmem:[%s1847 + $0x14] sm:$0xf]
        %v3782 = vld [vmem:[%s1847 + $0x18] sm:$0xf]
        %v3783 = vld [vmem:[%s1847 + $0x1c] sm:$0xf]
        %v3784 = vld [vmem:[%s1847 + $0x20] sm:$0xf]
        %v3785 = vld [vmem:[%s1847 + $0x24] sm:$0xf]
        %v3786 = vld [vmem:[%s1847 + $0x28] sm:$0xf]
        %v3787 = vld [vmem:[%s1847 + $0x2c] sm:$0xf]
        %v3788 = vld [vmem:[%s1847 + $0x30] sm:$0xf]
        %v3789 = vld [vmem:[%s1847 + $0x34] sm:$0xf]
        %v3790 = vld [vmem:[%s1847 + $0x38] sm:$0xf]
        %v3791 = vld [vmem:[%s1847 + $0x3c] sm:$0xf]
        %v3792 = vld [vmem:[%s2195] sm:$0x1]
        %v3793 = vpack.c.bf16 %v3741, %v3741
        %v3795 = vlaneseq
        %v3796 = vshrl.u32 %v3795, 7
        %v3797 = vsub.s32 0, %v3796
        %v3798 = vrot.slane %v3758, %v3797
        %v3816 = vunpack.c.l.b16 %v3742
        %v3817 = vunpack.c.l.b16 %v3743
        %v3818 = vunpack.c.l.b16 %v3744
        %v3819 = vunpack.c.l.b16 %v3745
        %v3820 = vunpack.c.l.b16 %v3746
        %v3821 = vunpack.c.l.b16 %v3747
        %v3822 = vunpack.c.l.b16 %v3748
        %v3823 = vunpack.c.l.b16 %v3749
        %v3824 = vunpack.c.l.b16 %v3750
        %v3825 = vunpack.c.l.b16 %v3751
        %v3826 = vunpack.c.l.b16 %v3752
        %v3827 = vunpack.c.l.b16 %v3753
        %v3828 = vunpack.c.l.b16 %v3754
        %v3829 = vunpack.c.l.b16 %v3755
        %v3830 = vunpack.c.l.b16 %v3756
        %v3831 = vunpack.c.l.b16 %v3757
        %v3832 = vpack.c.b16 %v3817, %v3816
        %v3833 = vpack.c.b16 %v3819, %v3818
        %v3834 = vpack.c.b16 %v3821, %v3820
        %v3835 = vpack.c.b16 %v3823, %v3822
        %v3836 = vpack.c.b16 %v3825, %v3824
        %v3837 = vpack.c.b16 %v3827, %v3826
        %v3838 = vpack.c.b16 %v3829, %v3828
        %v3839 = vpack.c.b16 %v3831, %v3830
        %3848 = vmatprep.subr.bf16.mxu0 0
        %3849 = vmatpush1.bf16.msra.mxu0 %v3832
        %3850 = vmatprep.subr.bf16.mxu0 0
        %3851 = vmatpush1.bf16.msra.mxu0 %v3833
        %3852 = vmatprep.subr.bf16.mxu0 0
        %3853 = vmatpush1.bf16.msra.mxu0 %v3834
        %3854 = vmatprep.subr.bf16.mxu0 0
        %3855 = vmatpush1.bf16.msra.mxu0 %v3835
        %3856 = vmatprep.subr.bf16.mxu0 0
        %3857 = vmatpush1.bf16.msra.mxu0 %v3836
        %3858 = vmatprep.subr.bf16.mxu0 0
        %3859 = vmatpush1.bf16.msra.mxu0 %v3837
        %3860 = vmatprep.subr.bf16.mxu0 0
        %3861 = vmatpush1.bf16.msra.mxu0 %v3838
        %3862 = vmatprep.subr.bf16.mxu0 0
        %3863 = vmatpush1.bf16.msra.mxu0 %v3839
        %3864 = vmatprep.subr.bf16.mxu0 0
        %3865 = vmatpush1.bf16.msra.mxu0 0
        %3866 = vmatprep.subr.bf16.mxu0 0
        %3867 = vmatpush1.bf16.msra.mxu0 0
        %3868 = vmatprep.subr.bf16.mxu0 0
        %3869 = vmatpush1.bf16.msra.mxu0 0
        %3870 = vmatprep.subr.bf16.mxu0 0
        %3871 = vmatpush1.bf16.msra.mxu0 0
        %3872 = vmatprep.subr.bf16.mxu0 0
        %3873 = vmatpush1.bf16.msra.mxu0 0
        %3874 = vmatprep.subr.bf16.mxu0 0
        %3875 = vmatpush1.bf16.msra.mxu0 0
        %3876 = vmatprep.subr.bf16.mxu0 0
        %3877 = vmatpush1.bf16.msra.mxu0 0
        %3878 = vmatprep.subr.bf16.mxu0 0
        %3879 = vmatpush1.bf16.msra.mxu0 0
        %3880 = vmatprep.mubr.bf16.mxu0 0
        %3881 = vmatmul.mubr.bf16.gmra.mrb[0].mxu0 %v3793
        %v3882 = vpop.f32.mrb[0].mxu0
        %v3883 = vadd.f32 %v3798, %v3882
        %v3884 = vpop.f32.mrb[0].mxu0
        %v3885 = vpop.f32.mrb[0].mxu0
        %v3886 = vpop.f32.mrb[0].mxu0
        %3887 = vdwg.mxu0
        %v3888 = vpack.c.bf16 %v3241, %v3241
        %v3890 = vlaneseq
        %v3891 = vshrl.u32 %v3890, 7
        %v3892 = vsub.s32 0, %v3891
        %v3893 = vrot.slane %v3775, %v3892
        %v3894 = vlaneseq
        %v3895 = vshrl.u32 %v3894, 7
        %v3896 = vsub.s32 1, %v3895
        %v3897 = vrot.slane %v3775, %v3896
        %v3916 = vunpack.c.l.b16 %v3759
        %v3917 = vunpack.c.h.b16 %v3759
        %v3918 = vunpack.c.l.b16 %v3760
        %v3919 = vunpack.c.h.b16 %v3760
        %v3920 = vunpack.c.l.b16 %v3761
        %v3921 = vunpack.c.h.b16 %v3761
        %v3922 = vunpack.c.l.b16 %v3762
        %v3923 = vunpack.c.h.b16 %v3762
        %v3924 = vunpack.c.l.b16 %v3763
        %v3925 = vunpack.c.h.b16 %v3763
        %v3926 = vunpack.c.l.b16 %v3764
        %v3927 = vunpack.c.h.b16 %v3764
        %v3928 = vunpack.c.l.b16 %v3765
        %v3929 = vunpack.c.h.b16 %v3765
        %v3930 = vunpack.c.l.b16 %v3766
        %v3931 = vunpack.c.h.b16 %v3766
        %v3932 = vunpack.c.l.b16 %v3767
        %v3933 = vunpack.c.h.b16 %v3767
        %v3934 = vunpack.c.l.b16 %v3768
        %v3935 = vunpack.c.h.b16 %v3768
        %v3936 = vunpack.c.l.b16 %v3769
        %v3937 = vunpack.c.h.b16 %v3769
        %v3938 = vunpack.c.l.b16 %v3770
        %v3939 = vunpack.c.h.b16 %v3770
        %v3940 = vunpack.c.l.b16 %v3771
        %v3941 = vunpack.c.h.b16 %v3771
        %v3942 = vunpack.c.l.b16 %v3772
        %v3943 = vunpack.c.h.b16 %v3772
        %v3944 = vunpack.c.l.b16 %v3773
        %v3945 = vunpack.c.h.b16 %v3773
        %v3946 = vunpack.c.l.b16 %v3774
        %v3947 = vunpack.c.h.b16 %v3774
        %v3948 = vpack.c.b16 %v3918, %v3916
        %v3949 = vpack.c.b16 %v3919, %v3917
        %v3950 = vpack.c.b16 %v3922, %v3920
        %v3951 = vpack.c.b16 %v3923, %v3921
        %v3952 = vpack.c.b16 %v3926, %v3924
        %v3953 = vpack.c.b16 %v3927, %v3925
        %v3954 = vpack.c.b16 %v3930, %v3928
        %v3955 = vpack.c.b16 %v3931, %v3929
        %v3956 = vpack.c.b16 %v3934, %v3932
        %v3957 = vpack.c.b16 %v3935, %v3933
        %v3958 = vpack.c.b16 %v3938, %v3936
        %v3959 = vpack.c.b16 %v3939, %v3937
        %v3960 = vpack.c.b16 %v3942, %v3940
        %v3961 = vpack.c.b16 %v3943, %v3941
        %v3962 = vpack.c.b16 %v3946, %v3944
        %v3963 = vpack.c.b16 %v3947, %v3945
        %3980 = vmatprep.subr.bf16.mxu0 %v3949
        %3981 = vmatpush1.bf16.msra.mxu0 %v3948
        %3982 = vmatprep.subr.bf16.mxu0 %v3951
        %3983 = vmatpush1.bf16.msra.mxu0 %v3950
        %3984 = vmatprep.subr.bf16.mxu0 %v3953
        %3985 = vmatpush1.bf16.msra.mxu0 %v3952
        %3986 = vmatprep.subr.bf16.mxu0 %v3955
        %3987 = vmatpush1.bf16.msra.mxu0 %v3954
        %3988 = vmatprep.subr.bf16.mxu0 %v3957
        %3989 = vmatpush1.bf16.msra.mxu0 %v3956
        %3990 = vmatprep.subr.bf16.mxu0 %v3959
        %3991 = vmatpush1.bf16.msra.mxu0 %v3958
        %3992 = vmatprep.subr.bf16.mxu0 %v3961
        %3993 = vmatpush1.bf16.msra.mxu0 %v3960
        %3994 = vmatprep.subr.bf16.mxu0 %v3963
        %3995 = vmatpush1.bf16.msra.mxu0 %v3962
        %3996 = vmatprep.subr.bf16.mxu0 0
        %3997 = vmatpush1.bf16.msra.mxu0 0
        %3998 = vmatprep.subr.bf16.mxu0 0
        %3999 = vmatpush1.bf16.msra.mxu0 0
        %4000 = vmatprep.subr.bf16.mxu0 0
        %4001 = vmatpush1.bf16.msra.mxu0 0
        %4002 = vmatprep.subr.bf16.mxu0 0
        %4003 = vmatpush1.bf16.msra.mxu0 0
        %4004 = vmatprep.subr.bf16.mxu0 0
        %4005 = vmatpush1.bf16.msra.mxu0 0
        %4006 = vmatprep.subr.bf16.mxu0 0
        %4007 = vmatpush1.bf16.msra.mxu0 0
        %4008 = vmatprep.subr.bf16.mxu0 0
        %4009 = vmatpush1.bf16.msra.mxu0 0
        %4010 = vmatprep.subr.bf16.mxu0 0
        %4011 = vmatpush1.bf16.msra.mxu0 0
        %4012 = vmatprep.mubr.bf16.mxu0 0
        %4013 = vmatmul.mubr.bf16.gmra.mrb[0].mxu0 %v3888
        %v4014 = vpop.f32.mrb[0].mxu0
        %v4015 = vadd.f32 %v3893, %v4014
        %v4016 = vpop.f32.mrb[0].mxu0
        %v4017 = vadd.f32 %v3897, %v4016
        %v4018 = vpop.f32.mrb[0].mxu0
        %v4019 = vpop.f32.mrb[0].mxu0
        %4020 = vdwg.mxu0
        %v4021 = vpack.c.bf16 %v3883, %v3883
        %v4022 = vpack.c.bf16 %v4015, %v4015
        %4023 = vmatprep.subr.bf16.mxu0 0
        %4024 = vmatpush1.bf16.xpose.msra.mxu0 %v4022
        %4025 = vmatprep.subr.bf16.mxu0 0
        %4026 = vmatpush1.bf16.xpose.msra.mxu0 0
        %4027 = vmatprep.subr.bf16.mxu0 0
        %4028 = vmatpush1.bf16.xpose.msra.mxu0 0
        %4029 = vmatprep.subr.bf16.mxu0 0
        %4030 = vmatpush1.bf16.xpose.msra.mxu0 0
        %4031 = vmatprep.subr.bf16.mxu0 0
        %4032 = vmatpush1.bf16.xpose.msra.mxu0 0
        %4033 = vmatprep.subr.bf16.mxu0 0
        %4034 = vmatpush1.bf16.xpose.msra.mxu0 0
        %4035 = vmatprep.subr.bf16.mxu0 0
        %4036 = vmatpush1.bf16.xpose.msra.mxu0 0
        %4037 = vmatprep.subr.bf16.mxu0 0
        %4038 = vmatpush1.bf16.xpose.msra.mxu0 0
        %4039 = vmatprep.subr.bf16.mxu0 0
        %4040 = vmatpush1.bf16.xpose.msra.mxu0 0
        %4041 = vmatprep.subr.bf16.mxu0 0
        %4042 = vmatpush1.bf16.xpose.msra.mxu0 0
        %4043 = vmatprep.subr.bf16.mxu0 0
        %4044 = vmatpush1.bf16.xpose.msra.mxu0 0
        %4045 = vmatprep.subr.bf16.mxu0 0
        %4046 = vmatpush1.bf16.xpose.msra.mxu0 0
        %4047 = vmatprep.subr.bf16.mxu0 0
        %4048 = vmatpush1.bf16.xpose.msra.mxu0 0
        %4049 = vmatprep.subr.bf16.mxu0 0
        %4050 = vmatpush1.bf16.xpose.msra.mxu0 0
        %4051 = vmatprep.subr.bf16.mxu0 0
        %4052 = vmatpush1.bf16.xpose.msra.mxu0 0
        %4053 = vmatprep.subr.bf16.mxu0 0
        %4054 = vmatpush1.bf16.xpose.msra.mxu0 0
        %4055 = vmatprep.mubr.bf16.mxu0 0
        %4056 = vmatmul.mubr.bf16.gmra.mrb[0].mxu0 %v4021
        %v4057 = vpop.f32.mrb[0].mxu0
        %v4058 = vadd.f32 0.0, %v4057
        %v4059 = vpop.f32.mrb[0].mxu0
        %v4060 = vpop.f32.mrb[0].mxu0
        %v4061 = vpop.f32.mrb[0].mxu0
        %4062 = vdwg.mxu0
        %v4063 = vsel %vm2777, %v4058, -inf
        %4064 = vmax.xlane.f32.xlu0 %v4063
        %v4065 = vpop.xlane.xlu0 %4064
        %v4066 = vsub.f32 %v4058, %v4065
        %v4067 = vmul.f32 %v4066, 1.442695
        %v4068 = vpow.pop %v4067
        %v4069 = vsel %vm2777, %v4068, 0.0
        %4070 = vadd.xlane.f32.xlu0 %v4069
        %v4071 = vpop.xlane.xlu0 %4070
        %v4072 = vrcp.pop %v4071
        %v4073 = vmul.f32 %v4068, %v4072
        %v4074 = vpack.c.bf16 %v4073, %v4073
        %v4075 = vpack.c.bf16 %v4017, %v4017
        %v4077 = vsel %vm2777, %v4074, 0
        %v4080 = vsel %vm2794, %v4075, 0
        %4082 = vmatprep.subr.bf16.mxu0 0
        %4083 = vmatpush1.bf16.msra.mxu0 %v4080
        %4084 = vmatprep.subr.bf16.mxu0 0
        %4085 = vmatpush1.bf16.msra.mxu0 0
        %4086 = vmatprep.subr.bf16.mxu0 0
        %4087 = vmatpush1.bf16.msra.mxu0 0
        %4088 = vmatprep.subr.bf16.mxu0 0
        %4089 = vmatpush1.bf16.msra.mxu0 0
        %4090 = vmatprep.subr.bf16.mxu0 0
        %4091 = vmatpush1.bf16.msra.mxu0 0
        %4092 = vmatprep.subr.bf16.mxu0 0
        %4093 = vmatpush1.bf16.msra.mxu0 0
        %4094 = vmatprep.subr.bf16.mxu0 0
        %4095 = vmatpush1.bf16.msra.mxu0 0
        %4096 = vmatprep.subr.bf16.mxu0 0
        %4097 = vmatpush1.bf16.msra.mxu0 0
        %4098 = vmatprep.subr.bf16.mxu0 0
        %4099 = vmatpush1.bf16.msra.mxu0 0
        %4100 = vmatprep.subr.bf16.mxu0 0
        %4101 = vmatpush1.bf16.msra.mxu0 0
        %4102 = vmatprep.subr.bf16.mxu0 0
        %4103 = vmatpush1.bf16.msra.mxu0 0
        %4104 = vmatprep.subr.bf16.mxu0 0
        %4105 = vmatpush1.bf16.msra.mxu0 0
        %4106 = vmatprep.subr.bf16.mxu0 0
        %4107 = vmatpush1.bf16.msra.mxu0 0
        %4108 = vmatprep.subr.bf16.mxu0 0
        %4109 = vmatpush1.bf16.msra.mxu0 0
        %4110 = vmatprep.subr.bf16.mxu0 0
        %4111 = vmatpush1.bf16.msra.mxu0 0
        %4112 = vmatprep.subr.bf16.mxu0 0
        %4113 = vmatpush1.bf16.msra.mxu0 0
        %4114 = vmatprep.mubr.bf16.mxu0 0
        %4115 = vmatmul.mubr.bf16.gmra.mrb[0].mxu0 %v4077
        %v4116 = vpop.f32.mrb[0].mxu0
        %v4117 = vadd.f32 0.0, %v4116
        %v4118 = vpop.f32.mrb[0].mxu0
        %v4119 = vpop.f32.mrb[0].mxu0
        %v4120 = vpop.f32.mrb[0].mxu0
        %4121 = vdwg.mxu0
        %v4122 = vpack.c.bf16 %v4117, %v4117
        %v4124 = vlaneseq
        %v4125 = vshrl.u32 %v4124, 7
        %v4126 = vsub.s32 0, %v4125
        %v4127 = vrot.slane %v3792, %v4126
        %v4145 = vunpack.c.l.b16 %v3776
        %v4146 = vunpack.c.l.b16 %v3777
        %v4147 = vunpack.c.l.b16 %v3778
        %v4148 = vunpack.c.l.b16 %v3779
        %v4149 = vunpack.c.l.b16 %v3780
        %v4150 = vunpack.c.l.b16 %v3781
        %v4151 = vunpack.c.l.b16 %v3782
        %v4152 = vunpack.c.l.b16 %v3783
        %v4153 = vunpack.c.l.b16 %v3784
        %v4154 = vunpack.c.l.b16 %v3785
        %v4155 = vunpack.c.l.b16 %v3786
        %v4156 = vunpack.c.l.b16 %v3787
        %v4157 = vunpack.c.l.b16 %v3788
        %v4158 = vunpack.c.l.b16 %v3789
        %v4159 = vunpack.c.l.b16 %v3790
        %v4160 = vunpack.c.l.b16 %v3791
        %v4161 = vpack.c.b16 %v4146, %v4145
        %v4162 = vpack.c.b16 %v4148, %v4147
        %v4163 = vpack.c.b16 %v4150, %v4149
        %v4164 = vpack.c.b16 %v4152, %v4151
        %v4165 = vpack.c.b16 %v4154, %v4153
        %v4166 = vpack.c.b16 %v4156, %v4155
        %v4167 = vpack.c.b16 %v4158, %v4157
        %v4168 = vpack.c.b16 %v4160, %v4159
        %4177 = vmatprep.subr.bf16.mxu0 0
        %4178 = vmatpush1.bf16.msra.mxu0 %v4161
        %4179 = vmatprep.subr.bf16.mxu0 0
        %4180 = vmatpush1.bf16.msra.mxu0 %v4162
        %4181 = vmatprep.subr.bf16.mxu0 0
        %4182 = vmatpush1.bf16.msra.mxu0 %v4163
        %4183 = vmatprep.subr.bf16.mxu0 0
        %4184 = vmatpush1.bf16.msra.mxu0 %v4164
        %4185 = vmatprep.subr.bf16.mxu0 0
        %4186 = vmatpush1.bf16.msra.mxu0 %v4165
        %4187 = vmatprep.subr.bf16.mxu0 0
        %4188 = vmatpush1.bf16.msra.mxu0 %v4166
        %4189 = vmatprep.subr.bf16.mxu0 0
        %4190 = vmatpush1.bf16.msra.mxu0 %v4167
        %4191 = vmatprep.subr.bf16.mxu0 0
        %4192 = vmatpush1.bf16.msra.mxu0 %v4168
        %4193 = vmatprep.subr.bf16.mxu0 0
        %4194 = vmatpush1.bf16.msra.mxu0 0
        %4195 = vmatprep.subr.bf16.mxu0 0
        %4196 = vmatpush1.bf16.msra.mxu0 0
        %4197 = vmatprep.subr.bf16.mxu0 0
        %4198 = vmatpush1.bf16.msra.mxu0 0
        %4199 = vmatprep.subr.bf16.mxu0 0
        %4200 = vmatpush1.bf16.msra.mxu0 0
        %4201 = vmatprep.subr.bf16.mxu0 0
        %4202 = vmatpush1.bf16.msra.mxu0 0
        %4203 = vmatprep.subr.bf16.mxu0 0
        %4204 = vmatpush1.bf16.msra.mxu0 0
        %4205 = vmatprep.subr.bf16.mxu0 0
        %4206 = vmatpush1.bf16.msra.mxu0 0
        %4207 = vmatprep.subr.bf16.mxu0 0
        %4208 = vmatpush1.bf16.msra.mxu0 0
        %4209 = vmatprep.mubr.bf16.mxu0 0
        %4210 = vmatmul.mubr.bf16.gmra.mrb[0].mxu0 %v4122
        %v4211 = vpop.f32.mrb[0].mxu0
        %v4212 = vadd.f32 %v4127, %v4211
        %v4213 = vpop.f32.mrb[0].mxu0
        %v4214 = vpop.f32.mrb[0].mxu0
        %v4215 = vpop.f32.mrb[0].mxu0
        %4216 = vdwg.mxu0
        %v4217 = vadd.f32 %v3741, %v4212
        %v4218 = vld [vmem:[%s2207] sm:$0x1]
        %v4219 = vld [vmem:[%s2204] sm:$0x1]
        %4220 = vadd.xlane.f32.xlu0 %v4217
        %v4221 = vpop.xlane.xlu0 %4220
        %v4222 = vmul.f32 %v4221, %v2938
        %v4223 = vsub.f32 %v4217, %v4222
        %v4224 = vmul.f32 %v4223, %v4223
        %4225 = vadd.xlane.f32.xlu0 %v4224
        %v4226 = vpop.xlane.xlu0 %4225
        %v4227 = vmul.f32 %v4226, %v2938
        %v4228 = vadd.f32 %v4227, 1e-05
        %v4229 = vrsqrt.pop %v4228
        %v4230 = vmul.f32 %v4223, %v4229
        %v4232 = vlaneseq
        %v4233 = vshrl.u32 %v4232, 7
        %v4234 = vsub.s32 0, %v4233
        %v4235 = vrot.slane %v4218, %v4234
        %v4237 = vmul.f32 %v4230, %v4235
        %v4239 = vlaneseq
        %v4240 = vshrl.u32 %v4239, 7
        %v4241 = vsub.s32 0, %v4240
        %v4242 = vrot.slane %v4219, %v4241
        %v4244 = vadd.f32 %v4237, %v4242
        %v4245 = vld [vmem:[%s1881] sm:$0xf]
        %v4246 = vld [vmem:[%s1881 + $0x4] sm:$0xf]
        %v4247 = vld [vmem:[%s1881 + $0x8] sm:$0xf]
        %v4248 = vld [vmem:[%s1881 + $0xc] sm:$0xf]
        %v4249 = vld [vmem:[%s1881 + $0x10] sm:$0xf]
        %v4250 = vld [vmem:[%s1881 + $0x14] sm:$0xf]
        %v4251 = vld [vmem:[%s1881 + $0x18] sm:$0xf]
        %v4252 = vld [vmem:[%s1881 + $0x1c] sm:$0xf]
        %v4253 = vld [vmem:[%s1881 + $0x20] sm:$0xf]
        %v4254 = vld [vmem:[%s1881 + $0x24] sm:$0xf]
        %v4255 = vld [vmem:[%s1881 + $0x28] sm:$0xf]
        %v4256 = vld [vmem:[%s1881 + $0x2c] sm:$0xf]
        %v4257 = vld [vmem:[%s1881 + $0x30] sm:$0xf]
        %v4258 = vld [vmem:[%s1881 + $0x34] sm:$0xf]
        %v4259 = vld [vmem:[%s1881 + $0x38] sm:$0xf]
        %v4260 = vld [vmem:[%s1881 + $0x3c] sm:$0xf]
        %v4261 = vld [vmem:[%s1872] sm:$0x1]
        %v4262 = vld [vmem:[%s1898] sm:$0xf]
        %v4263 = vld [vmem:[%s1898 + $0x4] sm:$0xf]
        %v4264 = vld [vmem:[%s1898 + $0x8] sm:$0xf]
        %v4265 = vld [vmem:[%s1898 + $0xc] sm:$0xf]
        %v4266 = vld [vmem:[%s1898 + $0x10] sm:$0xf]
        %v4267 = vld [vmem:[%s1898 + $0x14] sm:$0xf]
        %v4268 = vld [vmem:[%s1898 + $0x18] sm:$0xf]
        %v4269 = vld [vmem:[%s1898 + $0x1c] sm:$0xf]
        %v4270 = vld [vmem:[%s1898 + $0x20] sm:$0xf]
        %v4271 = vld [vmem:[%s1898 + $0x24] sm:$0xf]
        %v4272 = vld [vmem:[%s1898 + $0x28] sm:$0xf]
        %v4273 = vld [vmem:[%s1898 + $0x2c] sm:$0xf]
        %v4274 = vld [vmem:[%s1898 + $0x30] sm:$0xf]
        %v4275 = vld [vmem:[%s1898 + $0x34] sm:$0xf]
        %v4276 = vld [vmem:[%s1898 + $0x38] sm:$0xf]
        %v4277 = vld [vmem:[%s1898 + $0x3c] sm:$0xf]
        %v4278 = vld [vmem:[%s1889] sm:$0x1]
        %v4279 = vpack.c.bf16 %v4244, %v4244
        %v4281 = vlaneseq
        %v4282 = vshrl.u32 %v4281, 7
        %v4283 = vsub.s32 0, %v4282
        %v4284 = vrot.slane %v4261, %v4283
        %v4302 = vunpack.c.l.b16 %v4245
        %v4303 = vunpack.c.l.b16 %v4246
        %v4304 = vunpack.c.l.b16 %v4247
        %v4305 = vunpack.c.l.b16 %v4248
        %v4306 = vunpack.c.l.b16 %v4249
        %v4307 = vunpack.c.l.b16 %v4250
        %v4308 = vunpack.c.l.b16 %v4251
        %v4309 = vunpack.c.l.b16 %v4252
        %v4310 = vunpack.c.l.b16 %v4253
        %v4311 = vunpack.c.l.b16 %v4254
        %v4312 = vunpack.c.l.b16 %v4255
        %v4313 = vunpack.c.l.b16 %v4256
        %v4314 = vunpack.c.l.b16 %v4257
        %v4315 = vunpack.c.l.b16 %v4258
        %v4316 = vunpack.c.l.b16 %v4259
        %v4317 = vunpack.c.l.b16 %v4260
        %v4318 = vpack.c.b16 %v4303, %v4302
        %v4319 = vpack.c.b16 %v4305, %v4304
        %v4320 = vpack.c.b16 %v4307, %v4306
        %v4321 = vpack.c.b16 %v4309, %v4308
        %v4322 = vpack.c.b16 %v4311, %v4310
        %v4323 = vpack.c.b16 %v4313, %v4312
        %v4324 = vpack.c.b16 %v4315, %v4314
        %v4325 = vpack.c.b16 %v4317, %v4316
        %4334 = vmatprep.subr.bf16.mxu0 0
        %4335 = vmatpush1.bf16.msra.mxu0 %v4318
        %4336 = vmatprep.subr.bf16.mxu0 0
        %4337 = vmatpush1.bf16.msra.mxu0 %v4319
        %4338 = vmatprep.subr.bf16.mxu0 0
        %4339 = vmatpush1.bf16.msra.mxu0 %v4320
        %4340 = vmatprep.subr.bf16.mxu0 0
        %4341 = vmatpush1.bf16.msra.mxu0 %v4321
        %4342 = vmatprep.subr.bf16.mxu0 0
        %4343 = vmatpush1.bf16.msra.mxu0 %v4322
        %4344 = vmatprep.subr.bf16.mxu0 0
        %4345 = vmatpush1.bf16.msra.mxu0 %v4323
        %4346 = vmatprep.subr.bf16.mxu0 0
        %4347 = vmatpush1.bf16.msra.mxu0 %v4324
        %4348 = vmatprep.subr.bf16.mxu0 0
        %4349 = vmatpush1.bf16.msra.mxu0 %v4325
        %4350 = vmatprep.subr.bf16.mxu0 0
        %4351 = vmatpush1.bf16.msra.mxu0 0
        %4352 = vmatprep.subr.bf16.mxu0 0
        %4353 = vmatpush1.bf16.msra.mxu0 0
        %4354 = vmatprep.subr.bf16.mxu0 0
        %4355 = vmatpush1.bf16.msra.mxu0 0
        %4356 = vmatprep.subr.bf16.mxu0 0
        %4357 = vmatpush1.bf16.msra.mxu0 0
        %4358 = vmatprep.subr.bf16.mxu0 0
        %4359 = vmatpush1.bf16.msra.mxu0 0
        %4360 = vmatprep.subr.bf16.mxu0 0
        %4361 = vmatpush1.bf16.msra.mxu0 0
        %4362 = vmatprep.subr.bf16.mxu0 0
        %4363 = vmatpush1.bf16.msra.mxu0 0
        %4364 = vmatprep.subr.bf16.mxu0 0
        %4365 = vmatpush1.bf16.msra.mxu0 0
        %4366 = vmatprep.mubr.bf16.mxu0 0
        %4367 = vmatmul.mubr.bf16.gmra.mrb[0].mxu0 %v4279
        %v4368 = vpop.f32.mrb[0].mxu0
        %v4369 = vadd.f32 %v4284, %v4368
        %v4370 = vpop.f32.mrb[0].mxu0
        %v4371 = vpop.f32.mrb[0].mxu0
        %v4372 = vpop.f32.mrb[0].mxu0
        %4373 = vdwg.mxu0
        %v4374 = vmax.f32 %v4369, 0.0
        %v4375 = vpack.c.bf16 %v4374, %v4374
        %v4377 = vlaneseq
        %v4378 = vshrl.u32 %v4377, 7
        %v4379 = vsub.s32 0, %v4378
        %v4380 = vrot.slane %v4278, %v4379
        %v4398 = vunpack.c.l.b16 %v4262
        %v4399 = vunpack.c.l.b16 %v4263
        %v4400 = vunpack.c.l.b16 %v4264
        %v4401 = vunpack.c.l.b16 %v4265
        %v4402 = vunpack.c.l.b16 %v4266
        %v4403 = vunpack.c.l.b16 %v4267
        %v4404 = vunpack.c.l.b16 %v4268
        %v4405 = vunpack.c.l.b16 %v4269
        %v4406 = vunpack.c.l.b16 %v4270
        %v4407 = vunpack.c.l.b16 %v4271
        %v4408 = vunpack.c.l.b16 %v4272
        %v4409 = vunpack.c.l.b16 %v4273
        %v4410 = vunpack.c.l.b16 %v4274
        %v4411 = vunpack.c.l.b16 %v4275
        %v4412 = vunpack.c.l.b16 %v4276
        %v4413 = vunpack.c.l.b16 %v4277
        %v4414 = vpack.c.b16 %v4399, %v4398
        %v4415 = vpack.c.b16 %v4401, %v4400
        %v4416 = vpack.c.b16 %v4403, %v4402
        %v4417 = vpack.c.b16 %v4405, %v4404
        %v4418 = vpack.c.b16 %v4407, %v4406
        %v4419 = vpack.c.b16 %v4409, %v4408
        %v4420 = vpack.c.b16 %v4411, %v4410
        %v4421 = vpack.c.b16 %v4413, %v4412
        %4430 = vmatprep.subr.bf16.mxu0 0
        %4431 = vmatpush1.bf16.msra.mxu0 %v4414
        %4432 = vmatprep.subr.bf16.mxu0 0
        %4433 = vmatpush1.bf16.msra.mxu0 %v4415
        %4434 = vmatprep.subr.bf16.mxu0 0
        %4435 = vmatpush1.bf16.msra.mxu0 %v4416
        %4436 = vmatprep.subr.bf16.mxu0 0
        %4437 = vmatpush1.bf16.msra.mxu0 %v4417
        %4438 = vmatprep.subr.bf16.mxu0 0
        %4439 = vmatpush1.bf16.msra.mxu0 %v4418
        %4440 = vmatprep.subr.bf16.mxu0 0
        %4441 = vmatpush1.bf16.msra.mxu0 %v4419
        %4442 = vmatprep.subr.bf16.mxu0 0
        %4443 = vmatpush1.bf16.msra.mxu0 %v4420
        %4444 = vmatprep.subr.bf16.mxu0 0
        %4445 = vmatpush1.bf16.msra.mxu0 %v4421
        %4446 = vmatprep.subr.bf16.mxu0 0
        %4447 = vmatpush1.bf16.msra.mxu0 0
        %4448 = vmatprep.subr.bf16.mxu0 0
        %4449 = vmatpush1.bf16.msra.mxu0 0
        %4450 = vmatprep.subr.bf16.mxu0 0
        %4451 = vmatpush1.bf16.msra.mxu0 0
        %4452 = vmatprep.subr.bf16.mxu0 0
        %4453 = vmatpush1.bf16.msra.mxu0 0
        %4454 = vmatprep.subr.bf16.mxu0 0
        %4455 = vmatpush1.bf16.msra.mxu0 0
        %4456 = vmatprep.subr.bf16.mxu0 0
        %4457 = vmatpush1.bf16.msra.mxu0 0
        %4458 = vmatprep.subr.bf16.mxu0 0
        %4459 = vmatpush1.bf16.msra.mxu0 0
        %4460 = vmatprep.subr.bf16.mxu0 0
        %4461 = vmatpush1.bf16.msra.mxu0 0
        %4462 = vmatprep.mubr.bf16.mxu0 0
        %4463 = vmatmul.mubr.bf16.gmra.mrb[0].mxu0 %v4375
        %v4464 = vpop.f32.mrb[0].mxu0
        %v4465 = vadd.f32 %v4380, %v4464
        %v4466 = vpop.f32.mrb[0].mxu0
        %v4467 = vpop.f32.mrb[0].mxu0
        %v4468 = vpop.f32.mrb[0].mxu0
        %4469 = vdwg.mxu0
        %v4470 = vadd.f32 %v4244, %v4465
        %v4471 = vld [vmem:[%s2213] sm:$0x1]
        %v4472 = vld [vmem:[%s2210] sm:$0x1]
        %4473 = vadd.xlane.f32.xlu0 %v4470
        %v4474 = vpop.xlane.xlu0 %4473
        %v4475 = vmul.f32 %v4474, %v2938
        %v4476 = vsub.f32 %v4470, %v4475
        %v4477 = vmul.f32 %v4476, %v4476
        %4478 = vadd.xlane.f32.xlu0 %v4477
        %v4479 = vpop.xlane.xlu0 %4478
        %v4480 = vmul.f32 %v4479, %v2938
        %v4481 = vadd.f32 %v4480, 1e-05
        %v4482 = vrsqrt.pop %v4481
        %v4483 = vmul.f32 %v4476, %v4482
        %v4485 = vlaneseq
        %v4486 = vshrl.u32 %v4485, 7
        %v4487 = vsub.s32 0, %v4486
        %v4488 = vrot.slane %v4471, %v4487
        %v4490 = vmul.f32 %v4483, %v4488
        %v4492 = vlaneseq
        %v4493 = vshrl.u32 %v4492, 7
        %v4494 = vsub.s32 0, %v4493
        %v4495 = vrot.slane %v4472, %v4494
        %v4497 = vadd.f32 %v4490, %v4495
        %v4498 = vld [vmem:[%s2226] sm:$0x1]
        %v4499 = vld [vmem:[%s2223] sm:$0x1]
        %4500 = vadd.xlane.f32.xlu0 %v4497
        %v4501 = vpop.xlane.xlu0 %4500
        %v4502 = vmul.f32 %v4501, %v2938
        %v4503 = vsub.f32 %v4497, %v4502
        %v4504 = vmul.f32 %v4503, %v4503
        %4505 = vadd.xlane.f32.xlu0 %v4504
        %v4506 = vpop.xlane.xlu0 %4505
        %v4507 = vmul.f32 %v4506, %v2938
        %v4508 = vadd.f32 %v4507, 1e-05
        %v4509 = vrsqrt.pop %v4508
        %v4510 = vmul.f32 %v4503, %v4509
        %v4512 = vlaneseq
        %v4513 = vshrl.u32 %v4512, 7
        %v4514 = vsub.s32 0, %v4513
        %v4515 = vrot.slane %v4498, %v4514
        %v4517 = vmul.f32 %v4510, %v4515
        %v4519 = vlaneseq
        %v4520 = vshrl.u32 %v4519, 7
        %v4521 = vsub.s32 0, %v4520
        %v4522 = vrot.slane %v4499, %v4521
        %v4524 = vadd.f32 %v4517, %v4522
        %v4525 = vmax.f32 %v4524, 0.0
        %v4526 = vadd.f32 %v2342, %v4525
        %4527 = vst [vmem:[#allocation2] sm:$0xff] %v4526
        %p4528 = scmp.eq.s32.totalorder %s129, 2
        // Predicated region
        $region281: #{_forward_impl.1} parent=195 // pred_check
          %p4529 = pneg %p4528
        $region282: #{_forward_impl.1} parent=195 // pred_check_branch
          %4531 = sbr.rel (%p4529) target = $region284
        $region283: #{_forward_impl.1} parent=195 // pred_region
          %v4532 = vpack.c.bf16 %v4526, %v4526
          %v4533 = vld [vmem:[#allocation5] sm:$0xf]
          %v4534 = vld [vmem:[#allocation5 + $0x4] sm:$0xf]
          %v4535 = vld [vmem:[#allocation5 + $0x8] sm:$0xf]
          %v4536 = vld [vmem:[#allocation5 + $0xc] sm:$0xf]
          %v4537 = vld [vmem:[#allocation5 + $0x10] sm:$0xf]
          %v4538 = vld [vmem:[#allocation5 + $0x14] sm:$0xf]
          %v4539 = vld [vmem:[#allocation5 + $0x18] sm:$0xf]
          %v4540 = vld [vmem:[#allocation5 + $0x1c] sm:$0xf]
          %v4541 = vld [vmem:[#allocation5 + $0x20] sm:$0xf]
          %v4542 = vld [vmem:[#allocation5 + $0x24] sm:$0xf]
          %v4543 = vld [vmem:[#allocation5 + $0x28] sm:$0xf]
          %v4544 = vld [vmem:[#allocation5 + $0x2c] sm:$0xf]
          %v4545 = vld [vmem:[#allocation5 + $0x30] sm:$0xf]
          %v4546 = vld [vmem:[#allocation5 + $0x34] sm:$0xf]
          %v4547 = vld [vmem:[#allocation5 + $0x38] sm:$0xf]
          %v4548 = vld [vmem:[#allocation5 + $0x3c] sm:$0xf]
          %v4549 = vld [vmem:[#allocation7] sm:$0x1]
          %v4551 = vlaneseq
          %v4552 = vshrl.u32 %v4551, 7
          %v4553 = vsub.s32 0, %v4552
          %v4554 = vrot.slane %v4549, %v4553
          %v4572 = vunpack.c.l.b16 %v4533
          %v4573 = vunpack.c.l.b16 %v4534
          %v4574 = vunpack.c.l.b16 %v4535
          %v4575 = vunpack.c.l.b16 %v4536
          %v4576 = vunpack.c.l.b16 %v4537
          %v4577 = vunpack.c.l.b16 %v4538
          %v4578 = vunpack.c.l.b16 %v4539
          %v4579 = vunpack.c.l.b16 %v4540
          %v4580 = vunpack.c.l.b16 %v4541
          %v4581 = vunpack.c.l.b16 %v4542
          %v4582 = vunpack.c.l.b16 %v4543
          %v4583 = vunpack.c.l.b16 %v4544
          %v4584 = vunpack.c.l.b16 %v4545
          %v4585 = vunpack.c.l.b16 %v4546
          %v4586 = vunpack.c.l.b16 %v4547
          %v4587 = vunpack.c.l.b16 %v4548
          %v4588 = vpack.c.b16 %v4573, %v4572
          %v4589 = vpack.c.b16 %v4575, %v4574
          %v4590 = vpack.c.b16 %v4577, %v4576
          %v4591 = vpack.c.b16 %v4579, %v4578
          %v4592 = vpack.c.b16 %v4581, %v4580
          %v4593 = vpack.c.b16 %v4583, %v4582
          %v4594 = vpack.c.b16 %v4585, %v4584
          %v4595 = vpack.c.b16 %v4587, %v4586
          %4604 = vmatprep.subr.bf16.mxu0 0
          %4605 = vmatpush1.bf16.msra.mxu0 %v4588
          %4606 = vmatprep.subr.bf16.mxu0 0
          %4607 = vmatpush1.bf16.msra.mxu0 %v4589
          %4608 = vmatprep.subr.bf16.mxu0 0
          %4609 = vmatpush1.bf16.msra.mxu0 %v4590
          %4610 = vmatprep.subr.bf16.mxu0 0
          %4611 = vmatpush1.bf16.msra.mxu0 %v4591
          %4612 = vmatprep.subr.bf16.mxu0 0
          %4613 = vmatpush1.bf16.msra.mxu0 %v4592
          %4614 = vmatprep.subr.bf16.mxu0 0
          %4615 = vmatpush1.bf16.msra.mxu0 %v4593
          %4616 = vmatprep.subr.bf16.mxu0 0
          %4617 = vmatpush1.bf16.msra.mxu0 %v4594
          %4618 = vmatprep.subr.bf16.mxu0 0
          %4619 = vmatpush1.bf16.msra.mxu0 %v4595
          %4620 = vmatprep.subr.bf16.mxu0 0
          %4621 = vmatpush1.bf16.msra.mxu0 0
          %4622 = vmatprep.subr.bf16.mxu0 0
          %4623 = vmatpush1.bf16.msra.mxu0 0
          %4624 = vmatprep.subr.bf16.mxu0 0
          %4625 = vmatpush1.bf16.msra.mxu0 0
          %4626 = vmatprep.subr.bf16.mxu0 0
          %4627 = vmatpush1.bf16.msra.mxu0 0
          %4628 = vmatprep.subr.bf16.mxu0 0
          %4629 = vmatpush1.bf16.msra.mxu0 0
          %4630 = vmatprep.subr.bf16.mxu0 0
          %4631 = vmatpush1.bf16.msra.mxu0 0
          %4632 = vmatprep.subr.bf16.mxu0 0
          %4633 = vmatpush1.bf16.msra.mxu0 0
          %4634 = vmatprep.subr.bf16.mxu0 0
          %4635 = vmatpush1.bf16.msra.mxu0 0
          %4636 = vmatprep.mubr.bf16.mxu0 0
          %4637 = vmatmul.mubr.bf16.gmra.mrb[0].mxu0 %v4532
          %v4638 = vpop.f32.mrb[0].mxu0
          %v4639 = vadd.f32 %v4554, %v4638
          %v4640 = vpop.f32.mrb[0].mxu0
          %v4641 = vpop.f32.mrb[0].mxu0
          %v4642 = vpop.f32.mrb[0].mxu0
          %4643 = vdwg.mxu0
          %4644 = vst [vmem:[%s89] sm:$0xff] %v4639
        $region284: #{_forward_impl.1} parent=195 // pred_fallthru
          _
        // Predicated region
        $region285: #{_forward_impl.1} parent=195 // pred_check
          %p4645 = pneg %p1256
        $region286: #{_forward_impl.1} parent=195 // pred_check_branch
          %4647 = sbr.rel (%p4645) target = $region288
        $region287: #{_forward_impl.1} parent=195 // pred_region
          _
        $region288: #{_forward_impl.1} parent=195 // pred_fallthru
          _
        // Predicated region
        $region289: #{_forward_impl.1} parent=195 // pred_check
          %p4648 = pneg %p1256
        $region290: #{_forward_impl.1} parent=195 // pred_check_branch
          %4650 = sbr.rel (%p4648) target = $region292
        $region291: #{_forward_impl.1} parent=195 // pred_region
          _
        $region292: #{_forward_impl.1} parent=195 // pred_fallthru
          _
      $region196: #{_forward_impl.1} parent=5 // pred_fallthru
        _
      %p4651 = scmp.le.s32.totalorder 2, %s124
      // Predicated region
      $region293: #{_forward_impl.1} parent=5 // pred_check
        %p4652 = pneg %p4651
      $region294: #{_forward_impl.1} parent=5 // pred_check_branch
        %4654 = sbr.rel (%p4652) target = $region296
      $region295: #{_forward_impl.1} parent=5 // pred_region
        %s4655 = ssub.s32 %s124, 2
      $region296: #{_forward_impl.1} parent=5 // pred_fallthru
        _
    $region6: #{_forward_impl.1} parent=1 // loop_footer
      %s128 = sadd.s32 1, %s124
    $region7: #{_forward_impl.1} parent=1 // loop_footer_branch
      %123 = sbr.rel target = $region3
    $region8: #{_forward_impl.1} parent=1 // loop_exit
      _
    %4656 = vsyncpa [#allocation4], 1
    %s4657 = scalar_lea.sflag [#allocation4], 1
    %4658 = vsyncpa %s4657, 1
    %4659 = vsyncpa [#allocation6], 1
    %4660 = vsyncpa [#allocation9], 1
    %s4661 = scalar_lea.sflag [#allocation9], 1
    %4662 = vsyncpa %s4661, 1
    %4663 = vsyncpa [#allocation12], 1
    %s4664 = scalar_lea.sflag [#allocation12], 1
    %4665 = vsyncpa %s4664, 1
    %4666 = vsyncpa [#allocation15], 1
    %s4667 = scalar_lea.sflag [#allocation15], 1
    %4668 = vsyncpa %s4667, 1
    %4669 = vsyncpa [#allocation18], 1
    %s4670 = scalar_lea.sflag [#allocation18], 1
    %4671 = vsyncpa %s4670, 1
    %4672 = vsyncpa [#allocation21], 1
    %s4673 = scalar_lea.sflag [#allocation21], 1
    %4674 = vsyncpa %s4673, 1
    %4675 = vsyncpa [#allocation24], 1
    %s4676 = scalar_lea.sflag [#allocation24], 1
    %4677 = vsyncpa %s4676, 1
    %4678 = vsyncpa [#allocation27], 1
    %s4679 = scalar_lea.sflag [#allocation27], 1
    %4680 = vsyncpa %s4679, 1
    %4681 = vsyncpa [#allocation30], 1
    %s4682 = scalar_lea.sflag [#allocation30], 1
    %4683 = vsyncpa %s4682, 1
    %4684 = vsyncpa [#allocation33], 1
    %s4685 = scalar_lea.sflag [#allocation33], 1
    %4686 = vsyncpa %s4685, 1

</llo_original>
